<compile_context>
chip_gen: v7x
topology: tpu7x:2x2x1
jax: 0.10.0
libtpu: 0.0.40
codegen_flags: <defaults>
</compile_context>

<pallas_src>
import numpy as np
import jax
import jax.numpy as jnp
from jax.experimental import pallas as pl
from jax.experimental.pallas import tpu as pltpu

# ---- model config (matches TransformerModel defaults) ----
INPUT_SIZE = 16
D_MODEL = 64
NHEAD = 4
HEAD_DIM = D_MODEL // NHEAD
D_FF = D_MODEL * 4
NUM_LAYERS = 2
LN_EPS = 1e-5


def _round_up(n, m):
    return ((n + m - 1) // m) * m


def _layer_norm(x, gamma, beta):
    mean = jnp.mean(x, axis=-1, keepdims=True)
    var = jnp.mean((x - mean) ** 2, axis=-1, keepdims=True)
    return (x - mean) * jax.lax.rsqrt(var + LN_EPS) * gamma + beta


def transformer_kernel(
    x_ref,
    w_in_ref, b_in_ref,
    wvo_ref, bvo_ref,
    g1_ref, be1_ref,
    w1_ref, b1_ref, w2_ref, b2_ref,
    g2_ref, be2_ref,
    w_out_ref, b_out_ref,
    o_ref,
):
    mxu_dtype = w_in_ref.dtype
    x = x_ref[...]                                                  # (bm, 16), mxu dtype

    # input_layer: (bm,16) @ (16,64); weights pre-transposed to (in, out)
    h = jnp.dot(x, w_in_ref[...], preferred_element_type=jnp.float32) + b_in_ref[...]

    for l in range(NUM_LAYERS):                                     # static unroll
        # ---- self-attention, seq_len == 1: softmax over a single key == 1,
        # so attention == out_proj(v).  Wv/Wo and biases are folded on the host,
        # leaving one (bm, D) @ (D, D) matmul per layer.
        attn = jnp.dot(h.astype(mxu_dtype), wvo_ref[l],
                       preferred_element_type=jnp.float32) + bvo_ref[l]
        h = _layer_norm(h + attn, g1_ref[l], be1_ref[l])            # norm1 (f32)

        # ---- feed forward (Linear -> ReLU -> Linear), holds ~85% of the FLOPs
        ff = jnp.dot(h.astype(mxu_dtype), w1_ref[l],
                     preferred_element_type=jnp.float32) + b1_ref[l]
        ff = jnp.maximum(ff, 0.0)
        ff = jnp.dot(ff.astype(mxu_dtype), w2_ref[l],
                     preferred_element_type=jnp.float32) + b2_ref[l]
        h = _layer_norm(h + ff, g2_ref[l], be2_ref[l])              # norm2 (f32)

    # output head: w_out rows padded to 8 (sublane-aligned M); compute
    # (8, D) @ (bm, D)^T -> (8, bm), keep row 0 -> lane-dense (1, bm) store.
    out_full = jax.lax.dot_general(
        w_out_ref[...], h.astype(mxu_dtype),
        dimension_numbers=(((1,), (1,)), ((), ())),
        preferred_element_type=jnp.float32)                         # (8, bm)
    o_ref[...] = out_full[0:1, :] + b_out_ref[...]                  # (1, bm)


# ---------------------------------------------------------------------------
# parameters (torch layout) and host-side kernel-layout preparation
# ---------------------------------------------------------------------------
def init_torch_params(key):
    ks = iter(jax.random.split(key, 32))

    def nrm(shape, scale=0.05):
        return jax.random.normal(next(ks), shape, jnp.float32) * scale

    L, D, F, DF = NUM_LAYERS, D_MODEL, INPUT_SIZE, D_FF
    return dict(
        w_in=nrm((D, F)), b_in=nrm((1, D), 0.01),
        wq=nrm((L, D, D)), wk=nrm((L, D, D)), wv=nrm((L, D, D)),
        bq=nrm((L, 1, D), 0.01), bk=nrm((L, 1, D), 0.01), bv=nrm((L, 1, D), 0.01),
        wo=nrm((L, D, D)), bo=nrm((L, 1, D), 0.01),
        g1=jnp.ones((L, 1, D), jnp.float32), be1=jnp.zeros((L, 1, D), jnp.float32),
        w1=nrm((L, DF, D)), b1=nrm((L, 1, DF), 0.01),
        w2=nrm((L, D, DF)), b2=nrm((L, 1, D), 0.01),
        g2=jnp.ones((L, 1, D), jnp.float32), be2=jnp.zeros((L, 1, D), jnp.float32),
        w_out=nrm((1, D)), b_out=nrm((1, 1), 0.01),
    )


def prepare_kernel_params(p, mxu_dtype=jnp.bfloat16):
    """Transpose to (in, out), fold S==1 attention, cast matmul weights."""
    f32 = jnp.float32
    w_in_t = p["w_in"].T                                             # (16, 64)
    # fold value + output projections: Wvo[i,o] = sum_d Wv[d,i] * Wo[o,d]
    wvo = jnp.einsum("ldi,lod->lio", p["wv"], p["wo"])               # (L, D, D)
    bvo = jnp.einsum("lsd,lod->lso", p["bv"], p["wo"]) + p["bo"]     # (L, 1, D)
    w1_t = jnp.swapaxes(p["w1"], 1, 2)                               # (L, D, DF)
    w2_t = jnp.swapaxes(p["w2"], 1, 2)                               # (L, DF, D)
    # output head: pad out-rows to 8 (sublane-aligned M for the final A@B^T)
    w_out_rows = jnp.zeros((8, D_MODEL), f32).at[0].set(p["w_out"][0])

    cast = lambda w: w.astype(mxu_dtype)
    return [
        cast(w_in_t), p["b_in"].astype(f32),
        cast(wvo), bvo.astype(f32),
        p["g1"].astype(f32), p["be1"].astype(f32),
        cast(w1_t), p["b1"].astype(f32),
        cast(w2_t), p["b2"].astype(f32),
        p["g2"].astype(f32), p["be2"].astype(f32),
        cast(w_out_rows), p["b_out"].astype(f32),
    ]


# ---------------------------------------------------------------------------
# wrapper
# ---------------------------------------------------------------------------
def transformer_forward(x, kparams, bm=512):
    # bm: batch tile (MXU M dim). Multiple of 256; 512-2048 recommended for real
    # batches (sweep). Auto-shrunk for tiny batches. On v7x keep bm <= Bp/2 for
    # real workloads so the 'parallel' grid axis feeds both TensorCores.
    B = x.shape[0]
    mxu_dtype = kparams[0].dtype

    bm_eff = min(int(bm), _round_up(B, 256))
    bm_eff = max(_round_up(bm_eff, 256), 256)
    Bp = _round_up(B, bm_eff)
    n_tiles = Bp // bm_eff

    # unpadded 16-lane input, cast on host to the MXU dtype (no 16->128 pad)
    x_in = jnp.zeros((Bp, INPUT_SIZE), mxu_dtype).at[:B].set(x.astype(mxu_dtype))

    x_spec = pl.BlockSpec((bm_eff, INPUT_SIZE), lambda i: (i, 0))
    param_specs = [
        pl.BlockSpec(p.shape, lambda i, _n=p.ndim: (0,) * _n) for p in kparams
    ]
    # lane-dense output: one (1, bm) row per tile into a single (1, Bp) array
    out_spec = pl.BlockSpec((1, bm_eff), lambda i: (0, i))

    flops_per_row = (2 * INPUT_SIZE * D_MODEL
                     + NUM_LAYERS * (2 * D_MODEL * D_MODEL + 4 * D_MODEL * D_FF)
                     + 2 * D_MODEL)
    weight_bytes = sum(int(np.prod(p.shape)) * p.dtype.itemsize for p in kparams)
    cost = pl.CostEstimate(
        flops=flops_per_row * Bp,
        transcendentals=2 * NUM_LAYERS * Bp,
        bytes_accessed=int(x_in.size) * x_in.dtype.itemsize + Bp * 4 + weight_bytes,
    )

    out = pl.pallas_call(
        transformer_kernel,
        out_shape=jax.ShapeDtypeStruct((1, Bp), jnp.float32),
        grid_spec=pltpu.PrefetchScalarGridSpec(
            num_scalar_prefetch=0,
            grid=(n_tiles,),
            in_specs=[x_spec] + param_specs,
            out_specs=out_spec,
        ),
        compiler_params=pltpu.CompilerParams(
            dimension_semantics=("parallel",),
            vmem_limit_bytes=32 * 1024 * 1024),
        cost_estimate=cost,
    )(x_in, *kparams)

    return out[0, :B].reshape(B, 1)


# ---------------------------------------------------------------------------
# pure-JAX reference with full PyTorch semantics (q/k/v + softmax path kept)
# ---------------------------------------------------------------------------
def reference_forward(x, p):
    def ln(h, g, b):
        m = jnp.mean(h, axis=-1, keepdims=True)
        v = jnp.mean((h - m) ** 2, axis=-1, keepdims=True)
        return (h - m) / jnp.sqrt(v + LN_EPS) * g + b

    B = x.shape[0]
    h = (x @ p["w_in"].T + p["b_in"])[:, None, :]                    # (B, 1, D)
    for l in range(NUM_LAYERS):
        q = (h @ p["wq"][l].T + p["bq"][l]).reshape(B, 1, NHEAD, HEAD_DIM).transpose(0, 2, 1, 3)
        k = (h @ p["wk"][l].T + p["bk"][l]).reshape(B, 1, NHEAD, HEAD_DIM).transpose(0, 2, 1, 3)
        v = (h @ p["wv"][l].T + p["bv"][l]).reshape(B, 1, NHEAD, HEAD_DIM).transpose(0, 2, 1, 3)
        s = (q @ jnp.swapaxes(k, -1, -2)) / np.sqrt(HEAD_DIM)        # (B, H, 1, 1)
        a = jax.nn.softmax(s, axis=-1) @ v                           # (B, H, 1, dh)
        a = a.transpose(0, 2, 1, 3).reshape(B, 1, D_MODEL)
        attn = a @ p["wo"][l].T + p["bo"][l]
        h = ln(h + attn, p["g1"][l], p["be1"][l])
        ff = jnp.maximum(h @ p["w1"][l].T + p["b1"][l], 0.0) @ p["w2"][l].T + p["b2"][l]
        h = ln(h + ff, p["g2"][l], p["be2"][l])
    return h[:, 0, :] @ p["w_out"].T + p["b_out"]


if __name__ == "__main__":
    key = jax.random.PRNGKey(0)
    k_param, k_x1, k_x2 = jax.random.split(key, 3)
    tparams = init_torch_params(k_param)

    # small deterministic batch
    B = 16
    x = jax.random.normal(k_x1, (B, INPUT_SIZE), jnp.float32)
    ref = jax.block_until_ready(reference_forward(x, tparams))

    # f32 MXU path: exact-semantics check (attention fold / transposes / I/O layout)
    out_f32 = jax.block_until_ready(
        transformer_forward(x, prepare_kernel_params(tparams, jnp.float32)))
    np.testing.assert_allclose(np.asarray(out_f32), np.asarray(ref), rtol=2e-3, atol=1e-3)

    # bf16 MXU path (MXU-native dtype; LN / residuals stay f32)
    out_bf16 = jax.block_until_ready(
        transformer_forward(x, prepare_kernel_params(tparams, jnp.bfloat16)))
    np.testing.assert_allclose(np.asarray(out_bf16), np.asarray(ref), rtol=1e-1, atol=5e-2)

    # multi-step grid: exercises batch padding, >1 'parallel' steps, lane-dense out
    B2 = 300
    x2 = jax.random.normal(k_x2, (B2, INPUT_SIZE), jnp.float32)
    ref2 = jax.block_until_ready(reference_forward(x2, tparams))
    out2 = jax.block_until_ready(
        transformer_forward(x2, prepare_kernel_params(tparams, jnp.float32), bm=256))
    np.testing.assert_allclose(np.asarray(out2), np.asarray(ref2), rtol=2e-3, atol=1e-3)

    assert out_f32.shape == (B, 1) and out_f32.dtype == jnp.float32
    print("KERNEL_OK")
</pallas_src>

<mosaic_0001>
module attributes {stable_mosaic.version = 11 : i64} {
  func.func @transformer_kernel(%arg0: i32, %arg1: memref<256x16xf32, #tpu.memory_space<vmem>>, %arg2: memref<16x64xf32, #tpu.memory_space<vmem>>, %arg3: memref<1x64xf32, #tpu.memory_space<vmem>>, %arg4: memref<2x64x64xf32, #tpu.memory_space<vmem>>, %arg5: memref<2x1x64xf32, #tpu.memory_space<vmem>>, %arg6: memref<2x1x64xf32, #tpu.memory_space<vmem>>, %arg7: memref<2x1x64xf32, #tpu.memory_space<vmem>>, %arg8: memref<2x64x256xf32, #tpu.memory_space<vmem>>, %arg9: memref<2x1x256xf32, #tpu.memory_space<vmem>>, %arg10: memref<2x256x64xf32, #tpu.memory_space<vmem>>, %arg11: memref<2x1x64xf32, #tpu.memory_space<vmem>>, %arg12: memref<2x1x64xf32, #tpu.memory_space<vmem>>, %arg13: memref<2x1x64xf32, #tpu.memory_space<vmem>>, %arg14: memref<8x64xf32, #tpu.memory_space<vmem>>, %arg15: memref<1x1xf32, #tpu.memory_space<vmem>>, %arg16: memref<1x256xf32, #tpu.memory_space<vmem>>) attributes {dimension_semantics = [#tpu.dimension_semantics<parallel>], iteration_bounds = array<i64: 1>, scalar_prefetch = 0 : i64, scratch_operands = 0 : i64, tpu.core_type = #tpu.core_type<tc>, window_params = [{transform_indices = @transform_0, window_bounds = array<i64: 256, 16>}, {pipeline_mode = #tpu.pipeline_mode<synchronous>, transform_indices = @transform_1, window_bounds = array<i64: 16, 64>}, {pipeline_mode = #tpu.pipeline_mode<synchronous>, transform_indices = @transform_2, window_bounds = array<i64: 1, 64>}, {pipeline_mode = #tpu.pipeline_mode<synchronous>, transform_indices = @transform_3, window_bounds = array<i64: 2, 64, 64>}, {pipeline_mode = #tpu.pipeline_mode<synchronous>, transform_indices = @transform_4, window_bounds = array<i64: 2, 1, 64>}, {pipeline_mode = #tpu.pipeline_mode<synchronous>, transform_indices = @transform_5, window_bounds = array<i64: 2, 1, 64>}, {pipeline_mode = #tpu.pipeline_mode<synchronous>, transform_indices = @transform_6, window_bounds = array<i64: 2, 1, 64>}, {pipeline_mode = #tpu.pipeline_mode<synchronous>, transform_indices = @transform_7, window_bounds = array<i64: 2, 64, 256>}, {pipeline_mode = #tpu.pipeline_mode<synchronous>, transform_indices = @transform_8, window_bounds = array<i64: 2, 1, 256>}, {pipeline_mode = #tpu.pipeline_mode<synchronous>, transform_indices = @transform_9, window_bounds = array<i64: 2, 256, 64>}, {pipeline_mode = #tpu.pipeline_mode<synchronous>, transform_indices = @transform_10, window_bounds = array<i64: 2, 1, 64>}, {pipeline_mode = #tpu.pipeline_mode<synchronous>, transform_indices = @transform_11, window_bounds = array<i64: 2, 1, 64>}, {pipeline_mode = #tpu.pipeline_mode<synchronous>, transform_indices = @transform_12, window_bounds = array<i64: 2, 1, 64>}, {pipeline_mode = #tpu.pipeline_mode<synchronous>, transform_indices = @transform_13, window_bounds = array<i64: 8, 64>}, {pipeline_mode = #tpu.pipeline_mode<synchronous>, transform_indices = @transform_14, window_bounds = array<i64: 1, 1>}, {transform_indices = @transform_15, window_bounds = array<i64: 1, 256>}]} {
    %c0 = arith.constant 0 : index
    %c0_0 = arith.constant 0 : index
    %0 = vector.load %arg1[%c0, %c0_0] : memref<256x16xf32, #tpu.memory_space<vmem>>, vector<256x16xf32>
    %c0_1 = arith.constant 0 : index
    %c0_2 = arith.constant 0 : index
    %1 = vector.load %arg2[%c0_1, %c0_2] : memref<16x64xf32, #tpu.memory_space<vmem>>, vector<16x64xf32>
    %cst = arith.constant dense<0.000000e+00> : vector<256x64xf32>
    %2 = tpu.matmul %0, %1, %cst {dimension_numbers = #tpu.dot_dimension_numbers<[1], [0], [0], [1], [0, 0, 1, 1], [], []>} : vector<256x16xf32>, vector<16x64xf32>, vector<256x64xf32> -> vector<256x64xf32>
    %c0_3 = arith.constant 0 : index
    %c0_4 = arith.constant 0 : index
    %3 = vector.load %arg3[%c0_3, %c0_4] : memref<1x64xf32, #tpu.memory_space<vmem>>, vector<1x64xf32>
    %4 = vector.broadcast %3 : vector<1x64xf32> to vector<256x64xf32>
    %5 = arith.addf %2, %4 : vector<256x64xf32>
    %c0_5 = arith.constant 0 : index
    %c0_6 = arith.constant 0 : index
    %c0_7 = arith.constant 0 : index
    %6 = vector.load %arg4[%c0_5, %c0_6, %c0_7] : memref<2x64x64xf32, #tpu.memory_space<vmem>>, vector<1x64x64xf32>
    %7 = vector.shape_cast %6 : vector<1x64x64xf32> to vector<64x64xf32>
    %cst_8 = arith.constant dense<0.000000e+00> : vector<256x64xf32>
    %8 = tpu.matmul %5, %7, %cst_8 {dimension_numbers = #tpu.dot_dimension_numbers<[1], [0], [0], [1], [0, 0, 1, 1], [], []>} : vector<256x64xf32>, vector<64x64xf32>, vector<256x64xf32> -> vector<256x64xf32>
    %c0_9 = arith.constant 0 : index
    %c0_10 = arith.constant 0 : index
    %c0_11 = arith.constant 0 : index
    %9 = vector.load %arg5[%c0_9, %c0_10, %c0_11] : memref<2x1x64xf32, #tpu.memory_space<vmem>>, vector<1x1x64xf32>
    %10 = vector.shape_cast %9 : vector<1x1x64xf32> to vector<1x64xf32>
    %11 = vector.broadcast %10 : vector<1x64xf32> to vector<256x64xf32>
    %12 = arith.addf %8, %11 : vector<256x64xf32>
    %13 = arith.addf %5, %12 : vector<256x64xf32>
    %c0_12 = arith.constant 0 : index
    %c0_13 = arith.constant 0 : index
    %c0_14 = arith.constant 0 : index
    %14 = vector.load %arg6[%c0_12, %c0_13, %c0_14] : memref<2x1x64xf32, #tpu.memory_space<vmem>>, vector<1x1x64xf32>
    %15 = vector.shape_cast %14 : vector<1x1x64xf32> to vector<1x64xf32>
    %c0_15 = arith.constant 0 : index
    %c0_16 = arith.constant 0 : index
    %c0_17 = arith.constant 0 : index
    %16 = vector.load %arg7[%c0_15, %c0_16, %c0_17] : memref<2x1x64xf32, #tpu.memory_space<vmem>>, vector<1x1x64xf32>
    %17 = vector.shape_cast %16 : vector<1x1x64xf32> to vector<1x64xf32>
    %cst_18 = arith.constant dense<0.000000e+00> : vector<256xf32>
    %18 = vector.multi_reduction <add>, %13, %cst_18 [1] : vector<256x64xf32> to vector<256xf32>
    %19 = vector.shape_cast %18 : vector<256xf32> to vector<256x1xf32>
    %cst_19 = arith.constant 6.400000e+01 : f32
    %20 = vector.broadcast %cst_19 : f32 to vector<256x1xf32>
    %21 = arith.divf %19, %20 : vector<256x1xf32>
    %22 = vector.broadcast %21 : vector<256x1xf32> to vector<256x64xf32>
    %23 = arith.subf %13, %22 : vector<256x64xf32>
    %24 = arith.mulf %23, %23 : vector<256x64xf32>
    %cst_20 = arith.constant dense<0.000000e+00> : vector<256xf32>
    %25 = vector.multi_reduction <add>, %24, %cst_20 [1] : vector<256x64xf32> to vector<256xf32>
    %26 = vector.shape_cast %25 : vector<256xf32> to vector<256x1xf32>
    %cst_21 = arith.constant 6.400000e+01 : f32
    %27 = vector.broadcast %cst_21 : f32 to vector<256x1xf32>
    %28 = arith.divf %26, %27 : vector<256x1xf32>
    %29 = vector.broadcast %21 : vector<256x1xf32> to vector<256x64xf32>
    %30 = arith.subf %13, %29 : vector<256x64xf32>
    %cst_22 = arith.constant 9.99999974E-6 : f32
    %31 = vector.broadcast %cst_22 : f32 to vector<256x1xf32>
    %32 = arith.addf %28, %31 : vector<256x1xf32>
    %33 = math.rsqrt %32 : vector<256x1xf32>
    %34 = vector.broadcast %33 : vector<256x1xf32> to vector<256x64xf32>
    %35 = arith.mulf %30, %34 : vector<256x64xf32>
    %36 = vector.broadcast %15 : vector<1x64xf32> to vector<256x64xf32>
    %37 = arith.mulf %35, %36 : vector<256x64xf32>
    %38 = vector.broadcast %17 : vector<1x64xf32> to vector<256x64xf32>
    %39 = arith.addf %37, %38 : vector<256x64xf32>
    %c0_23 = arith.constant 0 : index
    %c0_24 = arith.constant 0 : index
    %c0_25 = arith.constant 0 : index
    %40 = vector.load %arg8[%c0_23, %c0_24, %c0_25] : memref<2x64x256xf32, #tpu.memory_space<vmem>>, vector<1x64x256xf32>
    %41 = vector.shape_cast %40 : vector<1x64x256xf32> to vector<64x256xf32>
    %cst_26 = arith.constant dense<0.000000e+00> : vector<256x256xf32>
    %42 = tpu.matmul %39, %41, %cst_26 {dimension_numbers = #tpu.dot_dimension_numbers<[1], [0], [0], [1], [0, 0, 1, 1], [], []>} : vector<256x64xf32>, vector<64x256xf32>, vector<256x256xf32> -> vector<256x256xf32>
    %c0_27 = arith.constant 0 : index
    %c0_28 = arith.constant 0 : index
    %c0_29 = arith.constant 0 : index
    %43 = vector.load %arg9[%c0_27, %c0_28, %c0_29] : memref<2x1x256xf32, #tpu.memory_space<vmem>>, vector<1x1x256xf32>
    %44 = vector.shape_cast %43 : vector<1x1x256xf32> to vector<1x256xf32>
    %45 = vector.broadcast %44 : vector<1x256xf32> to vector<256x256xf32>
    %46 = arith.addf %42, %45 : vector<256x256xf32>
    %cst_30 = arith.constant 0.000000e+00 : f32
    %47 = vector.broadcast %cst_30 : f32 to vector<256x256xf32>
    %48 = arith.maximumf %46, %47 : vector<256x256xf32>
    %c0_31 = arith.constant 0 : index
    %c0_32 = arith.constant 0 : index
    %c0_33 = arith.constant 0 : index
    %49 = vector.load %arg10[%c0_31, %c0_32, %c0_33] : memref<2x256x64xf32, #tpu.memory_space<vmem>>, vector<1x256x64xf32>
    %50 = vector.shape_cast %49 : vector<1x256x64xf32> to vector<256x64xf32>
    %cst_34 = arith.constant dense<0.000000e+00> : vector<256x64xf32>
    %51 = tpu.matmul %48, %50, %cst_34 {dimension_numbers = #tpu.dot_dimension_numbers<[1], [0], [0], [1], [0, 0, 1, 1], [], []>} : vector<256x256xf32>, vector<256x64xf32>, vector<256x64xf32> -> vector<256x64xf32>
    %c0_35 = arith.constant 0 : index
    %c0_36 = arith.constant 0 : index
    %c0_37 = arith.constant 0 : index
    %52 = vector.load %arg11[%c0_35, %c0_36, %c0_37] : memref<2x1x64xf32, #tpu.memory_space<vmem>>, vector<1x1x64xf32>
    %53 = vector.shape_cast %52 : vector<1x1x64xf32> to vector<1x64xf32>
    %54 = vector.broadcast %53 : vector<1x64xf32> to vector<256x64xf32>
    %55 = arith.addf %51, %54 : vector<256x64xf32>
    %56 = arith.addf %39, %55 : vector<256x64xf32>
    %c0_38 = arith.constant 0 : index
    %c0_39 = arith.constant 0 : index
    %c0_40 = arith.constant 0 : index
    %57 = vector.load %arg12[%c0_38, %c0_39, %c0_40] : memref<2x1x64xf32, #tpu.memory_space<vmem>>, vector<1x1x64xf32>
    %58 = vector.shape_cast %57 : vector<1x1x64xf32> to vector<1x64xf32>
    %c0_41 = arith.constant 0 : index
    %c0_42 = arith.constant 0 : index
    %c0_43 = arith.constant 0 : index
    %59 = vector.load %arg13[%c0_41, %c0_42, %c0_43] : memref<2x1x64xf32, #tpu.memory_space<vmem>>, vector<1x1x64xf32>
    %60 = vector.shape_cast %59 : vector<1x1x64xf32> to vector<1x64xf32>
    %cst_44 = arith.constant dense<0.000000e+00> : vector<256xf32>
    %61 = vector.multi_reduction <add>, %56, %cst_44 [1] : vector<256x64xf32> to vector<256xf32>
    %62 = vector.shape_cast %61 : vector<256xf32> to vector<256x1xf32>
    %cst_45 = arith.constant 6.400000e+01 : f32
    %63 = vector.broadcast %cst_45 : f32 to vector<256x1xf32>
    %64 = arith.divf %62, %63 : vector<256x1xf32>
    %65 = vector.broadcast %64 : vector<256x1xf32> to vector<256x64xf32>
    %66 = arith.subf %56, %65 : vector<256x64xf32>
    %67 = arith.mulf %66, %66 : vector<256x64xf32>
    %cst_46 = arith.constant dense<0.000000e+00> : vector<256xf32>
    %68 = vector.multi_reduction <add>, %67, %cst_46 [1] : vector<256x64xf32> to vector<256xf32>
    %69 = vector.shape_cast %68 : vector<256xf32> to vector<256x1xf32>
    %cst_47 = arith.constant 6.400000e+01 : f32
    %70 = vector.broadcast %cst_47 : f32 to vector<256x1xf32>
    %71 = arith.divf %69, %70 : vector<256x1xf32>
    %72 = vector.broadcast %64 : vector<256x1xf32> to vector<256x64xf32>
    %73 = arith.subf %56, %72 : vector<256x64xf32>
    %cst_48 = arith.constant 9.99999974E-6 : f32
    %74 = vector.broadcast %cst_48 : f32 to vector<256x1xf32>
    %75 = arith.addf %71, %74 : vector<256x1xf32>
    %76 = math.rsqrt %75 : vector<256x1xf32>
    %77 = vector.broadcast %76 : vector<256x1xf32> to vector<256x64xf32>
    %78 = arith.mulf %73, %77 : vector<256x64xf32>
    %79 = vector.broadcast %58 : vector<1x64xf32> to vector<256x64xf32>
    %80 = arith.mulf %78, %79 : vector<256x64xf32>
    %81 = vector.broadcast %60 : vector<1x64xf32> to vector<256x64xf32>
    %82 = arith.addf %80, %81 : vector<256x64xf32>
    %c1 = arith.constant 1 : index
    %c0_49 = arith.constant 0 : index
    %c0_50 = arith.constant 0 : index
    %83 = vector.load %arg4[%c1, %c0_49, %c0_50] : memref<2x64x64xf32, #tpu.memory_space<vmem>>, vector<1x64x64xf32>
    %84 = vector.shape_cast %83 : vector<1x64x64xf32> to vector<64x64xf32>
    %cst_51 = arith.constant dense<0.000000e+00> : vector<256x64xf32>
    %85 = tpu.matmul %82, %84, %cst_51 {dimension_numbers = #tpu.dot_dimension_numbers<[1], [0], [0], [1], [0, 0, 1, 1], [], []>} : vector<256x64xf32>, vector<64x64xf32>, vector<256x64xf32> -> vector<256x64xf32>
    %c1_52 = arith.constant 1 : index
    %c0_53 = arith.constant 0 : index
    %c0_54 = arith.constant 0 : index
    %86 = vector.load %arg5[%c1_52, %c0_53, %c0_54] : memref<2x1x64xf32, #tpu.memory_space<vmem>>, vector<1x1x64xf32>
    %87 = vector.shape_cast %86 : vector<1x1x64xf32> to vector<1x64xf32>
    %88 = vector.broadcast %87 : vector<1x64xf32> to vector<256x64xf32>
    %89 = arith.addf %85, %88 : vector<256x64xf32>
    %90 = arith.addf %82, %89 : vector<256x64xf32>
    %c1_55 = arith.constant 1 : index
    %c0_56 = arith.constant 0 : index
    %c0_57 = arith.constant 0 : index
    %91 = vector.load %arg6[%c1_55, %c0_56, %c0_57] : memref<2x1x64xf32, #tpu.memory_space<vmem>>, vector<1x1x64xf32>
    %92 = vector.shape_cast %91 : vector<1x1x64xf32> to vector<1x64xf32>
    %c1_58 = arith.constant 1 : index
    %c0_59 = arith.constant 0 : index
    %c0_60 = arith.constant 0 : index
    %93 = vector.load %arg7[%c1_58, %c0_59, %c0_60] : memref<2x1x64xf32, #tpu.memory_space<vmem>>, vector<1x1x64xf32>
    %94 = vector.shape_cast %93 : vector<1x1x64xf32> to vector<1x64xf32>
    %cst_61 = arith.constant dense<0.000000e+00> : vector<256xf32>
    %95 = vector.multi_reduction <add>, %90, %cst_61 [1] : vector<256x64xf32> to vector<256xf32>
    %96 = vector.shape_cast %95 : vector<256xf32> to vector<256x1xf32>
    %cst_62 = arith.constant 6.400000e+01 : f32
    %97 = vector.broadcast %cst_62 : f32 to vector<256x1xf32>
    %98 = arith.divf %96, %97 : vector<256x1xf32>
    %99 = vector.broadcast %98 : vector<256x1xf32> to vector<256x64xf32>
    %100 = arith.subf %90, %99 : vector<256x64xf32>
    %101 = arith.mulf %100, %100 : vector<256x64xf32>
    %cst_63 = arith.constant dense<0.000000e+00> : vector<256xf32>
    %102 = vector.multi_reduction <add>, %101, %cst_63 [1] : vector<256x64xf32> to vector<256xf32>
    %103 = vector.shape_cast %102 : vector<256xf32> to vector<256x1xf32>
    %cst_64 = arith.constant 6.400000e+01 : f32
    %104 = vector.broadcast %cst_64 : f32 to vector<256x1xf32>
    %105 = arith.divf %103, %104 : vector<256x1xf32>
    %106 = vector.broadcast %98 : vector<256x1xf32> to vector<256x64xf32>
    %107 = arith.subf %90, %106 : vector<256x64xf32>
    %cst_65 = arith.constant 9.99999974E-6 : f32
    %108 = vector.broadcast %cst_65 : f32 to vector<256x1xf32>
    %109 = arith.addf %105, %108 : vector<256x1xf32>
    %110 = math.rsqrt %109 : vector<256x1xf32>
    %111 = vector.broadcast %110 : vector<256x1xf32> to vector<256x64xf32>
    %112 = arith.mulf %107, %111 : vector<256x64xf32>
    %113 = vector.broadcast %92 : vector<1x64xf32> to vector<256x64xf32>
    %114 = arith.mulf %112, %113 : vector<256x64xf32>
    %115 = vector.broadcast %94 : vector<1x64xf32> to vector<256x64xf32>
    %116 = arith.addf %114, %115 : vector<256x64xf32>
    %c1_66 = arith.constant 1 : index
    %c0_67 = arith.constant 0 : index
    %c0_68 = arith.constant 0 : index
    %117 = vector.load %arg8[%c1_66, %c0_67, %c0_68] : memref<2x64x256xf32, #tpu.memory_space<vmem>>, vector<1x64x256xf32>
    %118 = vector.shape_cast %117 : vector<1x64x256xf32> to vector<64x256xf32>
    %cst_69 = arith.constant dense<0.000000e+00> : vector<256x256xf32>
    %119 = tpu.matmul %116, %118, %cst_69 {dimension_numbers = #tpu.dot_dimension_numbers<[1], [0], [0], [1], [0, 0, 1, 1], [], []>} : vector<256x64xf32>, vector<64x256xf32>, vector<256x256xf32> -> vector<256x256xf32>
    %c1_70 = arith.constant 1 : index
    %c0_71 = arith.constant 0 : index
    %c0_72 = arith.constant 0 : index
    %120 = vector.load %arg9[%c1_70, %c0_71, %c0_72] : memref<2x1x256xf32, #tpu.memory_space<vmem>>, vector<1x1x256xf32>
    %121 = vector.shape_cast %120 : vector<1x1x256xf32> to vector<1x256xf32>
    %122 = vector.broadcast %121 : vector<1x256xf32> to vector<256x256xf32>
    %123 = arith.addf %119, %122 : vector<256x256xf32>
    %cst_73 = arith.constant 0.000000e+00 : f32
    %124 = vector.broadcast %cst_73 : f32 to vector<256x256xf32>
    %125 = arith.maximumf %123, %124 : vector<256x256xf32>
    %c1_74 = arith.constant 1 : index
    %c0_75 = arith.constant 0 : index
    %c0_76 = arith.constant 0 : index
    %126 = vector.load %arg10[%c1_74, %c0_75, %c0_76] : memref<2x256x64xf32, #tpu.memory_space<vmem>>, vector<1x256x64xf32>
    %127 = vector.shape_cast %126 : vector<1x256x64xf32> to vector<256x64xf32>
    %cst_77 = arith.constant dense<0.000000e+00> : vector<256x64xf32>
    %128 = tpu.matmul %125, %127, %cst_77 {dimension_numbers = #tpu.dot_dimension_numbers<[1], [0], [0], [1], [0, 0, 1, 1], [], []>} : vector<256x256xf32>, vector<256x64xf32>, vector<256x64xf32> -> vector<256x64xf32>
    %c1_78 = arith.constant 1 : index
    %c0_79 = arith.constant 0 : index
    %c0_80 = arith.constant 0 : index
    %129 = vector.load %arg11[%c1_78, %c0_79, %c0_80] : memref<2x1x64xf32, #tpu.memory_space<vmem>>, vector<1x1x64xf32>
    %130 = vector.shape_cast %129 : vector<1x1x64xf32> to vector<1x64xf32>
    %131 = vector.broadcast %130 : vector<1x64xf32> to vector<256x64xf32>
    %132 = arith.addf %128, %131 : vector<256x64xf32>
    %133 = arith.addf %116, %132 : vector<256x64xf32>
    %c1_81 = arith.constant 1 : index
    %c0_82 = arith.constant 0 : index
    %c0_83 = arith.constant 0 : index
    %134 = vector.load %arg12[%c1_81, %c0_82, %c0_83] : memref<2x1x64xf32, #tpu.memory_space<vmem>>, vector<1x1x64xf32>
    %135 = vector.shape_cast %134 : vector<1x1x64xf32> to vector<1x64xf32>
    %c1_84 = arith.constant 1 : index
    %c0_85 = arith.constant 0 : index
    %c0_86 = arith.constant 0 : index
    %136 = vector.load %arg13[%c1_84, %c0_85, %c0_86] : memref<2x1x64xf32, #tpu.memory_space<vmem>>, vector<1x1x64xf32>
    %137 = vector.shape_cast %136 : vector<1x1x64xf32> to vector<1x64xf32>
    %cst_87 = arith.constant dense<0.000000e+00> : vector<256xf32>
    %138 = vector.multi_reduction <add>, %133, %cst_87 [1] : vector<256x64xf32> to vector<256xf32>
    %139 = vector.shape_cast %138 : vector<256xf32> to vector<256x1xf32>
    %cst_88 = arith.constant 6.400000e+01 : f32
    %140 = vector.broadcast %cst_88 : f32 to vector<256x1xf32>
    %141 = arith.divf %139, %140 : vector<256x1xf32>
    %142 = vector.broadcast %141 : vector<256x1xf32> to vector<256x64xf32>
    %143 = arith.subf %133, %142 : vector<256x64xf32>
    %144 = arith.mulf %143, %143 : vector<256x64xf32>
    %cst_89 = arith.constant dense<0.000000e+00> : vector<256xf32>
    %145 = vector.multi_reduction <add>, %144, %cst_89 [1] : vector<256x64xf32> to vector<256xf32>
    %146 = vector.shape_cast %145 : vector<256xf32> to vector<256x1xf32>
    %cst_90 = arith.constant 6.400000e+01 : f32
    %147 = vector.broadcast %cst_90 : f32 to vector<256x1xf32>
    %148 = arith.divf %146, %147 : vector<256x1xf32>
    %149 = vector.broadcast %141 : vector<256x1xf32> to vector<256x64xf32>
    %150 = arith.subf %133, %149 : vector<256x64xf32>
    %cst_91 = arith.constant 9.99999974E-6 : f32
    %151 = vector.broadcast %cst_91 : f32 to vector<256x1xf32>
    %152 = arith.addf %148, %151 : vector<256x1xf32>
    %153 = math.rsqrt %152 : vector<256x1xf32>
    %154 = vector.broadcast %153 : vector<256x1xf32> to vector<256x64xf32>
    %155 = arith.mulf %150, %154 : vector<256x64xf32>
    %156 = vector.broadcast %135 : vector<1x64xf32> to vector<256x64xf32>
    %157 = arith.mulf %155, %156 : vector<256x64xf32>
    %158 = vector.broadcast %137 : vector<1x64xf32> to vector<256x64xf32>
    %159 = arith.addf %157, %158 : vector<256x64xf32>
    %c0_92 = arith.constant 0 : index
    %c0_93 = arith.constant 0 : index
    %160 = vector.load %arg14[%c0_92, %c0_93] : memref<8x64xf32, #tpu.memory_space<vmem>>, vector<8x64xf32>
    %cst_94 = arith.constant dense<0.000000e+00> : vector<8x256xf32>
    %161 = tpu.matmul %160, %159, %cst_94 {dimension_numbers = #tpu.dot_dimension_numbers<[1], [1], [0], [0], [0, 0, 1, 0], [], []>} : vector<8x64xf32>, vector<256x64xf32>, vector<8x256xf32> -> vector<8x256xf32>
    %162 = vector.extract_strided_slice %161 {offsets = [0, 0], sizes = [1, 256], strides = [1, 1]} : vector<8x256xf32> to vector<1x256xf32>
    %c0_95 = arith.constant 0 : index
    %c0_96 = arith.constant 0 : index
    %163 = vector.load %arg15[%c0_95, %c0_96] : memref<1x1xf32, #tpu.memory_space<vmem>>, vector<1x1xf32>
    %164 = vector.broadcast %163 : vector<1x1xf32> to vector<1x256xf32>
    %165 = arith.addf %162, %164 : vector<1x256xf32>
    %c0_97 = arith.constant 0 : index
    %c0_98 = arith.constant 0 : index
    %166 = vector.load %arg16[%c0_97, %c0_98] : memref<1x256xf32, #tpu.memory_space<vmem>>, vector<1x256xf32>
    tpu.vector_store %arg16[%c0_97, %c0_98], %165 {strides = array<i32>} : memref<1x256xf32, #tpu.memory_space<vmem>>, vector<1x256xf32>,
    return
  }
  func.func @transform_0(%arg0: i32) -> (i32, i32) {
    %c0_i32 = arith.constant 0 : i32
    %c0_i32_0 = arith.constant 0 : i32
    return %arg0, %c0_i32 : i32, i32
  }
  func.func @transform_1(%arg0: i32) -> (i32, i32) {
    %c0_i32 = arith.constant 0 : i32
    %c0_i32_0 = arith.constant 0 : i32
    %c0_i32_1 = arith.constant 0 : i32
    return %c0_i32, %c0_i32_0 : i32, i32
  }
  func.func @transform_2(%arg0: i32) -> (i32, i32) {
    %c0_i32 = arith.constant 0 : i32
    %c0_i32_0 = arith.constant 0 : i32
    %c0_i32_1 = arith.constant 0 : i32
    return %c0_i32, %c0_i32_0 : i32, i32
  }
  func.func @transform_3(%arg0: i32) -> (i32, i32, i32) {
    %c0_i32 = arith.constant 0 : i32
    %c0_i32_0 = arith.constant 0 : i32
    %c0_i32_1 = arith.constant 0 : i32
    %c0_i32_2 = arith.constant 0 : i32
    return %c0_i32, %c0_i32_0, %c0_i32_1 : i32, i32, i32
  }
  func.func @transform_4(%arg0: i32) -> (i32, i32, i32) {
    %c0_i32 = arith.constant 0 : i32
    %c0_i32_0 = arith.constant 0 : i32
    %c0_i32_1 = arith.constant 0 : i32
    %c0_i32_2 = arith.constant 0 : i32
    return %c0_i32, %c0_i32_0, %c0_i32_1 : i32, i32, i32
  }
  func.func @transform_5(%arg0: i32) -> (i32, i32, i32) {
    %c0_i32 = arith.constant 0 : i32
    %c0_i32_0 = arith.constant 0 : i32
    %c0_i32_1 = arith.constant 0 : i32
    %c0_i32_2 = arith.constant 0 : i32
    return %c0_i32, %c0_i32_0, %c0_i32_1 : i32, i32, i32
  }
  func.func @transform_6(%arg0: i32) -> (i32, i32, i32) {
    %c0_i32 = arith.constant 0 : i32
    %c0_i32_0 = arith.constant 0 : i32
    %c0_i32_1 = arith.constant 0 : i32
    %c0_i32_2 = arith.constant 0 : i32
    return %c0_i32, %c0_i32_0, %c0_i32_1 : i32, i32, i32
  }
  func.func @transform_7(%arg0: i32) -> (i32, i32, i32) {
    %c0_i32 = arith.constant 0 : i32
    %c0_i32_0 = arith.constant 0 : i32
    %c0_i32_1 = arith.constant 0 : i32
    %c0_i32_2 = arith.constant 0 : i32
    return %c0_i32, %c0_i32_0, %c0_i32_1 : i32, i32, i32
  }
  func.func @transform_8(%arg0: i32) -> (i32, i32, i32) {
    %c0_i32 = arith.constant 0 : i32
    %c0_i32_0 = arith.constant 0 : i32
    %c0_i32_1 = arith.constant 0 : i32
    %c0_i32_2 = arith.constant 0 : i32
    return %c0_i32, %c0_i32_0, %c0_i32_1 : i32, i32, i32
  }
  func.func @transform_9(%arg0: i32) -> (i32, i32, i32) {
    %c0_i32 = arith.constant 0 : i32
    %c0_i32_0 = arith.constant 0 : i32
    %c0_i32_1 = arith.constant 0 : i32
    %c0_i32_2 = arith.constant 0 : i32
    return %c0_i32, %c0_i32_0, %c0_i32_1 : i32, i32, i32
  }
  func.func @transform_10(%arg0: i32) -> (i32, i32, i32) {
    %c0_i32 = arith.constant 0 : i32
    %c0_i32_0 = arith.constant 0 : i32
    %c0_i32_1 = arith.constant 0 : i32
    %c0_i32_2 = arith.constant 0 : i32
    return %c0_i32, %c0_i32_0, %c0_i32_1 : i32, i32, i32
  }
  func.func @transform_11(%arg0: i32) -> (i32, i32, i32) {
    %c0_i32 = arith.constant 0 : i32
    %c0_i32_0 = arith.constant 0 : i32
    %c0_i32_1 = arith.constant 0 : i32
    %c0_i32_2 = arith.constant 0 : i32
    return %c0_i32, %c0_i32_0, %c0_i32_1 : i32, i32, i32
  }
  func.func @transform_12(%arg0: i32) -> (i32, i32, i32) {
    %c0_i32 = arith.constant 0 : i32
    %c0_i32_0 = arith.constant 0 : i32
    %c0_i32_1 = arith.constant 0 : i32
    %c0_i32_2 = arith.constant 0 : i32
    return %c0_i32, %c0_i32_0, %c0_i32_1 : i32, i32, i32
  }
  func.func @transform_13(%arg0: i32) -> (i32, i32) {
    %c0_i32 = arith.constant 0 : i32
    %c0_i32_0 = arith.constant 0 : i32
    %c0_i32_1 = arith.constant 0 : i32
    return %c0_i32, %c0_i32_0 : i32, i32
  }
  func.func @transform_14(%arg0: i32) -> (i32, i32) {
    %c0_i32 = arith.constant 0 : i32
    %c0_i32_0 = arith.constant 0 : i32
    %c0_i32_1 = arith.constant 0 : i32
    return %c0_i32, %c0_i32_0 : i32, i32
  }
  func.func @transform_15(%arg0: i32) -> (i32, i32) {
    %c0_i32 = arith.constant 0 : i32
    %c0_i32_0 = arith.constant 0 : i32
    return %c0_i32, %arg0 : i32, i32
  }
}

</mosaic_0001>

<llo_original>
// kernel: tpu_custom_call.1
$region0: #{tpu_custom_call.1}
  #allocation0 [shape = 'u32[]', space=smem, size = 0x4, offset = 0x4, fixed_abs, tag = 'smem constant byte address 0x4 - core index']
  #allocation1 [shape = 'u32[144,128]{1,0:T(1,128)}', space=vmem, size = 0x12000, scoped, tag = 'internal scratch']
  #allocation2 [shape = 'f32[1,1]{1,0:T(1,128)S(1)}', space=vmem, size = 0x200, scoped, tag = 'scoped memory for tpu_custom_call.1']
  %s0 = inlined_call_operand.vmem [shape: f32[256,16], index: 0, kind: input, shape index: {}]
  %s1 = inlined_call_operand.vmem [shape: f32[16,64], index: 1, kind: input, shape index: {}]
  %s2 = inlined_call_operand.vmem [shape: f32[1,64], index: 2, kind: input, shape index: {}]
  %s3 = inlined_call_operand.vmem [shape: f32[2,64,64], index: 3, kind: input, shape index: {}]
  %s4 = inlined_call_operand.vmem [shape: f32[2,1,64], index: 4, kind: input, shape index: {}]
  %s5 = inlined_call_operand.vmem [shape: f32[2,1,64], index: 5, kind: input, shape index: {}]
  %s6 = inlined_call_operand.vmem [shape: f32[2,1,64], index: 6, kind: input, shape index: {}]
  %s7 = inlined_call_operand.vmem [shape: f32[2,64,256], index: 7, kind: input, shape index: {}]
  %s8 = inlined_call_operand.vmem [shape: f32[2,1,256], index: 8, kind: input, shape index: {}]
  %s9 = inlined_call_operand.vmem [shape: f32[2,256,64], index: 9, kind: input, shape index: {}]
  %s10 = inlined_call_operand.vmem [shape: f32[2,1,64], index: 10, kind: input, shape index: {}]
  %s11 = inlined_call_operand.vmem [shape: f32[2,1,64], index: 11, kind: input, shape index: {}]
  %s12 = inlined_call_operand.vmem [shape: f32[2,1,64], index: 12, kind: input, shape index: {}]
  %s13 = inlined_call_operand.vmem [shape: f32[8,64], index: 13, kind: input, shape index: {}]
  %s14 = inlined_call_operand.<no memory space> [shape: f32[1,1], index: 14, kind: input, shape index: {}]
  %s15 = inlined_call_operand.hbm [shape: f32[1,256], index: 15, kind: output, shape index: {}]
  %s16 = sld [smem:[#allocation0]]
  $region70: #{tpu_custom_call.1} parent=0
    _
  %s18 = ssub.s32 1, %s16
  %s19 = scalar_select 0, %s18, %s16
  %v20 = vstv %s14
  %21 = vst [vmem:[#allocation2] sm:$0x1] %v20
  $region1: #{tpu_custom_call.1} parent=0
    #allocation3 [shape = 'u8[1024]{0}', space=vmem, size = 0x400, scoped, tag = 'output window, operand 0, single buffered']
    #allocation4 [shape = 's32[1]{0}', space=sflag, size = 0x4, scoped, tag = 'scoped memory for tpu_custom_call.1']
    %22 = vsyncpa [#allocation4], 0
    // Predicated region
    $region2: #{tpu_custom_call.1} parent=1 // pred_check
      _
    $region3: #{tpu_custom_call.1} parent=1 // pred_check_branch
      %24 = sbr.rel (0) target = $region5
    $region4: #{tpu_custom_call.1} parent=1 // pred_region
      _
    $region5: #{tpu_custom_call.1} parent=1 // pred_fallthru
      _
    // Predicated region
    $region6: #{tpu_custom_call.1} parent=1 // pred_check
      _
    $region7: #{tpu_custom_call.1} parent=1 // pred_check_branch
      %26 = sbr.rel (0) target = $region9
    $region8: #{tpu_custom_call.1} parent=1 // pred_region
      _
    $region9: #{tpu_custom_call.1} parent=1 // pred_fallthru
      _
    // Predicated region
    $region10: #{tpu_custom_call.1} parent=1 // pred_check
      _
    $region11: #{tpu_custom_call.1} parent=1 // pred_check_branch
      %28 = sbr.rel (0) target = $region13
    $region12: #{tpu_custom_call.1} parent=1 // pred_region
      _
    $region13: #{tpu_custom_call.1} parent=1 // pred_fallthru
      _
    // Predicated region
    $region14: #{tpu_custom_call.1} parent=1 // pred_check
      _
    $region15: #{tpu_custom_call.1} parent=1 // pred_check_branch
      %30 = sbr.rel (0) target = $region17
    $region16: #{tpu_custom_call.1} parent=1 // pred_region
      _
    $region17: #{tpu_custom_call.1} parent=1 // pred_fallthru
      _
    // Predicated region
    $region18: #{tpu_custom_call.1} parent=1 // pred_check
      _
    $region19: #{tpu_custom_call.1} parent=1 // pred_check_branch
      %32 = sbr.rel (0) target = $region21
    $region20: #{tpu_custom_call.1} parent=1 // pred_region
      _
    $region21: #{tpu_custom_call.1} parent=1 // pred_fallthru
      _
    // Predicated region
    $region22: #{tpu_custom_call.1} parent=1 // pred_check
      _
    $region23: #{tpu_custom_call.1} parent=1 // pred_check_branch
      %34 = sbr.rel (0) target = $region25
    $region24: #{tpu_custom_call.1} parent=1 // pred_region
      _
    $region25: #{tpu_custom_call.1} parent=1 // pred_fallthru
      _
    // Predicated region
    $region26: #{tpu_custom_call.1} parent=1 // pred_check
      _
    $region27: #{tpu_custom_call.1} parent=1 // pred_check_branch
      %36 = sbr.rel (0) target = $region29
    $region28: #{tpu_custom_call.1} parent=1 // pred_region
      _
    $region29: #{tpu_custom_call.1} parent=1 // pred_fallthru
      _
    // Predicated region
    $region30: #{tpu_custom_call.1} parent=1 // pred_check
      _
    $region31: #{tpu_custom_call.1} parent=1 // pred_check_branch
      %38 = sbr.rel (0) target = $region33
    $region32: #{tpu_custom_call.1} parent=1 // pred_region
      _
    $region33: #{tpu_custom_call.1} parent=1 // pred_fallthru
      _
    // Predicated region
    $region34: #{tpu_custom_call.1} parent=1 // pred_check
      _
    $region35: #{tpu_custom_call.1} parent=1 // pred_check_branch
      %40 = sbr.rel (0) target = $region37
    $region36: #{tpu_custom_call.1} parent=1 // pred_region
      _
    $region37: #{tpu_custom_call.1} parent=1 // pred_fallthru
      _
    // Predicated region
    $region38: #{tpu_custom_call.1} parent=1 // pred_check
      _
    $region39: #{tpu_custom_call.1} parent=1 // pred_check_branch
      %42 = sbr.rel (0) target = $region41
    $region40: #{tpu_custom_call.1} parent=1 // pred_region
      _
    $region41: #{tpu_custom_call.1} parent=1 // pred_fallthru
      _
    // Predicated region
    $region42: #{tpu_custom_call.1} parent=1 // pred_check
      _
    $region43: #{tpu_custom_call.1} parent=1 // pred_check_branch
      %44 = sbr.rel (0) target = $region45
    $region44: #{tpu_custom_call.1} parent=1 // pred_region
      _
    $region45: #{tpu_custom_call.1} parent=1 // pred_fallthru
      _
    // Predicated region
    $region46: #{tpu_custom_call.1} parent=1 // pred_check
      _
    $region47: #{tpu_custom_call.1} parent=1 // pred_check_branch
      %46 = sbr.rel (0) target = $region49
    $region48: #{tpu_custom_call.1} parent=1 // pred_region
      _
    $region49: #{tpu_custom_call.1} parent=1 // pred_fallthru
      _
    // Predicated region
    $region50: #{tpu_custom_call.1} parent=1 // pred_check
      _
    $region51: #{tpu_custom_call.1} parent=1 // pred_check_branch
      %48 = sbr.rel (0) target = $region53
    $region52: #{tpu_custom_call.1} parent=1 // pred_region
      _
    $region53: #{tpu_custom_call.1} parent=1 // pred_fallthru
      _
    // Predicated region
    $region54: #{tpu_custom_call.1} parent=1 // pred_check
      _
    $region55: #{tpu_custom_call.1} parent=1 // pred_check_branch
      %50 = sbr.rel (0) target = $region57
    $region56: #{tpu_custom_call.1} parent=1 // pred_region
      _
    $region57: #{tpu_custom_call.1} parent=1 // pred_fallthru
      _
    // Predicated region
    $region58: #{tpu_custom_call.1} parent=1 // pred_check
      _
    $region59: #{tpu_custom_call.1} parent=1 // pred_check_branch
      %52 = sbr.rel (0) target = $region61
    $region60: #{tpu_custom_call.1} parent=1 // pred_region
      _
    $region61: #{tpu_custom_call.1} parent=1 // pred_fallthru
      _
    %v53 = vld [vmem:[%s0] sm:$0xff]
    %v54 = vld [vmem:[%s0 + $0x8] sm:$0xff]
    %v55 = vld [vmem:[%s0 + $0x10] sm:$0xff]
    %v56 = vld [vmem:[%s0 + $0x18] sm:$0xff]
    %v57 = vld [vmem:[%s0 + $0x20] sm:$0xff]
    %v58 = vld [vmem:[%s0 + $0x28] sm:$0xff]
    %v59 = vld [vmem:[%s0 + $0x30] sm:$0xff]
    %v60 = vld [vmem:[%s0 + $0x38] sm:$0xff]
    %v61 = vld [vmem:[%s0 + $0x40] sm:$0xff]
    %v62 = vld [vmem:[%s0 + $0x48] sm:$0xff]
    %v63 = vld [vmem:[%s0 + $0x50] sm:$0xff]
    %v64 = vld [vmem:[%s0 + $0x58] sm:$0xff]
    %v65 = vld [vmem:[%s0 + $0x60] sm:$0xff]
    %v66 = vld [vmem:[%s0 + $0x68] sm:$0xff]
    %v67 = vld [vmem:[%s0 + $0x70] sm:$0xff]
    %v68 = vld [vmem:[%s0 + $0x78] sm:$0xff]
    %v69 = vld [vmem:[%s0 + $0x80] sm:$0xff]
    %v70 = vld [vmem:[%s0 + $0x88] sm:$0xff]
    %v71 = vld [vmem:[%s0 + $0x90] sm:$0xff]
    %v72 = vld [vmem:[%s0 + $0x98] sm:$0xff]
    %v73 = vld [vmem:[%s0 + $0xa0] sm:$0xff]
    %v74 = vld [vmem:[%s0 + $0xa8] sm:$0xff]
    %v75 = vld [vmem:[%s0 + $0xb0] sm:$0xff]
    %v76 = vld [vmem:[%s0 + $0xb8] sm:$0xff]
    %v77 = vld [vmem:[%s0 + $0xc0] sm:$0xff]
    %v78 = vld [vmem:[%s0 + $0xc8] sm:$0xff]
    %v79 = vld [vmem:[%s0 + $0xd0] sm:$0xff]
    %v80 = vld [vmem:[%s0 + $0xd8] sm:$0xff]
    %v81 = vld [vmem:[%s0 + $0xe0] sm:$0xff]
    %v82 = vld [vmem:[%s0 + $0xe8] sm:$0xff]
    %v83 = vld [vmem:[%s0 + $0xf0] sm:$0xff]
    %v84 = vld [vmem:[%s0 + $0xf8] sm:$0xff]
    %v85 = vld [vmem:[%s1] sm:$0xff]
    %v86 = vld [vmem:[%s1 + $0x8] sm:$0xff]
    %v87 = vld [vmem:[%s2] sm:$0x1]
    %v89 = vlaneseq
    %v90 = vshrl.u32 %v89, 7
    %v91 = vsub.s32 0, %v90
    %v92 = vrot.slane %v87, %v91
    %vm94 = vcmask 130048
    %v96 = vsel %vm94, %v53, 0
    %v99 = vsel %vm94, %v54, 0
    %v102 = vsel %vm94, %v55, 0
    %v105 = vsel %vm94, %v56, 0
    %v108 = vsel %vm94, %v57, 0
    %v111 = vsel %vm94, %v58, 0
    %v114 = vsel %vm94, %v59, 0
    %v117 = vsel %vm94, %v60, 0
    %v120 = vsel %vm94, %v61, 0
    %v123 = vsel %vm94, %v62, 0
    %v126 = vsel %vm94, %v63, 0
    %v129 = vsel %vm94, %v64, 0
    %v132 = vsel %vm94, %v65, 0
    %v135 = vsel %vm94, %v66, 0
    %v138 = vsel %vm94, %v67, 0
    %v141 = vsel %vm94, %v68, 0
    %v144 = vsel %vm94, %v69, 0
    %v147 = vsel %vm94, %v70, 0
    %v150 = vsel %vm94, %v71, 0
    %v153 = vsel %vm94, %v72, 0
    %v156 = vsel %vm94, %v73, 0
    %v159 = vsel %vm94, %v74, 0
    %v162 = vsel %vm94, %v75, 0
    %v165 = vsel %vm94, %v76, 0
    %v168 = vsel %vm94, %v77, 0
    %v171 = vsel %vm94, %v78, 0
    %v174 = vsel %vm94, %v79, 0
    %v177 = vsel %vm94, %v80, 0
    %v180 = vsel %vm94, %v81, 0
    %v183 = vsel %vm94, %v82, 0
    %v186 = vsel %vm94, %v83, 0
    %v189 = vsel %vm94, %v84, 0
    %191 = vmatprep.subr.mxu0 0.0
    %192 = vmatpush1.msra.mxu0 %v85
    %193 = vmatprep.subr.mxu0 0.0
    %194 = vmatpush1.msra.mxu0 %v86
    %195 = vmatprep.subr.mxu0 0.0
    %196 = vmatpush1.msra.mxu0 0.0
    %197 = vmatprep.subr.mxu0 0.0
    %198 = vmatpush1.msra.mxu0 0.0
    %199 = vmatprep.subr.mxu0 0.0
    %200 = vmatpush1.msra.mxu0 0.0
    %201 = vmatprep.subr.mxu0 0.0
    %202 = vmatpush1.msra.mxu0 0.0
    %203 = vmatprep.subr.mxu0 0.0
    %204 = vmatpush1.msra.mxu0 0.0
    %205 = vmatprep.subr.mxu0 0.0
    %206 = vmatpush1.msra.mxu0 0.0
    %207 = vmatprep.subr.mxu0 0.0
    %208 = vmatpush1.msra.mxu0 0.0
    %209 = vmatprep.subr.mxu0 0.0
    %210 = vmatpush1.msra.mxu0 0.0
    %211 = vmatprep.subr.mxu0 0.0
    %212 = vmatpush1.msra.mxu0 0.0
    %213 = vmatprep.subr.mxu0 0.0
    %214 = vmatpush1.msra.mxu0 0.0
    %215 = vmatprep.subr.mxu0 0.0
    %216 = vmatpush1.msra.mxu0 0.0
    %217 = vmatprep.subr.mxu0 0.0
    %218 = vmatpush1.msra.mxu0 0.0
    %219 = vmatprep.subr.mxu0 0.0
    %220 = vmatpush1.msra.mxu0 0.0
    %221 = vmatprep.subr.mxu0 0.0
    %222 = vmatpush1.msra.mxu0 0.0
    %223 = vmatprep.subr.mxu0 0.0
    %224 = vmatpush1.msra.mxu0 0.0
    %225 = vmatprep.subr.mxu0 0.0
    %226 = vmatpush1.msra.mxu0 0.0
    %227 = vmatprep.subr.mxu0 0.0
    %228 = vmatpush1.msra.mxu0 0.0
    %229 = vmatprep.subr.mxu0 0.0
    %230 = vmatpush1.msra.mxu0 0.0
    %231 = vmatprep.subr.mxu0 0.0
    %232 = vmatpush1.msra.mxu0 0.0
    %233 = vmatprep.subr.mxu0 0.0
    %234 = vmatpush1.msra.mxu0 0.0
    %235 = vmatprep.subr.mxu0 0.0
    %236 = vmatpush1.msra.mxu0 0.0
    %237 = vmatprep.subr.mxu0 0.0
    %238 = vmatpush1.msra.mxu0 0.0
    %239 = vmatprep.subr.mxu0 0.0
    %240 = vmatpush1.msra.mxu0 0.0
    %241 = vmatprep.subr.mxu0 0.0
    %242 = vmatpush1.msra.mxu0 0.0
    %243 = vmatprep.subr.mxu0 0.0
    %244 = vmatpush1.msra.mxu0 0.0
    %245 = vmatprep.subr.mxu0 0.0
    %246 = vmatpush1.msra.mxu0 0.0
    %247 = vmatprep.subr.mxu0 0.0
    %248 = vmatpush1.msra.mxu0 0.0
    %249 = vmatprep.subr.mxu0 0.0
    %250 = vmatpush1.msra.mxu0 0.0
    %251 = vmatprep.subr.mxu0 0.0
    %252 = vmatpush1.msra.mxu0 0.0
    %253 = vmatprep.subr.mxu0 0.0
    %254 = vmatpush1.msra.mxu0 0.0
    %255 = vmatprep.mubr.f32.mxu0 0.0
    %256 = vmatmul.mubr.f32.gmra.mrb[0].mxu0 %v96
    %v257 = vpop.f32.mrb[0].mxu0
    %v258 = vadd.f32 %v92, %v257
    %v259 = vpop.f32.mrb[0].mxu0
    %260 = vmatprep.mubr.f32.mxu0 0.0
    %261 = vmatmul.mubr.f32.gmra.mrb[0].mxu0 %v99
    %v262 = vpop.f32.mrb[0].mxu0
    %v263 = vadd.f32 %v92, %v262
    %v264 = vpop.f32.mrb[0].mxu0
    %265 = vmatprep.mubr.f32.mxu0 0.0
    %266 = vmatmul.mubr.f32.gmra.mrb[0].mxu0 %v102
    %v267 = vpop.f32.mrb[0].mxu0
    %v268 = vadd.f32 %v92, %v267
    %v269 = vpop.f32.mrb[0].mxu0
    %270 = vmatprep.mubr.f32.mxu0 0.0
    %271 = vmatmul.mubr.f32.gmra.mrb[0].mxu0 %v105
    %v272 = vpop.f32.mrb[0].mxu0
    %v273 = vadd.f32 %v92, %v272
    %v274 = vpop.f32.mrb[0].mxu0
    %275 = vmatprep.mubr.f32.mxu0 0.0
    %276 = vmatmul.mubr.f32.gmra.mrb[0].mxu0 %v108
    %v277 = vpop.f32.mrb[0].mxu0
    %v278 = vadd.f32 %v92, %v277
    %v279 = vpop.f32.mrb[0].mxu0
    %280 = vmatprep.mubr.f32.mxu0 0.0
    %281 = vmatmul.mubr.f32.gmra.mrb[0].mxu0 %v111
    %v282 = vpop.f32.mrb[0].mxu0
    %v283 = vadd.f32 %v92, %v282
    %v284 = vpop.f32.mrb[0].mxu0
    %285 = vmatprep.mubr.f32.mxu0 0.0
    %286 = vmatmul.mubr.f32.gmra.mrb[0].mxu0 %v114
    %v287 = vpop.f32.mrb[0].mxu0
    %v288 = vadd.f32 %v92, %v287
    %v289 = vpop.f32.mrb[0].mxu0
    %290 = vmatprep.mubr.f32.mxu0 0.0
    %291 = vmatmul.mubr.f32.gmra.mrb[0].mxu0 %v117
    %v292 = vpop.f32.mrb[0].mxu0
    %v293 = vadd.f32 %v92, %v292
    %v294 = vpop.f32.mrb[0].mxu0
    %295 = vmatprep.mubr.f32.mxu0 0.0
    %296 = vmatmul.mubr.f32.gmra.mrb[0].mxu0 %v120
    %v297 = vpop.f32.mrb[0].mxu0
    %v298 = vadd.f32 %v92, %v297
    %v299 = vpop.f32.mrb[0].mxu0
    %300 = vmatprep.mubr.f32.mxu0 0.0
    %301 = vmatmul.mubr.f32.gmra.mrb[0].mxu0 %v123
    %v302 = vpop.f32.mrb[0].mxu0
    %v303 = vadd.f32 %v92, %v302
    %v304 = vpop.f32.mrb[0].mxu0
    %305 = vmatprep.mubr.f32.mxu0 0.0
    %306 = vmatmul.mubr.f32.gmra.mrb[0].mxu0 %v126
    %v307 = vpop.f32.mrb[0].mxu0
    %v308 = vadd.f32 %v92, %v307
    %v309 = vpop.f32.mrb[0].mxu0
    %310 = vmatprep.mubr.f32.mxu0 0.0
    %311 = vmatmul.mubr.f32.gmra.mrb[0].mxu0 %v129
    %v312 = vpop.f32.mrb[0].mxu0
    %v313 = vadd.f32 %v92, %v312
    %v314 = vpop.f32.mrb[0].mxu0
    %315 = vmatprep.mubr.f32.mxu0 0.0
    %316 = vmatmul.mubr.f32.gmra.mrb[0].mxu0 %v132
    %v317 = vpop.f32.mrb[0].mxu0
    %v318 = vadd.f32 %v92, %v317
    %v319 = vpop.f32.mrb[0].mxu0
    %320 = vmatprep.mubr.f32.mxu0 0.0
    %321 = vmatmul.mubr.f32.gmra.mrb[0].mxu0 %v135
    %v322 = vpop.f32.mrb[0].mxu0
    %v323 = vadd.f32 %v92, %v322
    %v324 = vpop.f32.mrb[0].mxu0
    %325 = vmatprep.mubr.f32.mxu0 0.0
    %326 = vmatmul.mubr.f32.gmra.mrb[0].mxu0 %v138
    %v327 = vpop.f32.mrb[0].mxu0
    %v328 = vadd.f32 %v92, %v327
    %v329 = vpop.f32.mrb[0].mxu0
    %330 = vmatprep.mubr.f32.mxu0 0.0
    %331 = vmatmul.mubr.f32.gmra.mrb[0].mxu0 %v141
    %v332 = vpop.f32.mrb[0].mxu0
    %v333 = vadd.f32 %v92, %v332
    %v334 = vpop.f32.mrb[0].mxu0
    %335 = vmatprep.mubr.f32.mxu0 0.0
    %336 = vmatmul.mubr.f32.gmra.mrb[0].mxu0 %v144
    %v337 = vpop.f32.mrb[0].mxu0
    %v338 = vadd.f32 %v92, %v337
    %v339 = vpop.f32.mrb[0].mxu0
    %340 = vmatprep.mubr.f32.mxu0 0.0
    %341 = vmatmul.mubr.f32.gmra.mrb[0].mxu0 %v147
    %v342 = vpop.f32.mrb[0].mxu0
    %v343 = vadd.f32 %v92, %v342
    %v344 = vpop.f32.mrb[0].mxu0
    %345 = vmatprep.mubr.f32.mxu0 0.0
    %346 = vmatmul.mubr.f32.gmra.mrb[0].mxu0 %v150
    %v347 = vpop.f32.mrb[0].mxu0
    %v348 = vadd.f32 %v92, %v347
    %v349 = vpop.f32.mrb[0].mxu0
    %350 = vmatprep.mubr.f32.mxu0 0.0
    %351 = vmatmul.mubr.f32.gmra.mrb[0].mxu0 %v153
    %v352 = vpop.f32.mrb[0].mxu0
    %v353 = vadd.f32 %v92, %v352
    %v354 = vpop.f32.mrb[0].mxu0
    %355 = vmatprep.mubr.f32.mxu0 0.0
    %356 = vmatmul.mubr.f32.gmra.mrb[0].mxu0 %v156
    %v357 = vpop.f32.mrb[0].mxu0
    %v358 = vadd.f32 %v92, %v357
    %v359 = vpop.f32.mrb[0].mxu0
    %360 = vmatprep.mubr.f32.mxu0 0.0
    %361 = vmatmul.mubr.f32.gmra.mrb[0].mxu0 %v159
    %v362 = vpop.f32.mrb[0].mxu0
    %v363 = vadd.f32 %v92, %v362
    %v364 = vpop.f32.mrb[0].mxu0
    %365 = vmatprep.mubr.f32.mxu0 0.0
    %366 = vmatmul.mubr.f32.gmra.mrb[0].mxu0 %v162
    %v367 = vpop.f32.mrb[0].mxu0
    %v368 = vadd.f32 %v92, %v367
    %v369 = vpop.f32.mrb[0].mxu0
    %370 = vmatprep.mubr.f32.mxu0 0.0
    %371 = vmatmul.mubr.f32.gmra.mrb[0].mxu0 %v165
    %v372 = vpop.f32.mrb[0].mxu0
    %v373 = vadd.f32 %v92, %v372
    %v374 = vpop.f32.mrb[0].mxu0
    %375 = vmatprep.mubr.f32.mxu0 0.0
    %376 = vmatmul.mubr.f32.gmra.mrb[0].mxu0 %v168
    %v377 = vpop.f32.mrb[0].mxu0
    %v378 = vadd.f32 %v92, %v377
    %v379 = vpop.f32.mrb[0].mxu0
    %380 = vmatprep.mubr.f32.mxu0 0.0
    %381 = vmatmul.mubr.f32.gmra.mrb[0].mxu0 %v171
    %v382 = vpop.f32.mrb[0].mxu0
    %v383 = vadd.f32 %v92, %v382
    %v384 = vpop.f32.mrb[0].mxu0
    %385 = vmatprep.mubr.f32.mxu0 0.0
    %386 = vmatmul.mubr.f32.gmra.mrb[0].mxu0 %v174
    %v387 = vpop.f32.mrb[0].mxu0
    %v388 = vadd.f32 %v92, %v387
    %v389 = vpop.f32.mrb[0].mxu0
    %390 = vmatprep.mubr.f32.mxu0 0.0
    %391 = vmatmul.mubr.f32.gmra.mrb[0].mxu0 %v177
    %v392 = vpop.f32.mrb[0].mxu0
    %v393 = vadd.f32 %v92, %v392
    %v394 = vpop.f32.mrb[0].mxu0
    %395 = vmatprep.mubr.f32.mxu0 0.0
    %396 = vmatmul.mubr.f32.gmra.mrb[0].mxu0 %v180
    %v397 = vpop.f32.mrb[0].mxu0
    %v398 = vadd.f32 %v92, %v397
    %v399 = vpop.f32.mrb[0].mxu0
    %400 = vmatprep.mubr.f32.mxu0 0.0
    %401 = vmatmul.mubr.f32.gmra.mrb[0].mxu0 %v183
    %v402 = vpop.f32.mrb[0].mxu0
    %v403 = vadd.f32 %v92, %v402
    %v404 = vpop.f32.mrb[0].mxu0
    %405 = vmatprep.mubr.f32.mxu0 0.0
    %406 = vmatmul.mubr.f32.gmra.mrb[0].mxu0 %v186
    %v407 = vpop.f32.mrb[0].mxu0
    %v408 = vadd.f32 %v92, %v407
    %v409 = vpop.f32.mrb[0].mxu0
    %410 = vmatprep.mubr.f32.mxu0 0.0
    %411 = vmatmul.mubr.f32.gmra.mrb[0].mxu0 %v189
    %v412 = vpop.f32.mrb[0].mxu0
    %v413 = vadd.f32 %v92, %v412
    %v414 = vpop.f32.mrb[0].mxu0
    %415 = vdwg.mxu0
    %v416 = vld [vmem:[%s3] sm:$0xff]
    %v417 = vld [vmem:[%s3 + $0x8] sm:$0xff]
    %v418 = vld [vmem:[%s3 + $0x10] sm:$0xff]
    %v419 = vld [vmem:[%s3 + $0x18] sm:$0xff]
    %v420 = vld [vmem:[%s3 + $0x20] sm:$0xff]
    %v421 = vld [vmem:[%s3 + $0x28] sm:$0xff]
    %v422 = vld [vmem:[%s3 + $0x30] sm:$0xff]
    %v423 = vld [vmem:[%s3 + $0x38] sm:$0xff]
    %v424 = vld [vmem:[%s4] sm:$0x1]
    %v426 = vlaneseq
    %v427 = vshrl.u32 %v426, 7
    %v428 = vsub.s32 0, %v427
    %v429 = vrot.slane %v424, %v428
    %vm431 = vcmask 523264
    %v433 = vsel %vm431, %v258, 0
    %v436 = vsel %vm431, %v263, 0
    %v439 = vsel %vm431, %v268, 0
    %v442 = vsel %vm431, %v273, 0
    %v445 = vsel %vm431, %v278, 0
    %v448 = vsel %vm431, %v283, 0
    %v451 = vsel %vm431, %v288, 0
    %v454 = vsel %vm431, %v293, 0
    %v457 = vsel %vm431, %v298, 0
    %v460 = vsel %vm431, %v303, 0
    %v463 = vsel %vm431, %v308, 0
    %v466 = vsel %vm431, %v313, 0
    %v469 = vsel %vm431, %v318, 0
    %v472 = vsel %vm431, %v323, 0
    %v475 = vsel %vm431, %v328, 0
    %v478 = vsel %vm431, %v333, 0
    %v481 = vsel %vm431, %v338, 0
    %v484 = vsel %vm431, %v343, 0
    %v487 = vsel %vm431, %v348, 0
    %v490 = vsel %vm431, %v353, 0
    %v493 = vsel %vm431, %v358, 0
    %v496 = vsel %vm431, %v363, 0
    %v499 = vsel %vm431, %v368, 0
    %v502 = vsel %vm431, %v373, 0
    %v505 = vsel %vm431, %v378, 0
    %v508 = vsel %vm431, %v383, 0
    %v511 = vsel %vm431, %v388, 0
    %v514 = vsel %vm431, %v393, 0
    %v517 = vsel %vm431, %v398, 0
    %v520 = vsel %vm431, %v403, 0
    %v523 = vsel %vm431, %v408, 0
    %v526 = vsel %vm431, %v413, 0
    %528 = vmatprep.subr.mxu0 0.0
    %529 = vmatpush1.msra.mxu0 %v416
    %530 = vmatprep.subr.mxu0 0.0
    %531 = vmatpush1.msra.mxu0 %v417
    %532 = vmatprep.subr.mxu0 0.0
    %533 = vmatpush1.msra.mxu0 %v418
    %534 = vmatprep.subr.mxu0 0.0
    %535 = vmatpush1.msra.mxu0 %v419
    %536 = vmatprep.subr.mxu0 0.0
    %537 = vmatpush1.msra.mxu0 %v420
    %538 = vmatprep.subr.mxu0 0.0
    %539 = vmatpush1.msra.mxu0 %v421
    %540 = vmatprep.subr.mxu0 0.0
    %541 = vmatpush1.msra.mxu0 %v422
    %542 = vmatprep.subr.mxu0 0.0
    %543 = vmatpush1.msra.mxu0 %v423
    %544 = vmatprep.subr.mxu0 0.0
    %545 = vmatpush1.msra.mxu0 0.0
    %546 = vmatprep.subr.mxu0 0.0
    %547 = vmatpush1.msra.mxu0 0.0
    %548 = vmatprep.subr.mxu0 0.0
    %549 = vmatpush1.msra.mxu0 0.0
    %550 = vmatprep.subr.mxu0 0.0
    %551 = vmatpush1.msra.mxu0 0.0
    %552 = vmatprep.subr.mxu0 0.0
    %553 = vmatpush1.msra.mxu0 0.0
    %554 = vmatprep.subr.mxu0 0.0
    %555 = vmatpush1.msra.mxu0 0.0
    %556 = vmatprep.subr.mxu0 0.0
    %557 = vmatpush1.msra.mxu0 0.0
    %558 = vmatprep.subr.mxu0 0.0
    %559 = vmatpush1.msra.mxu0 0.0
    %560 = vmatprep.subr.mxu0 0.0
    %561 = vmatpush1.msra.mxu0 0.0
    %562 = vmatprep.subr.mxu0 0.0
    %563 = vmatpush1.msra.mxu0 0.0
    %564 = vmatprep.subr.mxu0 0.0
    %565 = vmatpush1.msra.mxu0 0.0
    %566 = vmatprep.subr.mxu0 0.0
    %567 = vmatpush1.msra.mxu0 0.0
    %568 = vmatprep.subr.mxu0 0.0
    %569 = vmatpush1.msra.mxu0 0.0
    %570 = vmatprep.subr.mxu0 0.0
    %571 = vmatpush1.msra.mxu0 0.0
    %572 = vmatprep.subr.mxu0 0.0
    %573 = vmatpush1.msra.mxu0 0.0
    %574 = vmatprep.subr.mxu0 0.0
    %575 = vmatpush1.msra.mxu0 0.0
    %576 = vmatprep.subr.mxu0 0.0
    %577 = vmatpush1.msra.mxu0 0.0
    %578 = vmatprep.subr.mxu0 0.0
    %579 = vmatpush1.msra.mxu0 0.0
    %580 = vmatprep.subr.mxu0 0.0
    %581 = vmatpush1.msra.mxu0 0.0
    %582 = vmatprep.subr.mxu0 0.0
    %583 = vmatpush1.msra.mxu0 0.0
    %584 = vmatprep.subr.mxu0 0.0
    %585 = vmatpush1.msra.mxu0 0.0
    %586 = vmatprep.subr.mxu0 0.0
    %587 = vmatpush1.msra.mxu0 0.0
    %588 = vmatprep.subr.mxu0 0.0
    %589 = vmatpush1.msra.mxu0 0.0
    %590 = vmatprep.subr.mxu0 0.0
    %591 = vmatpush1.msra.mxu0 0.0
    %592 = vmatprep.mubr.f32.mxu0 0.0
    %593 = vmatmul.mubr.f32.gmra.mrb[0].mxu0 %v433
    %v594 = vpop.f32.mrb[0].mxu0
    %v595 = vadd.f32 %v429, %v594
    %v596 = vpop.f32.mrb[0].mxu0
    %597 = vmatprep.mubr.f32.mxu0 0.0
    %598 = vmatmul.mubr.f32.gmra.mrb[0].mxu0 %v436
    %v599 = vpop.f32.mrb[0].mxu0
    %v600 = vadd.f32 %v429, %v599
    %v601 = vpop.f32.mrb[0].mxu0
    %602 = vmatprep.mubr.f32.mxu0 0.0
    %603 = vmatmul.mubr.f32.gmra.mrb[0].mxu0 %v439
    %v604 = vpop.f32.mrb[0].mxu0
    %v605 = vadd.f32 %v429, %v604
    %v606 = vpop.f32.mrb[0].mxu0
    %607 = vmatprep.mubr.f32.mxu0 0.0
    %608 = vmatmul.mubr.f32.gmra.mrb[0].mxu0 %v442
    %v609 = vpop.f32.mrb[0].mxu0
    %v610 = vadd.f32 %v429, %v609
    %v611 = vpop.f32.mrb[0].mxu0
    %612 = vmatprep.mubr.f32.mxu0 0.0
    %613 = vmatmul.mubr.f32.gmra.mrb[0].mxu0 %v445
    %v614 = vpop.f32.mrb[0].mxu0
    %v615 = vadd.f32 %v429, %v614
    %v616 = vpop.f32.mrb[0].mxu0
    %617 = vmatprep.mubr.f32.mxu0 0.0
    %618 = vmatmul.mubr.f32.gmra.mrb[0].mxu0 %v448
    %v619 = vpop.f32.mrb[0].mxu0
    %v620 = vadd.f32 %v429, %v619
    %v621 = vpop.f32.mrb[0].mxu0
    %622 = vmatprep.mubr.f32.mxu0 0.0
    %623 = vmatmul.mubr.f32.gmra.mrb[0].mxu0 %v451
    %v624 = vpop.f32.mrb[0].mxu0
    %v625 = vadd.f32 %v429, %v624
    %v626 = vpop.f32.mrb[0].mxu0
    %627 = vmatprep.mubr.f32.mxu0 0.0
    %628 = vmatmul.mubr.f32.gmra.mrb[0].mxu0 %v454
    %v629 = vpop.f32.mrb[0].mxu0
    %v630 = vadd.f32 %v429, %v629
    %v631 = vpop.f32.mrb[0].mxu0
    %632 = vmatprep.mubr.f32.mxu0 0.0
    %633 = vmatmul.mubr.f32.gmra.mrb[0].mxu0 %v457
    %v634 = vpop.f32.mrb[0].mxu0
    %v635 = vadd.f32 %v429, %v634
    %v636 = vpop.f32.mrb[0].mxu0
    %637 = vmatprep.mubr.f32.mxu0 0.0
    %638 = vmatmul.mubr.f32.gmra.mrb[0].mxu0 %v460
    %v639 = vpop.f32.mrb[0].mxu0
    %v640 = vadd.f32 %v429, %v639
    %v641 = vpop.f32.mrb[0].mxu0
    %642 = vmatprep.mubr.f32.mxu0 0.0
    %643 = vmatmul.mubr.f32.gmra.mrb[0].mxu0 %v463
    %v644 = vpop.f32.mrb[0].mxu0
    %v645 = vadd.f32 %v429, %v644
    %v646 = vpop.f32.mrb[0].mxu0
    %647 = vmatprep.mubr.f32.mxu0 0.0
    %648 = vmatmul.mubr.f32.gmra.mrb[0].mxu0 %v466
    %v649 = vpop.f32.mrb[0].mxu0
    %v650 = vadd.f32 %v429, %v649
    %v651 = vpop.f32.mrb[0].mxu0
    %652 = vmatprep.mubr.f32.mxu0 0.0
    %653 = vmatmul.mubr.f32.gmra.mrb[0].mxu0 %v469
    %v654 = vpop.f32.mrb[0].mxu0
    %v655 = vadd.f32 %v429, %v654
    %v656 = vpop.f32.mrb[0].mxu0
    %657 = vmatprep.mubr.f32.mxu0 0.0
    %658 = vmatmul.mubr.f32.gmra.mrb[0].mxu0 %v472
    %v659 = vpop.f32.mrb[0].mxu0
    %v660 = vadd.f32 %v429, %v659
    %v661 = vpop.f32.mrb[0].mxu0
    %662 = vmatprep.mubr.f32.mxu0 0.0
    %663 = vmatmul.mubr.f32.gmra.mrb[0].mxu0 %v475
    %v664 = vpop.f32.mrb[0].mxu0
    %v665 = vadd.f32 %v429, %v664
    %v666 = vpop.f32.mrb[0].mxu0
    %667 = vmatprep.mubr.f32.mxu0 0.0
    %668 = vmatmul.mubr.f32.gmra.mrb[0].mxu0 %v478
    %v669 = vpop.f32.mrb[0].mxu0
    %v670 = vadd.f32 %v429, %v669
    %v671 = vpop.f32.mrb[0].mxu0
    %672 = vmatprep.mubr.f32.mxu0 0.0
    %673 = vmatmul.mubr.f32.gmra.mrb[0].mxu0 %v481
    %v674 = vpop.f32.mrb[0].mxu0
    %v675 = vadd.f32 %v429, %v674
    %v676 = vpop.f32.mrb[0].mxu0
    %677 = vmatprep.mubr.f32.mxu0 0.0
    %678 = vmatmul.mubr.f32.gmra.mrb[0].mxu0 %v484
    %v679 = vpop.f32.mrb[0].mxu0
    %v680 = vadd.f32 %v429, %v679
    %v681 = vpop.f32.mrb[0].mxu0
    %682 = vmatprep.mubr.f32.mxu0 0.0
    %683 = vmatmul.mubr.f32.gmra.mrb[0].mxu0 %v487
    %v684 = vpop.f32.mrb[0].mxu0
    %v685 = vadd.f32 %v429, %v684
    %v686 = vpop.f32.mrb[0].mxu0
    %687 = vmatprep.mubr.f32.mxu0 0.0
    %688 = vmatmul.mubr.f32.gmra.mrb[0].mxu0 %v490
    %v689 = vpop.f32.mrb[0].mxu0
    %v690 = vadd.f32 %v429, %v689
    %v691 = vpop.f32.mrb[0].mxu0
    %692 = vmatprep.mubr.f32.mxu0 0.0
    %693 = vmatmul.mubr.f32.gmra.mrb[0].mxu0 %v493
    %v694 = vpop.f32.mrb[0].mxu0
    %v695 = vadd.f32 %v429, %v694
    %v696 = vpop.f32.mrb[0].mxu0
    %697 = vmatprep.mubr.f32.mxu0 0.0
    %698 = vmatmul.mubr.f32.gmra.mrb[0].mxu0 %v496
    %v699 = vpop.f32.mrb[0].mxu0
    %v700 = vadd.f32 %v429, %v699
    %v701 = vpop.f32.mrb[0].mxu0
    %702 = vmatprep.mubr.f32.mxu0 0.0
    %703 = vmatmul.mubr.f32.gmra.mrb[0].mxu0 %v499
    %v704 = vpop.f32.mrb[0].mxu0
    %v705 = vadd.f32 %v429, %v704
    %v706 = vpop.f32.mrb[0].mxu0
    %707 = vmatprep.mubr.f32.mxu0 0.0
    %708 = vmatmul.mubr.f32.gmra.mrb[0].mxu0 %v502
    %v709 = vpop.f32.mrb[0].mxu0
    %v710 = vadd.f32 %v429, %v709
    %v711 = vpop.f32.mrb[0].mxu0
    %712 = vmatprep.mubr.f32.mxu0 0.0
    %713 = vmatmul.mubr.f32.gmra.mrb[0].mxu0 %v505
    %v714 = vpop.f32.mrb[0].mxu0
    %v715 = vadd.f32 %v429, %v714
    %v716 = vpop.f32.mrb[0].mxu0
    %717 = vmatprep.mubr.f32.mxu0 0.0
    %718 = vmatmul.mubr.f32.gmra.mrb[0].mxu0 %v508
    %v719 = vpop.f32.mrb[0].mxu0
    %v720 = vadd.f32 %v429, %v719
    %v721 = vpop.f32.mrb[0].mxu0
    %722 = vmatprep.mubr.f32.mxu0 0.0
    %723 = vmatmul.mubr.f32.gmra.mrb[0].mxu0 %v511
    %v724 = vpop.f32.mrb[0].mxu0
    %v725 = vadd.f32 %v429, %v724
    %v726 = vpop.f32.mrb[0].mxu0
    %727 = vmatprep.mubr.f32.mxu0 0.0
    %728 = vmatmul.mubr.f32.gmra.mrb[0].mxu0 %v514
    %v729 = vpop.f32.mrb[0].mxu0
    %v730 = vadd.f32 %v429, %v729
    %v731 = vpop.f32.mrb[0].mxu0
    %732 = vmatprep.mubr.f32.mxu0 0.0
    %733 = vmatmul.mubr.f32.gmra.mrb[0].mxu0 %v517
    %v734 = vpop.f32.mrb[0].mxu0
    %v735 = vadd.f32 %v429, %v734
    %v736 = vpop.f32.mrb[0].mxu0
    %737 = vmatprep.mubr.f32.mxu0 0.0
    %738 = vmatmul.mubr.f32.gmra.mrb[0].mxu0 %v520
    %v739 = vpop.f32.mrb[0].mxu0
    %v740 = vadd.f32 %v429, %v739
    %v741 = vpop.f32.mrb[0].mxu0
    %742 = vmatprep.mubr.f32.mxu0 0.0
    %743 = vmatmul.mubr.f32.gmra.mrb[0].mxu0 %v523
    %v744 = vpop.f32.mrb[0].mxu0
    %v745 = vadd.f32 %v429, %v744
    %v746 = vpop.f32.mrb[0].mxu0
    %747 = vmatprep.mubr.f32.mxu0 0.0
    %748 = vmatmul.mubr.f32.gmra.mrb[0].mxu0 %v526
    %v749 = vpop.f32.mrb[0].mxu0
    %v750 = vadd.f32 %v429, %v749
    %v751 = vpop.f32.mrb[0].mxu0
    %752 = vdwg.mxu0
    %v753 = vadd.f32 %v258, %v595
    %v754 = vadd.f32 %v263, %v600
    %v755 = vadd.f32 %v268, %v605
    %v756 = vadd.f32 %v273, %v610
    %v757 = vadd.f32 %v278, %v615
    %v758 = vadd.f32 %v283, %v620
    %v759 = vadd.f32 %v288, %v625
    %v760 = vadd.f32 %v293, %v630
    %v761 = vadd.f32 %v298, %v635
    %v762 = vadd.f32 %v303, %v640
    %v763 = vadd.f32 %v308, %v645
    %v764 = vadd.f32 %v313, %v650
    %v765 = vadd.f32 %v318, %v655
    %v766 = vadd.f32 %v323, %v660
    %v767 = vadd.f32 %v328, %v665
    %v768 = vadd.f32 %v333, %v670
    %v769 = vadd.f32 %v338, %v675
    %v770 = vadd.f32 %v343, %v680
    %v771 = vadd.f32 %v348, %v685
    %v772 = vadd.f32 %v353, %v690
    %v773 = vadd.f32 %v358, %v695
    %v774 = vadd.f32 %v363, %v700
    %v775 = vadd.f32 %v368, %v705
    %v776 = vadd.f32 %v373, %v710
    %v777 = vadd.f32 %v378, %v715
    %v778 = vadd.f32 %v383, %v720
    %v779 = vadd.f32 %v388, %v725
    %v780 = vadd.f32 %v393, %v730
    %v781 = vadd.f32 %v398, %v735
    %v782 = vadd.f32 %v403, %v740
    %v783 = vadd.f32 %v408, %v745
    %v784 = vadd.f32 %v413, %v750
    %v785 = vld [vmem:[%s5] sm:$0x1]
    %v786 = vld [vmem:[%s6] sm:$0x1]
    %v787 = vsel %vm431, %v753, 0.0
    %788 = vadd.xlane.f32.xlu0 %v787
    %v789 = vpop.xlane.xlu0 %788
    %v790 = vsel %vm431, %v754, 0.0
    %791 = vadd.xlane.f32.xlu0 %v790
    %v792 = vpop.xlane.xlu0 %791
    %v793 = vsel %vm431, %v755, 0.0
    %794 = vadd.xlane.f32.xlu0 %v793
    %v795 = vpop.xlane.xlu0 %794
    %v796 = vsel %vm431, %v756, 0.0
    %797 = vadd.xlane.f32.xlu0 %v796
    %v798 = vpop.xlane.xlu0 %797
    %v799 = vsel %vm431, %v757, 0.0
    %800 = vadd.xlane.f32.xlu0 %v799
    %v801 = vpop.xlane.xlu0 %800
    %v802 = vsel %vm431, %v758, 0.0
    %803 = vadd.xlane.f32.xlu0 %v802
    %v804 = vpop.xlane.xlu0 %803
    %v805 = vsel %vm431, %v759, 0.0
    %806 = vadd.xlane.f32.xlu0 %v805
    %v807 = vpop.xlane.xlu0 %806
    %v808 = vsel %vm431, %v760, 0.0
    %809 = vadd.xlane.f32.xlu0 %v808
    %v810 = vpop.xlane.xlu0 %809
    %v811 = vsel %vm431, %v761, 0.0
    %812 = vadd.xlane.f32.xlu0 %v811
    %v813 = vpop.xlane.xlu0 %812
    %v814 = vsel %vm431, %v762, 0.0
    %815 = vadd.xlane.f32.xlu0 %v814
    %v816 = vpop.xlane.xlu0 %815
    %v817 = vsel %vm431, %v763, 0.0
    %818 = vadd.xlane.f32.xlu0 %v817
    %v819 = vpop.xlane.xlu0 %818
    %v820 = vsel %vm431, %v764, 0.0
    %821 = vadd.xlane.f32.xlu0 %v820
    %v822 = vpop.xlane.xlu0 %821
    %v823 = vsel %vm431, %v765, 0.0
    %824 = vadd.xlane.f32.xlu0 %v823
    %v825 = vpop.xlane.xlu0 %824
    %v826 = vsel %vm431, %v766, 0.0
    %827 = vadd.xlane.f32.xlu0 %v826
    %v828 = vpop.xlane.xlu0 %827
    %v829 = vsel %vm431, %v767, 0.0
    %830 = vadd.xlane.f32.xlu0 %v829
    %v831 = vpop.xlane.xlu0 %830
    %v832 = vsel %vm431, %v768, 0.0
    %833 = vadd.xlane.f32.xlu0 %v832
    %v834 = vpop.xlane.xlu0 %833
    %v835 = vsel %vm431, %v769, 0.0
    %836 = vadd.xlane.f32.xlu0 %v835
    %v837 = vpop.xlane.xlu0 %836
    %v838 = vsel %vm431, %v770, 0.0
    %839 = vadd.xlane.f32.xlu0 %v838
    %v840 = vpop.xlane.xlu0 %839
    %v841 = vsel %vm431, %v771, 0.0
    %842 = vadd.xlane.f32.xlu0 %v841
    %v843 = vpop.xlane.xlu0 %842
    %v844 = vsel %vm431, %v772, 0.0
    %845 = vadd.xlane.f32.xlu0 %v844
    %v846 = vpop.xlane.xlu0 %845
    %v847 = vsel %vm431, %v773, 0.0
    %848 = vadd.xlane.f32.xlu0 %v847
    %v849 = vpop.xlane.xlu0 %848
    %v850 = vsel %vm431, %v774, 0.0
    %851 = vadd.xlane.f32.xlu0 %v850
    %v852 = vpop.xlane.xlu0 %851
    %v853 = vsel %vm431, %v775, 0.0
    %854 = vadd.xlane.f32.xlu0 %v853
    %v855 = vpop.xlane.xlu0 %854
    %v856 = vsel %vm431, %v776, 0.0
    %857 = vadd.xlane.f32.xlu0 %v856
    %v858 = vpop.xlane.xlu0 %857
    %v859 = vsel %vm431, %v777, 0.0
    %860 = vadd.xlane.f32.xlu0 %v859
    %v861 = vpop.xlane.xlu0 %860
    %v862 = vsel %vm431, %v778, 0.0
    %863 = vadd.xlane.f32.xlu0 %v862
    %v864 = vpop.xlane.xlu0 %863
    %v865 = vsel %vm431, %v779, 0.0
    %866 = vadd.xlane.f32.xlu0 %v865
    %v867 = vpop.xlane.xlu0 %866
    %v868 = vsel %vm431, %v780, 0.0
    %869 = vadd.xlane.f32.xlu0 %v868
    %v870 = vpop.xlane.xlu0 %869
    %v871 = vsel %vm431, %v781, 0.0
    %872 = vadd.xlane.f32.xlu0 %v871
    %v873 = vpop.xlane.xlu0 %872
    %v874 = vsel %vm431, %v782, 0.0
    %875 = vadd.xlane.f32.xlu0 %v874
    %v876 = vpop.xlane.xlu0 %875
    %v877 = vsel %vm431, %v783, 0.0
    %878 = vadd.xlane.f32.xlu0 %v877
    %v879 = vpop.xlane.xlu0 %878
    %v880 = vsel %vm431, %v784, 0.0
    %881 = vadd.xlane.f32.xlu0 %v880
    %v882 = vpop.xlane.xlu0 %881
    %v883 = vrcp.pop 64.0
    %v884 = vmul.f32 %v789, %v883
    %v885 = vmul.f32 %v792, %v883
    %v886 = vmul.f32 %v795, %v883
    %v887 = vmul.f32 %v798, %v883
    %v888 = vmul.f32 %v801, %v883
    %v889 = vmul.f32 %v804, %v883
    %v890 = vmul.f32 %v807, %v883
    %v891 = vmul.f32 %v810, %v883
    %v892 = vmul.f32 %v813, %v883
    %v893 = vmul.f32 %v816, %v883
    %v894 = vmul.f32 %v819, %v883
    %v895 = vmul.f32 %v822, %v883
    %v896 = vmul.f32 %v825, %v883
    %v897 = vmul.f32 %v828, %v883
    %v898 = vmul.f32 %v831, %v883
    %v899 = vmul.f32 %v834, %v883
    %v900 = vmul.f32 %v837, %v883
    %v901 = vmul.f32 %v840, %v883
    %v902 = vmul.f32 %v843, %v883
    %v903 = vmul.f32 %v846, %v883
    %v904 = vmul.f32 %v849, %v883
    %v905 = vmul.f32 %v852, %v883
    %v906 = vmul.f32 %v855, %v883
    %v907 = vmul.f32 %v858, %v883
    %v908 = vmul.f32 %v861, %v883
    %v909 = vmul.f32 %v864, %v883
    %v910 = vmul.f32 %v867, %v883
    %v911 = vmul.f32 %v870, %v883
    %v912 = vmul.f32 %v873, %v883
    %v913 = vmul.f32 %v876, %v883
    %v914 = vmul.f32 %v879, %v883
    %v915 = vmul.f32 %v882, %v883
    %v916 = vsub.f32 %v753, %v884
    %v917 = vsub.f32 %v754, %v885
    %v918 = vsub.f32 %v755, %v886
    %v919 = vsub.f32 %v756, %v887
    %v920 = vsub.f32 %v757, %v888
    %v921 = vsub.f32 %v758, %v889
    %v922 = vsub.f32 %v759, %v890
    %v923 = vsub.f32 %v760, %v891
    %v924 = vsub.f32 %v761, %v892
    %v925 = vsub.f32 %v762, %v893
    %v926 = vsub.f32 %v763, %v894
    %v927 = vsub.f32 %v764, %v895
    %v928 = vsub.f32 %v765, %v896
    %v929 = vsub.f32 %v766, %v897
    %v930 = vsub.f32 %v767, %v898
    %v931 = vsub.f32 %v768, %v899
    %v932 = vsub.f32 %v769, %v900
    %v933 = vsub.f32 %v770, %v901
    %v934 = vsub.f32 %v771, %v902
    %v935 = vsub.f32 %v772, %v903
    %v936 = vsub.f32 %v773, %v904
    %v937 = vsub.f32 %v774, %v905
    %v938 = vsub.f32 %v775, %v906
    %v939 = vsub.f32 %v776, %v907
    %v940 = vsub.f32 %v777, %v908
    %v941 = vsub.f32 %v778, %v909
    %v942 = vsub.f32 %v779, %v910
    %v943 = vsub.f32 %v780, %v911
    %v944 = vsub.f32 %v781, %v912
    %v945 = vsub.f32 %v782, %v913
    %v946 = vsub.f32 %v783, %v914
    %v947 = vsub.f32 %v784, %v915
    %v948 = vmul.f32 %v916, %v916
    %v949 = vmul.f32 %v917, %v917
    %v950 = vmul.f32 %v918, %v918
    %v951 = vmul.f32 %v919, %v919
    %v952 = vmul.f32 %v920, %v920
    %v953 = vmul.f32 %v921, %v921
    %v954 = vmul.f32 %v922, %v922
    %v955 = vmul.f32 %v923, %v923
    %v956 = vmul.f32 %v924, %v924
    %v957 = vmul.f32 %v925, %v925
    %v958 = vmul.f32 %v926, %v926
    %v959 = vmul.f32 %v927, %v927
    %v960 = vmul.f32 %v928, %v928
    %v961 = vmul.f32 %v929, %v929
    %v962 = vmul.f32 %v930, %v930
    %v963 = vmul.f32 %v931, %v931
    %v964 = vmul.f32 %v932, %v932
    %v965 = vmul.f32 %v933, %v933
    %v966 = vmul.f32 %v934, %v934
    %v967 = vmul.f32 %v935, %v935
    %v968 = vmul.f32 %v936, %v936
    %v969 = vmul.f32 %v937, %v937
    %v970 = vmul.f32 %v938, %v938
    %v971 = vmul.f32 %v939, %v939
    %v972 = vmul.f32 %v940, %v940
    %v973 = vmul.f32 %v941, %v941
    %v974 = vmul.f32 %v942, %v942
    %v975 = vmul.f32 %v943, %v943
    %v976 = vmul.f32 %v944, %v944
    %v977 = vmul.f32 %v945, %v945
    %v978 = vmul.f32 %v946, %v946
    %v979 = vmul.f32 %v947, %v947
    %v980 = vsel %vm431, %v948, 0.0
    %981 = vadd.xlane.f32.xlu0 %v980
    %v982 = vpop.xlane.xlu0 %981
    %v983 = vsel %vm431, %v949, 0.0
    %984 = vadd.xlane.f32.xlu0 %v983
    %v985 = vpop.xlane.xlu0 %984
    %v986 = vsel %vm431, %v950, 0.0
    %987 = vadd.xlane.f32.xlu0 %v986
    %v988 = vpop.xlane.xlu0 %987
    %v989 = vsel %vm431, %v951, 0.0
    %990 = vadd.xlane.f32.xlu0 %v989
    %v991 = vpop.xlane.xlu0 %990
    %v992 = vsel %vm431, %v952, 0.0
    %993 = vadd.xlane.f32.xlu0 %v992
    %v994 = vpop.xlane.xlu0 %993
    %v995 = vsel %vm431, %v953, 0.0
    %996 = vadd.xlane.f32.xlu0 %v995
    %v997 = vpop.xlane.xlu0 %996
    %v998 = vsel %vm431, %v954, 0.0
    %999 = vadd.xlane.f32.xlu0 %v998
    %v1000 = vpop.xlane.xlu0 %999
    %v1001 = vsel %vm431, %v955, 0.0
    %1002 = vadd.xlane.f32.xlu0 %v1001
    %v1003 = vpop.xlane.xlu0 %1002
    %v1004 = vsel %vm431, %v956, 0.0
    %1005 = vadd.xlane.f32.xlu0 %v1004
    %v1006 = vpop.xlane.xlu0 %1005
    %v1007 = vsel %vm431, %v957, 0.0
    %1008 = vadd.xlane.f32.xlu0 %v1007
    %v1009 = vpop.xlane.xlu0 %1008
    %v1010 = vsel %vm431, %v958, 0.0
    %1011 = vadd.xlane.f32.xlu0 %v1010
    %v1012 = vpop.xlane.xlu0 %1011
    %v1013 = vsel %vm431, %v959, 0.0
    %1014 = vadd.xlane.f32.xlu0 %v1013
    %v1015 = vpop.xlane.xlu0 %1014
    %v1016 = vsel %vm431, %v960, 0.0
    %1017 = vadd.xlane.f32.xlu0 %v1016
    %v1018 = vpop.xlane.xlu0 %1017
    %v1019 = vsel %vm431, %v961, 0.0
    %1020 = vadd.xlane.f32.xlu0 %v1019
    %v1021 = vpop.xlane.xlu0 %1020
    %v1022 = vsel %vm431, %v962, 0.0
    %1023 = vadd.xlane.f32.xlu0 %v1022
    %v1024 = vpop.xlane.xlu0 %1023
    %v1025 = vsel %vm431, %v963, 0.0
    %1026 = vadd.xlane.f32.xlu0 %v1025
    %v1027 = vpop.xlane.xlu0 %1026
    %v1028 = vsel %vm431, %v964, 0.0
    %1029 = vadd.xlane.f32.xlu0 %v1028
    %v1030 = vpop.xlane.xlu0 %1029
    %v1031 = vsel %vm431, %v965, 0.0
    %1032 = vadd.xlane.f32.xlu0 %v1031
    %v1033 = vpop.xlane.xlu0 %1032
    %v1034 = vsel %vm431, %v966, 0.0
    %1035 = vadd.xlane.f32.xlu0 %v1034
    %v1036 = vpop.xlane.xlu0 %1035
    %v1037 = vsel %vm431, %v967, 0.0
    %1038 = vadd.xlane.f32.xlu0 %v1037
    %v1039 = vpop.xlane.xlu0 %1038
    %v1040 = vsel %vm431, %v968, 0.0
    %1041 = vadd.xlane.f32.xlu0 %v1040
    %v1042 = vpop.xlane.xlu0 %1041
    %v1043 = vsel %vm431, %v969, 0.0
    %1044 = vadd.xlane.f32.xlu0 %v1043
    %v1045 = vpop.xlane.xlu0 %1044
    %v1046 = vsel %vm431, %v970, 0.0
    %1047 = vadd.xlane.f32.xlu0 %v1046
    %v1048 = vpop.xlane.xlu0 %1047
    %v1049 = vsel %vm431, %v971, 0.0
    %1050 = vadd.xlane.f32.xlu0 %v1049
    %v1051 = vpop.xlane.xlu0 %1050
    %v1052 = vsel %vm431, %v972, 0.0
    %1053 = vadd.xlane.f32.xlu0 %v1052
    %v1054 = vpop.xlane.xlu0 %1053
    %v1055 = vsel %vm431, %v973, 0.0
    %1056 = vadd.xlane.f32.xlu0 %v1055
    %v1057 = vpop.xlane.xlu0 %1056
    %v1058 = vsel %vm431, %v974, 0.0
    %1059 = vadd.xlane.f32.xlu0 %v1058
    %v1060 = vpop.xlane.xlu0 %1059
    %v1061 = vsel %vm431, %v975, 0.0
    %1062 = vadd.xlane.f32.xlu0 %v1061
    %v1063 = vpop.xlane.xlu0 %1062
    %v1064 = vsel %vm431, %v976, 0.0
    %1065 = vadd.xlane.f32.xlu0 %v1064
    %v1066 = vpop.xlane.xlu0 %1065
    %v1067 = vsel %vm431, %v977, 0.0
    %1068 = vadd.xlane.f32.xlu0 %v1067
    %v1069 = vpop.xlane.xlu0 %1068
    %v1070 = vsel %vm431, %v978, 0.0
    %1071 = vadd.xlane.f32.xlu0 %v1070
    %v1072 = vpop.xlane.xlu0 %1071
    %v1073 = vsel %vm431, %v979, 0.0
    %1074 = vadd.xlane.f32.xlu0 %v1073
    %v1075 = vpop.xlane.xlu0 %1074
    %v1076 = vmul.f32 %v982, %v883
    %v1077 = vmul.f32 %v985, %v883
    %v1078 = vmul.f32 %v988, %v883
    %v1079 = vmul.f32 %v991, %v883
    %v1080 = vmul.f32 %v994, %v883
    %v1081 = vmul.f32 %v997, %v883
    %v1082 = vmul.f32 %v1000, %v883
    %v1083 = vmul.f32 %v1003, %v883
    %v1084 = vmul.f32 %v1006, %v883
    %v1085 = vmul.f32 %v1009, %v883
    %v1086 = vmul.f32 %v1012, %v883
    %v1087 = vmul.f32 %v1015, %v883
    %v1088 = vmul.f32 %v1018, %v883
    %v1089 = vmul.f32 %v1021, %v883
    %v1090 = vmul.f32 %v1024, %v883
    %v1091 = vmul.f32 %v1027, %v883
    %v1092 = vmul.f32 %v1030, %v883
    %v1093 = vmul.f32 %v1033, %v883
    %v1094 = vmul.f32 %v1036, %v883
    %v1095 = vmul.f32 %v1039, %v883
    %v1096 = vmul.f32 %v1042, %v883
    %v1097 = vmul.f32 %v1045, %v883
    %v1098 = vmul.f32 %v1048, %v883
    %v1099 = vmul.f32 %v1051, %v883
    %v1100 = vmul.f32 %v1054, %v883
    %v1101 = vmul.f32 %v1057, %v883
    %v1102 = vmul.f32 %v1060, %v883
    %v1103 = vmul.f32 %v1063, %v883
    %v1104 = vmul.f32 %v1066, %v883
    %v1105 = vmul.f32 %v1069, %v883
    %v1106 = vmul.f32 %v1072, %v883
    %v1107 = vmul.f32 %v1075, %v883
    %v1108 = vadd.f32 %v1076, 1e-05
    %v1109 = vadd.f32 %v1077, 1e-05
    %v1110 = vadd.f32 %v1078, 1e-05
    %v1111 = vadd.f32 %v1079, 1e-05
    %v1112 = vadd.f32 %v1080, 1e-05
    %v1113 = vadd.f32 %v1081, 1e-05
    %v1114 = vadd.f32 %v1082, 1e-05
    %v1115 = vadd.f32 %v1083, 1e-05
    %v1116 = vadd.f32 %v1084, 1e-05
    %v1117 = vadd.f32 %v1085, 1e-05
    %v1118 = vadd.f32 %v1086, 1e-05
    %v1119 = vadd.f32 %v1087, 1e-05
    %v1120 = vadd.f32 %v1088, 1e-05
    %v1121 = vadd.f32 %v1089, 1e-05
    %v1122 = vadd.f32 %v1090, 1e-05
    %v1123 = vadd.f32 %v1091, 1e-05
    %v1124 = vadd.f32 %v1092, 1e-05
    %v1125 = vadd.f32 %v1093, 1e-05
    %v1126 = vadd.f32 %v1094, 1e-05
    %v1127 = vadd.f32 %v1095, 1e-05
    %v1128 = vadd.f32 %v1096, 1e-05
    %v1129 = vadd.f32 %v1097, 1e-05
    %v1130 = vadd.f32 %v1098, 1e-05
    %v1131 = vadd.f32 %v1099, 1e-05
    %v1132 = vadd.f32 %v1100, 1e-05
    %v1133 = vadd.f32 %v1101, 1e-05
    %v1134 = vadd.f32 %v1102, 1e-05
    %v1135 = vadd.f32 %v1103, 1e-05
    %v1136 = vadd.f32 %v1104, 1e-05
    %v1137 = vadd.f32 %v1105, 1e-05
    %v1138 = vadd.f32 %v1106, 1e-05
    %v1139 = vadd.f32 %v1107, 1e-05
    %v1140 = vrsqrt.pop %v1108
    %v1141 = vrsqrt.pop %v1109
    %v1142 = vrsqrt.pop %v1110
    %v1143 = vrsqrt.pop %v1111
    %v1144 = vrsqrt.pop %v1112
    %v1145 = vrsqrt.pop %v1113
    %v1146 = vrsqrt.pop %v1114
    %v1147 = vrsqrt.pop %v1115
    %v1148 = vrsqrt.pop %v1116
    %v1149 = vrsqrt.pop %v1117
    %v1150 = vrsqrt.pop %v1118
    %v1151 = vrsqrt.pop %v1119
    %v1152 = vrsqrt.pop %v1120
    %v1153 = vrsqrt.pop %v1121
    %v1154 = vrsqrt.pop %v1122
    %v1155 = vrsqrt.pop %v1123
    %v1156 = vrsqrt.pop %v1124
    %v1157 = vrsqrt.pop %v1125
    %v1158 = vrsqrt.pop %v1126
    %v1159 = vrsqrt.pop %v1127
    %v1160 = vrsqrt.pop %v1128
    %v1161 = vrsqrt.pop %v1129
    %v1162 = vrsqrt.pop %v1130
    %v1163 = vrsqrt.pop %v1131
    %v1164 = vrsqrt.pop %v1132
    %v1165 = vrsqrt.pop %v1133
    %v1166 = vrsqrt.pop %v1134
    %v1167 = vrsqrt.pop %v1135
    %v1168 = vrsqrt.pop %v1136
    %v1169 = vrsqrt.pop %v1137
    %v1170 = vrsqrt.pop %v1138
    %v1171 = vrsqrt.pop %v1139
    %v1172 = vmul.f32 %v916, %v1140
    %v1173 = vmul.f32 %v917, %v1141
    %v1174 = vmul.f32 %v918, %v1142
    %v1175 = vmul.f32 %v919, %v1143
    %v1176 = vmul.f32 %v920, %v1144
    %v1177 = vmul.f32 %v921, %v1145
    %v1178 = vmul.f32 %v922, %v1146
    %v1179 = vmul.f32 %v923, %v1147
    %v1180 = vmul.f32 %v924, %v1148
    %v1181 = vmul.f32 %v925, %v1149
    %v1182 = vmul.f32 %v926, %v1150
    %v1183 = vmul.f32 %v927, %v1151
    %v1184 = vmul.f32 %v928, %v1152
    %v1185 = vmul.f32 %v929, %v1153
    %v1186 = vmul.f32 %v930, %v1154
    %v1187 = vmul.f32 %v931, %v1155
    %v1188 = vmul.f32 %v932, %v1156
    %v1189 = vmul.f32 %v933, %v1157
    %v1190 = vmul.f32 %v934, %v1158
    %v1191 = vmul.f32 %v935, %v1159
    %v1192 = vmul.f32 %v936, %v1160
    %v1193 = vmul.f32 %v937, %v1161
    %v1194 = vmul.f32 %v938, %v1162
    %v1195 = vmul.f32 %v939, %v1163
    %v1196 = vmul.f32 %v940, %v1164
    %v1197 = vmul.f32 %v941, %v1165
    %v1198 = vmul.f32 %v942, %v1166
    %v1199 = vmul.f32 %v943, %v1167
    %v1200 = vmul.f32 %v944, %v1168
    %v1201 = vmul.f32 %v945, %v1169
    %v1202 = vmul.f32 %v946, %v1170
    %v1203 = vmul.f32 %v947, %v1171
    %v1205 = vlaneseq
    %v1206 = vshrl.u32 %v1205, 7
    %v1207 = vsub.s32 0, %v1206
    %v1208 = vrot.slane %v785, %v1207
    %v1210 = vmul.f32 %v1172, %v1208
    %v1211 = vmul.f32 %v1173, %v1208
    %v1212 = vmul.f32 %v1174, %v1208
    %v1213 = vmul.f32 %v1175, %v1208
    %v1214 = vmul.f32 %v1176, %v1208
    %v1215 = vmul.f32 %v1177, %v1208
    %v1216 = vmul.f32 %v1178, %v1208
    %v1217 = vmul.f32 %v1179, %v1208
    %v1218 = vmul.f32 %v1180, %v1208
    %v1219 = vmul.f32 %v1181, %v1208
    %v1220 = vmul.f32 %v1182, %v1208
    %v1221 = vmul.f32 %v1183, %v1208
    %v1222 = vmul.f32 %v1184, %v1208
    %v1223 = vmul.f32 %v1185, %v1208
    %v1224 = vmul.f32 %v1186, %v1208
    %v1225 = vmul.f32 %v1187, %v1208
    %v1226 = vmul.f32 %v1188, %v1208
    %v1227 = vmul.f32 %v1189, %v1208
    %v1228 = vmul.f32 %v1190, %v1208
    %v1229 = vmul.f32 %v1191, %v1208
    %v1230 = vmul.f32 %v1192, %v1208
    %v1231 = vmul.f32 %v1193, %v1208
    %v1232 = vmul.f32 %v1194, %v1208
    %v1233 = vmul.f32 %v1195, %v1208
    %v1234 = vmul.f32 %v1196, %v1208
    %v1235 = vmul.f32 %v1197, %v1208
    %v1236 = vmul.f32 %v1198, %v1208
    %v1237 = vmul.f32 %v1199, %v1208
    %v1238 = vmul.f32 %v1200, %v1208
    %v1239 = vmul.f32 %v1201, %v1208
    %v1240 = vmul.f32 %v1202, %v1208
    %v1241 = vmul.f32 %v1203, %v1208
    %v1243 = vlaneseq
    %v1244 = vshrl.u32 %v1243, 7
    %v1245 = vsub.s32 0, %v1244
    %v1246 = vrot.slane %v786, %v1245
    %v1248 = vadd.f32 %v1210, %v1246
    %v1249 = vadd.f32 %v1211, %v1246
    %v1250 = vadd.f32 %v1212, %v1246
    %v1251 = vadd.f32 %v1213, %v1246
    %v1252 = vadd.f32 %v1214, %v1246
    %v1253 = vadd.f32 %v1215, %v1246
    %v1254 = vadd.f32 %v1216, %v1246
    %v1255 = vadd.f32 %v1217, %v1246
    %v1256 = vadd.f32 %v1218, %v1246
    %v1257 = vadd.f32 %v1219, %v1246
    %v1258 = vadd.f32 %v1220, %v1246
    %v1259 = vadd.f32 %v1221, %v1246
    %v1260 = vadd.f32 %v1222, %v1246
    %v1261 = vadd.f32 %v1223, %v1246
    %v1262 = vadd.f32 %v1224, %v1246
    %v1263 = vadd.f32 %v1225, %v1246
    %v1264 = vadd.f32 %v1226, %v1246
    %v1265 = vadd.f32 %v1227, %v1246
    %v1266 = vadd.f32 %v1228, %v1246
    %v1267 = vadd.f32 %v1229, %v1246
    %v1268 = vadd.f32 %v1230, %v1246
    %v1269 = vadd.f32 %v1231, %v1246
    %v1270 = vadd.f32 %v1232, %v1246
    %v1271 = vadd.f32 %v1233, %v1246
    %v1272 = vadd.f32 %v1234, %v1246
    %v1273 = vadd.f32 %v1235, %v1246
    %v1274 = vadd.f32 %v1236, %v1246
    %v1275 = vadd.f32 %v1237, %v1246
    %v1276 = vadd.f32 %v1238, %v1246
    %v1277 = vadd.f32 %v1239, %v1246
    %v1278 = vadd.f32 %v1240, %v1246
    %v1279 = vadd.f32 %v1241, %v1246
    %v1280 = vld [vmem:[%s7] sm:$0xff]
    %v1281 = vld [vmem:[%s7 + $0x8] sm:$0xff]
    %v1282 = vld [vmem:[%s7 + $0x10] sm:$0xff]
    %v1283 = vld [vmem:[%s7 + $0x18] sm:$0xff]
    %v1284 = vld [vmem:[%s7 + $0x20] sm:$0xff]
    %v1285 = vld [vmem:[%s7 + $0x28] sm:$0xff]
    %v1286 = vld [vmem:[%s7 + $0x30] sm:$0xff]
    %v1287 = vld [vmem:[%s7 + $0x38] sm:$0xff]
    %v1288 = vld [vmem:[%s7 + $0x40] sm:$0xff]
    %v1289 = vld [vmem:[%s7 + $0x48] sm:$0xff]
    %v1290 = vld [vmem:[%s7 + $0x50] sm:$0xff]
    %v1291 = vld [vmem:[%s7 + $0x58] sm:$0xff]
    %v1292 = vld [vmem:[%s7 + $0x60] sm:$0xff]
    %v1293 = vld [vmem:[%s7 + $0x68] sm:$0xff]
    %v1294 = vld [vmem:[%s7 + $0x70] sm:$0xff]
    %v1295 = vld [vmem:[%s7 + $0x78] sm:$0xff]
    %v1296 = vld [vmem:[%s8] sm:$0x3]
    %v1298 = vlaneseq
    %v1299 = vshrl.u32 %v1298, 7
    %v1300 = vsub.s32 0, %v1299
    %v1301 = vrot.slane %v1296, %v1300
    %v1302 = vlaneseq
    %v1303 = vshrl.u32 %v1302, 7
    %v1304 = vsub.s32 1, %v1303
    %v1305 = vrot.slane %v1296, %v1304
    %v1309 = vsel %vm431, %v1248, 0
    %v1312 = vsel %vm431, %v1249, 0
    %v1315 = vsel %vm431, %v1250, 0
    %v1318 = vsel %vm431, %v1251, 0
    %v1321 = vsel %vm431, %v1252, 0
    %v1324 = vsel %vm431, %v1253, 0
    %v1327 = vsel %vm431, %v1254, 0
    %v1330 = vsel %vm431, %v1255, 0
    %v1333 = vsel %vm431, %v1256, 0
    %v1336 = vsel %vm431, %v1257, 0
    %v1339 = vsel %vm431, %v1258, 0
    %v1342 = vsel %vm431, %v1259, 0
    %v1345 = vsel %vm431, %v1260, 0
    %v1348 = vsel %vm431, %v1261, 0
    %v1351 = vsel %vm431, %v1262, 0
    %v1354 = vsel %vm431, %v1263, 0
    %v1357 = vsel %vm431, %v1264, 0
    %v1360 = vsel %vm431, %v1265, 0
    %v1363 = vsel %vm431, %v1266, 0
    %v1366 = vsel %vm431, %v1267, 0
    %v1369 = vsel %vm431, %v1268, 0
    %v1372 = vsel %vm431, %v1269, 0
    %v1375 = vsel %vm431, %v1270, 0
    %v1378 = vsel %vm431, %v1271, 0
    %v1381 = vsel %vm431, %v1272, 0
    %v1384 = vsel %vm431, %v1273, 0
    %v1387 = vsel %vm431, %v1274, 0
    %v1390 = vsel %vm431, %v1275, 0
    %v1393 = vsel %vm431, %v1276, 0
    %v1396 = vsel %vm431, %v1277, 0
    %v1399 = vsel %vm431, %v1278, 0
    %v1402 = vsel %vm431, %v1279, 0
    %1404 = vmatprep.subr.mxu0 %v1281
    %1405 = vmatpush1.msra.mxu0 %v1280
    %1406 = vmatprep.subr.mxu0 %v1283
    %1407 = vmatpush1.msra.mxu0 %v1282
    %1408 = vmatprep.subr.mxu0 %v1285
    %1409 = vmatpush1.msra.mxu0 %v1284
    %1410 = vmatprep.subr.mxu0 %v1287
    %1411 = vmatpush1.msra.mxu0 %v1286
    %1412 = vmatprep.subr.mxu0 %v1289
    %1413 = vmatpush1.msra.mxu0 %v1288
    %1414 = vmatprep.subr.mxu0 %v1291
    %1415 = vmatpush1.msra.mxu0 %v1290
    %1416 = vmatprep.subr.mxu0 %v1293
    %1417 = vmatpush1.msra.mxu0 %v1292
    %1418 = vmatprep.subr.mxu0 %v1295
    %1419 = vmatpush1.msra.mxu0 %v1294
    %1420 = vmatprep.subr.mxu0 0.0
    %1421 = vmatpush1.msra.mxu0 0.0
    %1422 = vmatprep.subr.mxu0 0.0
    %1423 = vmatpush1.msra.mxu0 0.0
    %1424 = vmatprep.subr.mxu0 0.0
    %1425 = vmatpush1.msra.mxu0 0.0
    %1426 = vmatprep.subr.mxu0 0.0
    %1427 = vmatpush1.msra.mxu0 0.0
    %1428 = vmatprep.subr.mxu0 0.0
    %1429 = vmatpush1.msra.mxu0 0.0
    %1430 = vmatprep.subr.mxu0 0.0
    %1431 = vmatpush1.msra.mxu0 0.0
    %1432 = vmatprep.subr.mxu0 0.0
    %1433 = vmatpush1.msra.mxu0 0.0
    %1434 = vmatprep.subr.mxu0 0.0
    %1435 = vmatpush1.msra.mxu0 0.0
    %1436 = vmatprep.subr.mxu0 0.0
    %1437 = vmatpush1.msra.mxu0 0.0
    %1438 = vmatprep.subr.mxu0 0.0
    %1439 = vmatpush1.msra.mxu0 0.0
    %1440 = vmatprep.subr.mxu0 0.0
    %1441 = vmatpush1.msra.mxu0 0.0
    %1442 = vmatprep.subr.mxu0 0.0
    %1443 = vmatpush1.msra.mxu0 0.0
    %1444 = vmatprep.subr.mxu0 0.0
    %1445 = vmatpush1.msra.mxu0 0.0
    %1446 = vmatprep.subr.mxu0 0.0
    %1447 = vmatpush1.msra.mxu0 0.0
    %1448 = vmatprep.subr.mxu0 0.0
    %1449 = vmatpush1.msra.mxu0 0.0
    %1450 = vmatprep.subr.mxu0 0.0
    %1451 = vmatpush1.msra.mxu0 0.0
    %1452 = vmatprep.subr.mxu0 0.0
    %1453 = vmatpush1.msra.mxu0 0.0
    %1454 = vmatprep.subr.mxu0 0.0
    %1455 = vmatpush1.msra.mxu0 0.0
    %1456 = vmatprep.subr.mxu0 0.0
    %1457 = vmatpush1.msra.mxu0 0.0
    %1458 = vmatprep.subr.mxu0 0.0
    %1459 = vmatpush1.msra.mxu0 0.0
    %1460 = vmatprep.subr.mxu0 0.0
    %1461 = vmatpush1.msra.mxu0 0.0
    %1462 = vmatprep.subr.mxu0 0.0
    %1463 = vmatpush1.msra.mxu0 0.0
    %1464 = vmatprep.subr.mxu0 0.0
    %1465 = vmatpush1.msra.mxu0 0.0
    %1466 = vmatprep.subr.mxu0 0.0
    %1467 = vmatpush1.msra.mxu0 0.0
    %1468 = vmatprep.mubr.f32.mxu0 0.0
    %1469 = vmatmul.mubr.f32.gmra.mrb[0].mxu0 %v1309
    %v1470 = vpop.f32.mrb[0].mxu0
    %v1471 = vadd.f32 %v1301, %v1470
    %v1472 = vpop.f32.mrb[0].mxu0
    %v1473 = vadd.f32 %v1305, %v1472
    %1474 = vmatprep.mubr.f32.mxu0 0.0
    %1475 = vmatmul.mubr.f32.gmra.mrb[0].mxu0 %v1312
    %v1476 = vpop.f32.mrb[0].mxu0
    %v1477 = vadd.f32 %v1301, %v1476
    %v1478 = vpop.f32.mrb[0].mxu0
    %v1479 = vadd.f32 %v1305, %v1478
    %1480 = vmatprep.mubr.f32.mxu0 0.0
    %1481 = vmatmul.mubr.f32.gmra.mrb[0].mxu0 %v1315
    %v1482 = vpop.f32.mrb[0].mxu0
    %v1483 = vadd.f32 %v1301, %v1482
    %v1484 = vpop.f32.mrb[0].mxu0
    %v1485 = vadd.f32 %v1305, %v1484
    %1486 = vmatprep.mubr.f32.mxu0 0.0
    %1487 = vmatmul.mubr.f32.gmra.mrb[0].mxu0 %v1318
    %v1488 = vpop.f32.mrb[0].mxu0
    %v1489 = vadd.f32 %v1301, %v1488
    %v1490 = vpop.f32.mrb[0].mxu0
    %v1491 = vadd.f32 %v1305, %v1490
    %1492 = vmatprep.mubr.f32.mxu0 0.0
    %1493 = vmatmul.mubr.f32.gmra.mrb[0].mxu0 %v1321
    %v1494 = vpop.f32.mrb[0].mxu0
    %v1495 = vadd.f32 %v1301, %v1494
    %v1496 = vpop.f32.mrb[0].mxu0
    %v1497 = vadd.f32 %v1305, %v1496
    %1498 = vmatprep.mubr.f32.mxu0 0.0
    %1499 = vmatmul.mubr.f32.gmra.mrb[0].mxu0 %v1324
    %v1500 = vpop.f32.mrb[0].mxu0
    %v1501 = vadd.f32 %v1301, %v1500
    %v1502 = vpop.f32.mrb[0].mxu0
    %v1503 = vadd.f32 %v1305, %v1502
    %1504 = vmatprep.mubr.f32.mxu0 0.0
    %1505 = vmatmul.mubr.f32.gmra.mrb[0].mxu0 %v1327
    %v1506 = vpop.f32.mrb[0].mxu0
    %v1507 = vadd.f32 %v1301, %v1506
    %v1508 = vpop.f32.mrb[0].mxu0
    %v1509 = vadd.f32 %v1305, %v1508
    %1510 = vmatprep.mubr.f32.mxu0 0.0
    %1511 = vmatmul.mubr.f32.gmra.mrb[0].mxu0 %v1330
    %v1512 = vpop.f32.mrb[0].mxu0
    %v1513 = vadd.f32 %v1301, %v1512
    %v1514 = vpop.f32.mrb[0].mxu0
    %v1515 = vadd.f32 %v1305, %v1514
    %1516 = vmatprep.mubr.f32.mxu0 0.0
    %1517 = vmatmul.mubr.f32.gmra.mrb[0].mxu0 %v1333
    %v1518 = vpop.f32.mrb[0].mxu0
    %v1519 = vadd.f32 %v1301, %v1518
    %v1520 = vpop.f32.mrb[0].mxu0
    %v1521 = vadd.f32 %v1305, %v1520
    %1522 = vmatprep.mubr.f32.mxu0 0.0
    %1523 = vmatmul.mubr.f32.gmra.mrb[0].mxu0 %v1336
    %v1524 = vpop.f32.mrb[0].mxu0
    %v1525 = vadd.f32 %v1301, %v1524
    %v1526 = vpop.f32.mrb[0].mxu0
    %v1527 = vadd.f32 %v1305, %v1526
    %1528 = vmatprep.mubr.f32.mxu0 0.0
    %1529 = vmatmul.mubr.f32.gmra.mrb[0].mxu0 %v1339
    %v1530 = vpop.f32.mrb[0].mxu0
    %v1531 = vadd.f32 %v1301, %v1530
    %v1532 = vpop.f32.mrb[0].mxu0
    %v1533 = vadd.f32 %v1305, %v1532
    %1534 = vmatprep.mubr.f32.mxu0 0.0
    %1535 = vmatmul.mubr.f32.gmra.mrb[0].mxu0 %v1342
    %v1536 = vpop.f32.mrb[0].mxu0
    %v1537 = vadd.f32 %v1301, %v1536
    %v1538 = vpop.f32.mrb[0].mxu0
    %v1539 = vadd.f32 %v1305, %v1538
    %1540 = vmatprep.mubr.f32.mxu0 0.0
    %1541 = vmatmul.mubr.f32.gmra.mrb[0].mxu0 %v1345
    %v1542 = vpop.f32.mrb[0].mxu0
    %v1543 = vadd.f32 %v1301, %v1542
    %v1544 = vpop.f32.mrb[0].mxu0
    %v1545 = vadd.f32 %v1305, %v1544
    %1546 = vmatprep.mubr.f32.mxu0 0.0
    %1547 = vmatmul.mubr.f32.gmra.mrb[0].mxu0 %v1348
    %v1548 = vpop.f32.mrb[0].mxu0
    %v1549 = vadd.f32 %v1301, %v1548
    %v1550 = vpop.f32.mrb[0].mxu0
    %v1551 = vadd.f32 %v1305, %v1550
    %1552 = vmatprep.mubr.f32.mxu0 0.0
    %1553 = vmatmul.mubr.f32.gmra.mrb[0].mxu0 %v1351
    %v1554 = vpop.f32.mrb[0].mxu0
    %v1555 = vadd.f32 %v1301, %v1554
    %v1556 = vpop.f32.mrb[0].mxu0
    %v1557 = vadd.f32 %v1305, %v1556
    %1558 = vmatprep.mubr.f32.mxu0 0.0
    %1559 = vmatmul.mubr.f32.gmra.mrb[0].mxu0 %v1354
    %v1560 = vpop.f32.mrb[0].mxu0
    %v1561 = vadd.f32 %v1301, %v1560
    %v1562 = vpop.f32.mrb[0].mxu0
    %v1563 = vadd.f32 %v1305, %v1562
    %1564 = vmatprep.mubr.f32.mxu0 0.0
    %1565 = vmatmul.mubr.f32.gmra.mrb[0].mxu0 %v1357
    %v1566 = vpop.f32.mrb[0].mxu0
    %v1567 = vadd.f32 %v1301, %v1566
    %v1568 = vpop.f32.mrb[0].mxu0
    %v1569 = vadd.f32 %v1305, %v1568
    %1570 = vmatprep.mubr.f32.mxu0 0.0
    %1571 = vmatmul.mubr.f32.gmra.mrb[0].mxu0 %v1360
    %v1572 = vpop.f32.mrb[0].mxu0
    %v1573 = vadd.f32 %v1301, %v1572
    %v1574 = vpop.f32.mrb[0].mxu0
    %v1575 = vadd.f32 %v1305, %v1574
    %1576 = vmatprep.mubr.f32.mxu0 0.0
    %1577 = vmatmul.mubr.f32.gmra.mrb[0].mxu0 %v1363
    %v1578 = vpop.f32.mrb[0].mxu0
    %v1579 = vadd.f32 %v1301, %v1578
    %v1580 = vpop.f32.mrb[0].mxu0
    %v1581 = vadd.f32 %v1305, %v1580
    %1582 = vmatprep.mubr.f32.mxu0 0.0
    %1583 = vmatmul.mubr.f32.gmra.mrb[0].mxu0 %v1366
    %v1584 = vpop.f32.mrb[0].mxu0
    %v1585 = vadd.f32 %v1301, %v1584
    %v1586 = vpop.f32.mrb[0].mxu0
    %v1587 = vadd.f32 %v1305, %v1586
    %1588 = vmatprep.mubr.f32.mxu0 0.0
    %1589 = vmatmul.mubr.f32.gmra.mrb[0].mxu0 %v1369
    %v1590 = vpop.f32.mrb[0].mxu0
    %v1591 = vadd.f32 %v1301, %v1590
    %v1592 = vpop.f32.mrb[0].mxu0
    %v1593 = vadd.f32 %v1305, %v1592
    %1594 = vmatprep.mubr.f32.mxu0 0.0
    %1595 = vmatmul.mubr.f32.gmra.mrb[0].mxu0 %v1372
    %v1596 = vpop.f32.mrb[0].mxu0
    %v1597 = vadd.f32 %v1301, %v1596
    %v1598 = vpop.f32.mrb[0].mxu0
    %v1599 = vadd.f32 %v1305, %v1598
    %1600 = vmatprep.mubr.f32.mxu0 0.0
    %1601 = vmatmul.mubr.f32.gmra.mrb[0].mxu0 %v1375
    %v1602 = vpop.f32.mrb[0].mxu0
    %v1603 = vadd.f32 %v1301, %v1602
    %v1604 = vpop.f32.mrb[0].mxu0
    %v1605 = vadd.f32 %v1305, %v1604
    %1606 = vmatprep.mubr.f32.mxu0 0.0
    %1607 = vmatmul.mubr.f32.gmra.mrb[0].mxu0 %v1378
    %v1608 = vpop.f32.mrb[0].mxu0
    %v1609 = vadd.f32 %v1301, %v1608
    %v1610 = vpop.f32.mrb[0].mxu0
    %v1611 = vadd.f32 %v1305, %v1610
    %1612 = vmatprep.mubr.f32.mxu0 0.0
    %1613 = vmatmul.mubr.f32.gmra.mrb[0].mxu0 %v1381
    %v1614 = vpop.f32.mrb[0].mxu0
    %v1615 = vadd.f32 %v1301, %v1614
    %v1616 = vpop.f32.mrb[0].mxu0
    %v1617 = vadd.f32 %v1305, %v1616
    %1618 = vmatprep.mubr.f32.mxu0 0.0
    %1619 = vmatmul.mubr.f32.gmra.mrb[0].mxu0 %v1384
    %v1620 = vpop.f32.mrb[0].mxu0
    %v1621 = vadd.f32 %v1301, %v1620
    %v1622 = vpop.f32.mrb[0].mxu0
    %v1623 = vadd.f32 %v1305, %v1622
    %1624 = vmatprep.mubr.f32.mxu0 0.0
    %1625 = vmatmul.mubr.f32.gmra.mrb[0].mxu0 %v1387
    %v1626 = vpop.f32.mrb[0].mxu0
    %v1627 = vadd.f32 %v1301, %v1626
    %v1628 = vpop.f32.mrb[0].mxu0
    %v1629 = vadd.f32 %v1305, %v1628
    %1630 = vmatprep.mubr.f32.mxu0 0.0
    %1631 = vmatmul.mubr.f32.gmra.mrb[0].mxu0 %v1390
    %v1632 = vpop.f32.mrb[0].mxu0
    %v1633 = vadd.f32 %v1301, %v1632
    %v1634 = vpop.f32.mrb[0].mxu0
    %v1635 = vadd.f32 %v1305, %v1634
    %1636 = vmatprep.mubr.f32.mxu0 0.0
    %1637 = vmatmul.mubr.f32.gmra.mrb[0].mxu0 %v1393
    %v1638 = vpop.f32.mrb[0].mxu0
    %v1639 = vadd.f32 %v1301, %v1638
    %v1640 = vpop.f32.mrb[0].mxu0
    %v1641 = vadd.f32 %v1305, %v1640
    %1642 = vmatprep.mubr.f32.mxu0 0.0
    %1643 = vmatmul.mubr.f32.gmra.mrb[0].mxu0 %v1396
    %v1644 = vpop.f32.mrb[0].mxu0
    %v1645 = vadd.f32 %v1301, %v1644
    %v1646 = vpop.f32.mrb[0].mxu0
    %v1647 = vadd.f32 %v1305, %v1646
    %1648 = vmatprep.mubr.f32.mxu0 0.0
    %1649 = vmatmul.mubr.f32.gmra.mrb[0].mxu0 %v1399
    %v1650 = vpop.f32.mrb[0].mxu0
    %v1651 = vadd.f32 %v1301, %v1650
    %v1652 = vpop.f32.mrb[0].mxu0
    %v1653 = vadd.f32 %v1305, %v1652
    %1654 = vmatprep.mubr.f32.mxu0 0.0
    %1655 = vmatmul.mubr.f32.gmra.mrb[0].mxu0 %v1402
    %v1656 = vpop.f32.mrb[0].mxu0
    %v1657 = vadd.f32 %v1301, %v1656
    %v1658 = vpop.f32.mrb[0].mxu0
    %v1659 = vadd.f32 %v1305, %v1658
    %1660 = vdwg.mxu0
    %v1661 = vmax.f32 %v1471, 0.0
    %v1662 = vmax.f32 %v1473, 0.0
    %v1663 = vmax.f32 %v1477, 0.0
    %v1664 = vmax.f32 %v1479, 0.0
    %v1665 = vmax.f32 %v1483, 0.0
    %v1666 = vmax.f32 %v1485, 0.0
    %v1667 = vmax.f32 %v1489, 0.0
    %v1668 = vmax.f32 %v1491, 0.0
    %v1669 = vmax.f32 %v1495, 0.0
    %v1670 = vmax.f32 %v1497, 0.0
    %v1671 = vmax.f32 %v1501, 0.0
    %v1672 = vmax.f32 %v1503, 0.0
    %v1673 = vmax.f32 %v1507, 0.0
    %v1674 = vmax.f32 %v1509, 0.0
    %v1675 = vmax.f32 %v1513, 0.0
    %v1676 = vmax.f32 %v1515, 0.0
    %v1677 = vmax.f32 %v1519, 0.0
    %v1678 = vmax.f32 %v1521, 0.0
    %v1679 = vmax.f32 %v1525, 0.0
    %v1680 = vmax.f32 %v1527, 0.0
    %v1681 = vmax.f32 %v1531, 0.0
    %v1682 = vmax.f32 %v1533, 0.0
    %v1683 = vmax.f32 %v1537, 0.0
    %v1684 = vmax.f32 %v1539, 0.0
    %v1685 = vmax.f32 %v1543, 0.0
    %v1686 = vmax.f32 %v1545, 0.0
    %v1687 = vmax.f32 %v1549, 0.0
    %v1688 = vmax.f32 %v1551, 0.0
    %v1689 = vmax.f32 %v1555, 0.0
    %v1690 = vmax.f32 %v1557, 0.0
    %v1691 = vmax.f32 %v1561, 0.0
    %v1692 = vmax.f32 %v1563, 0.0
    %v1693 = vmax.f32 %v1567, 0.0
    %v1694 = vmax.f32 %v1569, 0.0
    %v1695 = vmax.f32 %v1573, 0.0
    %v1696 = vmax.f32 %v1575, 0.0
    %v1697 = vmax.f32 %v1579, 0.0
    %v1698 = vmax.f32 %v1581, 0.0
    %v1699 = vmax.f32 %v1585, 0.0
    %v1700 = vmax.f32 %v1587, 0.0
    %v1701 = vmax.f32 %v1591, 0.0
    %v1702 = vmax.f32 %v1593, 0.0
    %v1703 = vmax.f32 %v1597, 0.0
    %v1704 = vmax.f32 %v1599, 0.0
    %v1705 = vmax.f32 %v1603, 0.0
    %v1706 = vmax.f32 %v1605, 0.0
    %v1707 = vmax.f32 %v1609, 0.0
    %v1708 = vmax.f32 %v1611, 0.0
    %v1709 = vmax.f32 %v1615, 0.0
    %v1710 = vmax.f32 %v1617, 0.0
    %v1711 = vmax.f32 %v1621, 0.0
    %v1712 = vmax.f32 %v1623, 0.0
    %v1713 = vmax.f32 %v1627, 0.0
    %v1714 = vmax.f32 %v1629, 0.0
    %v1715 = vmax.f32 %v1633, 0.0
    %v1716 = vmax.f32 %v1635, 0.0
    %v1717 = vmax.f32 %v1639, 0.0
    %v1718 = vmax.f32 %v1641, 0.0
    %v1719 = vmax.f32 %v1645, 0.0
    %v1720 = vmax.f32 %v1647, 0.0
    %v1721 = vmax.f32 %v1651, 0.0
    %v1722 = vmax.f32 %v1653, 0.0
    %v1723 = vmax.f32 %v1657, 0.0
    %v1724 = vmax.f32 %v1659, 0.0
    %v1725 = vld [vmem:[%s9] sm:$0xff]
    %v1726 = vld [vmem:[%s9 + $0x8] sm:$0xff]
    %v1727 = vld [vmem:[%s9 + $0x10] sm:$0xff]
    %v1728 = vld [vmem:[%s9 + $0x18] sm:$0xff]
    %v1729 = vld [vmem:[%s9 + $0x20] sm:$0xff]
    %v1730 = vld [vmem:[%s9 + $0x28] sm:$0xff]
    %v1731 = vld [vmem:[%s9 + $0x30] sm:$0xff]
    %v1732 = vld [vmem:[%s9 + $0x38] sm:$0xff]
    %v1733 = vld [vmem:[%s9 + $0x40] sm:$0xff]
    %v1734 = vld [vmem:[%s9 + $0x48] sm:$0xff]
    %v1735 = vld [vmem:[%s9 + $0x50] sm:$0xff]
    %v1736 = vld [vmem:[%s9 + $0x58] sm:$0xff]
    %v1737 = vld [vmem:[%s9 + $0x60] sm:$0xff]
    %v1738 = vld [vmem:[%s9 + $0x68] sm:$0xff]
    %v1739 = vld [vmem:[%s9 + $0x70] sm:$0xff]
    %v1740 = vld [vmem:[%s9 + $0x78] sm:$0xff]
    %v1741 = vld [vmem:[%s9 + $0x80] sm:$0xff]
    %v1742 = vld [vmem:[%s9 + $0x88] sm:$0xff]
    %v1743 = vld [vmem:[%s9 + $0x90] sm:$0xff]
    %v1744 = vld [vmem:[%s9 + $0x98] sm:$0xff]
    %v1745 = vld [vmem:[%s9 + $0xa0] sm:$0xff]
    %v1746 = vld [vmem:[%s9 + $0xa8] sm:$0xff]
    %v1747 = vld [vmem:[%s9 + $0xb0] sm:$0xff]
    %v1748 = vld [vmem:[%s9 + $0xb8] sm:$0xff]
    %v1749 = vld [vmem:[%s9 + $0xc0] sm:$0xff]
    %v1750 = vld [vmem:[%s9 + $0xc8] sm:$0xff]
    %v1751 = vld [vmem:[%s9 + $0xd0] sm:$0xff]
    %v1752 = vld [vmem:[%s9 + $0xd8] sm:$0xff]
    %v1753 = vld [vmem:[%s9 + $0xe0] sm:$0xff]
    %v1754 = vld [vmem:[%s9 + $0xe8] sm:$0xff]
    %v1755 = vld [vmem:[%s9 + $0xf0] sm:$0xff]
    %v1756 = vld [vmem:[%s9 + $0xf8] sm:$0xff]
    %v1757 = vld [vmem:[%s10] sm:$0x1]
    %v1759 = vlaneseq
    %v1760 = vshrl.u32 %v1759, 7
    %v1761 = vsub.s32 0, %v1760
    %v1762 = vrot.slane %v1757, %v1761
    %1764 = vmatprep.subr.mxu0 0.0
    %1765 = vmatpush1.msra.mxu0 %v1725
    %1766 = vmatprep.subr.mxu0 0.0
    %1767 = vmatpush1.msra.mxu0 %v1726
    %1768 = vmatprep.subr.mxu0 0.0
    %1769 = vmatpush1.msra.mxu0 %v1727
    %1770 = vmatprep.subr.mxu0 0.0
    %1771 = vmatpush1.msra.mxu0 %v1728
    %1772 = vmatprep.subr.mxu0 0.0
    %1773 = vmatpush1.msra.mxu0 %v1729
    %1774 = vmatprep.subr.mxu0 0.0
    %1775 = vmatpush1.msra.mxu0 %v1730
    %1776 = vmatprep.subr.mxu0 0.0
    %1777 = vmatpush1.msra.mxu0 %v1731
    %1778 = vmatprep.subr.mxu0 0.0
    %1779 = vmatpush1.msra.mxu0 %v1732
    %1780 = vmatprep.subr.mxu0 0.0
    %1781 = vmatpush1.msra.mxu0 %v1733
    %1782 = vmatprep.subr.mxu0 0.0
    %1783 = vmatpush1.msra.mxu0 %v1734
    %1784 = vmatprep.subr.mxu0 0.0
    %1785 = vmatpush1.msra.mxu0 %v1735
    %1786 = vmatprep.subr.mxu0 0.0
    %1787 = vmatpush1.msra.mxu0 %v1736
    %1788 = vmatprep.subr.mxu0 0.0
    %1789 = vmatpush1.msra.mxu0 %v1737
    %1790 = vmatprep.subr.mxu0 0.0
    %1791 = vmatpush1.msra.mxu0 %v1738
    %1792 = vmatprep.subr.mxu0 0.0
    %1793 = vmatpush1.msra.mxu0 %v1739
    %1794 = vmatprep.subr.mxu0 0.0
    %1795 = vmatpush1.msra.mxu0 %v1740
    %1796 = vmatprep.subr.mxu0 0.0
    %1797 = vmatpush1.msra.mxu0 %v1741
    %1798 = vmatprep.subr.mxu0 0.0
    %1799 = vmatpush1.msra.mxu0 %v1742
    %1800 = vmatprep.subr.mxu0 0.0
    %1801 = vmatpush1.msra.mxu0 %v1743
    %1802 = vmatprep.subr.mxu0 0.0
    %1803 = vmatpush1.msra.mxu0 %v1744
    %1804 = vmatprep.subr.mxu0 0.0
    %1805 = vmatpush1.msra.mxu0 %v1745
    %1806 = vmatprep.subr.mxu0 0.0
    %1807 = vmatpush1.msra.mxu0 %v1746
    %1808 = vmatprep.subr.mxu0 0.0
    %1809 = vmatpush1.msra.mxu0 %v1747
    %1810 = vmatprep.subr.mxu0 0.0
    %1811 = vmatpush1.msra.mxu0 %v1748
    %1812 = vmatprep.subr.mxu0 0.0
    %1813 = vmatpush1.msra.mxu0 %v1749
    %1814 = vmatprep.subr.mxu0 0.0
    %1815 = vmatpush1.msra.mxu0 %v1750
    %1816 = vmatprep.subr.mxu0 0.0
    %1817 = vmatpush1.msra.mxu0 %v1751
    %1818 = vmatprep.subr.mxu0 0.0
    %1819 = vmatpush1.msra.mxu0 %v1752
    %1820 = vmatprep.subr.mxu0 0.0
    %1821 = vmatpush1.msra.mxu0 %v1753
    %1822 = vmatprep.subr.mxu0 0.0
    %1823 = vmatpush1.msra.mxu0 %v1754
    %1824 = vmatprep.subr.mxu0 0.0
    %1825 = vmatpush1.msra.mxu0 %v1755
    %1826 = vmatprep.subr.mxu0 0.0
    %1827 = vmatpush1.msra.mxu0 %v1756
    %1828 = vmatprep.mubr.f32.mxu0 %v1662
    %1829 = vmatmul.mubr.f32.gmra.mrb[0].mxu0 %v1661
    %v1830 = vpop.f32.mrb[0].mxu0
    %v1831 = vadd.f32 %v1762, %v1830
    %v1832 = vpop.f32.mrb[0].mxu0
    %1833 = vmatprep.mubr.f32.mxu0 %v1664
    %1834 = vmatmul.mubr.f32.gmra.mrb[0].mxu0 %v1663
    %v1835 = vpop.f32.mrb[0].mxu0
    %v1836 = vadd.f32 %v1762, %v1835
    %v1837 = vpop.f32.mrb[0].mxu0
    %1838 = vmatprep.mubr.f32.mxu0 %v1666
    %1839 = vmatmul.mubr.f32.gmra.mrb[0].mxu0 %v1665
    %v1840 = vpop.f32.mrb[0].mxu0
    %v1841 = vadd.f32 %v1762, %v1840
    %v1842 = vpop.f32.mrb[0].mxu0
    %1843 = vmatprep.mubr.f32.mxu0 %v1668
    %1844 = vmatmul.mubr.f32.gmra.mrb[0].mxu0 %v1667
    %v1845 = vpop.f32.mrb[0].mxu0
    %v1846 = vadd.f32 %v1762, %v1845
    %v1847 = vpop.f32.mrb[0].mxu0
    %1848 = vmatprep.mubr.f32.mxu0 %v1670
    %1849 = vmatmul.mubr.f32.gmra.mrb[0].mxu0 %v1669
    %v1850 = vpop.f32.mrb[0].mxu0
    %v1851 = vadd.f32 %v1762, %v1850
    %v1852 = vpop.f32.mrb[0].mxu0
    %1853 = vmatprep.mubr.f32.mxu0 %v1672
    %1854 = vmatmul.mubr.f32.gmra.mrb[0].mxu0 %v1671
    %v1855 = vpop.f32.mrb[0].mxu0
    %v1856 = vadd.f32 %v1762, %v1855
    %v1857 = vpop.f32.mrb[0].mxu0
    %1858 = vmatprep.mubr.f32.mxu0 %v1674
    %1859 = vmatmul.mubr.f32.gmra.mrb[0].mxu0 %v1673
    %v1860 = vpop.f32.mrb[0].mxu0
    %v1861 = vadd.f32 %v1762, %v1860
    %v1862 = vpop.f32.mrb[0].mxu0
    %1863 = vmatprep.mubr.f32.mxu0 %v1676
    %1864 = vmatmul.mubr.f32.gmra.mrb[0].mxu0 %v1675
    %v1865 = vpop.f32.mrb[0].mxu0
    %v1866 = vadd.f32 %v1762, %v1865
    %v1867 = vpop.f32.mrb[0].mxu0
    %1868 = vmatprep.mubr.f32.mxu0 %v1678
    %1869 = vmatmul.mubr.f32.gmra.mrb[0].mxu0 %v1677
    %v1870 = vpop.f32.mrb[0].mxu0
    %v1871 = vadd.f32 %v1762, %v1870
    %v1872 = vpop.f32.mrb[0].mxu0
    %1873 = vmatprep.mubr.f32.mxu0 %v1680
    %1874 = vmatmul.mubr.f32.gmra.mrb[0].mxu0 %v1679
    %v1875 = vpop.f32.mrb[0].mxu0
    %v1876 = vadd.f32 %v1762, %v1875
    %v1877 = vpop.f32.mrb[0].mxu0
    %1878 = vmatprep.mubr.f32.mxu0 %v1682
    %1879 = vmatmul.mubr.f32.gmra.mrb[0].mxu0 %v1681
    %v1880 = vpop.f32.mrb[0].mxu0
    %v1881 = vadd.f32 %v1762, %v1880
    %v1882 = vpop.f32.mrb[0].mxu0
    %1883 = vmatprep.mubr.f32.mxu0 %v1684
    %1884 = vmatmul.mubr.f32.gmra.mrb[0].mxu0 %v1683
    %v1885 = vpop.f32.mrb[0].mxu0
    %v1886 = vadd.f32 %v1762, %v1885
    %v1887 = vpop.f32.mrb[0].mxu0
    %1888 = vmatprep.mubr.f32.mxu0 %v1686
    %1889 = vmatmul.mubr.f32.gmra.mrb[0].mxu0 %v1685
    %v1890 = vpop.f32.mrb[0].mxu0
    %v1891 = vadd.f32 %v1762, %v1890
    %v1892 = vpop.f32.mrb[0].mxu0
    %1893 = vmatprep.mubr.f32.mxu0 %v1688
    %1894 = vmatmul.mubr.f32.gmra.mrb[0].mxu0 %v1687
    %v1895 = vpop.f32.mrb[0].mxu0
    %v1896 = vadd.f32 %v1762, %v1895
    %v1897 = vpop.f32.mrb[0].mxu0
    %1898 = vmatprep.mubr.f32.mxu0 %v1690
    %1899 = vmatmul.mubr.f32.gmra.mrb[0].mxu0 %v1689
    %v1900 = vpop.f32.mrb[0].mxu0
    %v1901 = vadd.f32 %v1762, %v1900
    %v1902 = vpop.f32.mrb[0].mxu0
    %1903 = vmatprep.mubr.f32.mxu0 %v1692
    %1904 = vmatmul.mubr.f32.gmra.mrb[0].mxu0 %v1691
    %v1905 = vpop.f32.mrb[0].mxu0
    %v1906 = vadd.f32 %v1762, %v1905
    %v1907 = vpop.f32.mrb[0].mxu0
    %1908 = vmatprep.mubr.f32.mxu0 %v1694
    %1909 = vmatmul.mubr.f32.gmra.mrb[0].mxu0 %v1693
    %v1910 = vpop.f32.mrb[0].mxu0
    %v1911 = vadd.f32 %v1762, %v1910
    %v1912 = vpop.f32.mrb[0].mxu0
    %1913 = vmatprep.mubr.f32.mxu0 %v1696
    %1914 = vmatmul.mubr.f32.gmra.mrb[0].mxu0 %v1695
    %v1915 = vpop.f32.mrb[0].mxu0
    %v1916 = vadd.f32 %v1762, %v1915
    %v1917 = vpop.f32.mrb[0].mxu0
    %1918 = vmatprep.mubr.f32.mxu0 %v1698
    %1919 = vmatmul.mubr.f32.gmra.mrb[0].mxu0 %v1697
    %v1920 = vpop.f32.mrb[0].mxu0
    %v1921 = vadd.f32 %v1762, %v1920
    %v1922 = vpop.f32.mrb[0].mxu0
    %1923 = vmatprep.mubr.f32.mxu0 %v1700
    %1924 = vmatmul.mubr.f32.gmra.mrb[0].mxu0 %v1699
    %v1925 = vpop.f32.mrb[0].mxu0
    %v1926 = vadd.f32 %v1762, %v1925
    %v1927 = vpop.f32.mrb[0].mxu0
    %1928 = vmatprep.mubr.f32.mxu0 %v1702
    %1929 = vmatmul.mubr.f32.gmra.mrb[0].mxu0 %v1701
    %v1930 = vpop.f32.mrb[0].mxu0
    %v1931 = vadd.f32 %v1762, %v1930
    %v1932 = vpop.f32.mrb[0].mxu0
    %1933 = vmatprep.mubr.f32.mxu0 %v1704
    %1934 = vmatmul.mubr.f32.gmra.mrb[0].mxu0 %v1703
    %v1935 = vpop.f32.mrb[0].mxu0
    %v1936 = vadd.f32 %v1762, %v1935
    %v1937 = vpop.f32.mrb[0].mxu0
    %1938 = vmatprep.mubr.f32.mxu0 %v1706
    %1939 = vmatmul.mubr.f32.gmra.mrb[0].mxu0 %v1705
    %v1940 = vpop.f32.mrb[0].mxu0
    %v1941 = vadd.f32 %v1762, %v1940
    %v1942 = vpop.f32.mrb[0].mxu0
    %1943 = vmatprep.mubr.f32.mxu0 %v1708
    %1944 = vmatmul.mubr.f32.gmra.mrb[0].mxu0 %v1707
    %v1945 = vpop.f32.mrb[0].mxu0
    %v1946 = vadd.f32 %v1762, %v1945
    %v1947 = vpop.f32.mrb[0].mxu0
    %1948 = vmatprep.mubr.f32.mxu0 %v1710
    %1949 = vmatmul.mubr.f32.gmra.mrb[0].mxu0 %v1709
    %v1950 = vpop.f32.mrb[0].mxu0
    %v1951 = vadd.f32 %v1762, %v1950
    %v1952 = vpop.f32.mrb[0].mxu0
    %1953 = vmatprep.mubr.f32.mxu0 %v1712
    %1954 = vmatmul.mubr.f32.gmra.mrb[0].mxu0 %v1711
    %v1955 = vpop.f32.mrb[0].mxu0
    %v1956 = vadd.f32 %v1762, %v1955
    %v1957 = vpop.f32.mrb[0].mxu0
    %1958 = vmatprep.mubr.f32.mxu0 %v1714
    %1959 = vmatmul.mubr.f32.gmra.mrb[0].mxu0 %v1713
    %v1960 = vpop.f32.mrb[0].mxu0
    %v1961 = vadd.f32 %v1762, %v1960
    %v1962 = vpop.f32.mrb[0].mxu0
    %1963 = vmatprep.mubr.f32.mxu0 %v1716
    %1964 = vmatmul.mubr.f32.gmra.mrb[0].mxu0 %v1715
    %v1965 = vpop.f32.mrb[0].mxu0
    %v1966 = vadd.f32 %v1762, %v1965
    %v1967 = vpop.f32.mrb[0].mxu0
    %1968 = vmatprep.mubr.f32.mxu0 %v1718
    %1969 = vmatmul.mubr.f32.gmra.mrb[0].mxu0 %v1717
    %v1970 = vpop.f32.mrb[0].mxu0
    %v1971 = vadd.f32 %v1762, %v1970
    %v1972 = vpop.f32.mrb[0].mxu0
    %1973 = vmatprep.mubr.f32.mxu0 %v1720
    %1974 = vmatmul.mubr.f32.gmra.mrb[0].mxu0 %v1719
    %v1975 = vpop.f32.mrb[0].mxu0
    %v1976 = vadd.f32 %v1762, %v1975
    %v1977 = vpop.f32.mrb[0].mxu0
    %1978 = vmatprep.mubr.f32.mxu0 %v1722
    %1979 = vmatmul.mubr.f32.gmra.mrb[0].mxu0 %v1721
    %v1980 = vpop.f32.mrb[0].mxu0
    %v1981 = vadd.f32 %v1762, %v1980
    %v1982 = vpop.f32.mrb[0].mxu0
    %1983 = vmatprep.mubr.f32.mxu0 %v1724
    %1984 = vmatmul.mubr.f32.gmra.mrb[0].mxu0 %v1723
    %v1985 = vpop.f32.mrb[0].mxu0
    %v1986 = vadd.f32 %v1762, %v1985
    %v1987 = vpop.f32.mrb[0].mxu0
    %1988 = vdwg.mxu0
    %v1989 = vadd.f32 %v1248, %v1831
    %v1990 = vadd.f32 %v1249, %v1836
    %v1991 = vadd.f32 %v1250, %v1841
    %v1992 = vadd.f32 %v1251, %v1846
    %v1993 = vadd.f32 %v1252, %v1851
    %v1994 = vadd.f32 %v1253, %v1856
    %v1995 = vadd.f32 %v1254, %v1861
    %v1996 = vadd.f32 %v1255, %v1866
    %v1997 = vadd.f32 %v1256, %v1871
    %v1998 = vadd.f32 %v1257, %v1876
    %v1999 = vadd.f32 %v1258, %v1881
    %v2000 = vadd.f32 %v1259, %v1886
    %v2001 = vadd.f32 %v1260, %v1891
    %v2002 = vadd.f32 %v1261, %v1896
    %v2003 = vadd.f32 %v1262, %v1901
    %v2004 = vadd.f32 %v1263, %v1906
    %v2005 = vadd.f32 %v1264, %v1911
    %v2006 = vadd.f32 %v1265, %v1916
    %v2007 = vadd.f32 %v1266, %v1921
    %v2008 = vadd.f32 %v1267, %v1926
    %v2009 = vadd.f32 %v1268, %v1931
    %v2010 = vadd.f32 %v1269, %v1936
    %v2011 = vadd.f32 %v1270, %v1941
    %v2012 = vadd.f32 %v1271, %v1946
    %v2013 = vadd.f32 %v1272, %v1951
    %v2014 = vadd.f32 %v1273, %v1956
    %v2015 = vadd.f32 %v1274, %v1961
    %v2016 = vadd.f32 %v1275, %v1966
    %v2017 = vadd.f32 %v1276, %v1971
    %v2018 = vadd.f32 %v1277, %v1976
    %v2019 = vadd.f32 %v1278, %v1981
    %v2020 = vadd.f32 %v1279, %v1986
    %v2021 = vld [vmem:[%s11] sm:$0x1]
    %v2022 = vld [vmem:[%s12] sm:$0x1]
    %v2023 = vsel %vm431, %v1989, 0.0
    %2024 = vadd.xlane.f32.xlu0 %v2023
    %v2025 = vpop.xlane.xlu0 %2024
    %v2026 = vsel %vm431, %v1990, 0.0
    %2027 = vadd.xlane.f32.xlu0 %v2026
    %v2028 = vpop.xlane.xlu0 %2027
    %v2029 = vsel %vm431, %v1991, 0.0
    %2030 = vadd.xlane.f32.xlu0 %v2029
    %v2031 = vpop.xlane.xlu0 %2030
    %v2032 = vsel %vm431, %v1992, 0.0
    %2033 = vadd.xlane.f32.xlu0 %v2032
    %v2034 = vpop.xlane.xlu0 %2033
    %v2035 = vsel %vm431, %v1993, 0.0
    %2036 = vadd.xlane.f32.xlu0 %v2035
    %v2037 = vpop.xlane.xlu0 %2036
    %v2038 = vsel %vm431, %v1994, 0.0
    %2039 = vadd.xlane.f32.xlu0 %v2038
    %v2040 = vpop.xlane.xlu0 %2039
    %v2041 = vsel %vm431, %v1995, 0.0
    %2042 = vadd.xlane.f32.xlu0 %v2041
    %v2043 = vpop.xlane.xlu0 %2042
    %v2044 = vsel %vm431, %v1996, 0.0
    %2045 = vadd.xlane.f32.xlu0 %v2044
    %v2046 = vpop.xlane.xlu0 %2045
    %v2047 = vsel %vm431, %v1997, 0.0
    %2048 = vadd.xlane.f32.xlu0 %v2047
    %v2049 = vpop.xlane.xlu0 %2048
    %v2050 = vsel %vm431, %v1998, 0.0
    %2051 = vadd.xlane.f32.xlu0 %v2050
    %v2052 = vpop.xlane.xlu0 %2051
    %v2053 = vsel %vm431, %v1999, 0.0
    %2054 = vadd.xlane.f32.xlu0 %v2053
    %v2055 = vpop.xlane.xlu0 %2054
    %v2056 = vsel %vm431, %v2000, 0.0
    %2057 = vadd.xlane.f32.xlu0 %v2056
    %v2058 = vpop.xlane.xlu0 %2057
    %v2059 = vsel %vm431, %v2001, 0.0
    %2060 = vadd.xlane.f32.xlu0 %v2059
    %v2061 = vpop.xlane.xlu0 %2060
    %v2062 = vsel %vm431, %v2002, 0.0
    %2063 = vadd.xlane.f32.xlu0 %v2062
    %v2064 = vpop.xlane.xlu0 %2063
    %v2065 = vsel %vm431, %v2003, 0.0
    %2066 = vadd.xlane.f32.xlu0 %v2065
    %v2067 = vpop.xlane.xlu0 %2066
    %v2068 = vsel %vm431, %v2004, 0.0
    %2069 = vadd.xlane.f32.xlu0 %v2068
    %v2070 = vpop.xlane.xlu0 %2069
    %v2071 = vsel %vm431, %v2005, 0.0
    %2072 = vadd.xlane.f32.xlu0 %v2071
    %v2073 = vpop.xlane.xlu0 %2072
    %v2074 = vsel %vm431, %v2006, 0.0
    %2075 = vadd.xlane.f32.xlu0 %v2074
    %v2076 = vpop.xlane.xlu0 %2075
    %v2077 = vsel %vm431, %v2007, 0.0
    %2078 = vadd.xlane.f32.xlu0 %v2077
    %v2079 = vpop.xlane.xlu0 %2078
    %v2080 = vsel %vm431, %v2008, 0.0
    %2081 = vadd.xlane.f32.xlu0 %v2080
    %v2082 = vpop.xlane.xlu0 %2081
    %v2083 = vsel %vm431, %v2009, 0.0
    %2084 = vadd.xlane.f32.xlu0 %v2083
    %v2085 = vpop.xlane.xlu0 %2084
    %v2086 = vsel %vm431, %v2010, 0.0
    %2087 = vadd.xlane.f32.xlu0 %v2086
    %v2088 = vpop.xlane.xlu0 %2087
    %v2089 = vsel %vm431, %v2011, 0.0
    %2090 = vadd.xlane.f32.xlu0 %v2089
    %v2091 = vpop.xlane.xlu0 %2090
    %v2092 = vsel %vm431, %v2012, 0.0
    %2093 = vadd.xlane.f32.xlu0 %v2092
    %v2094 = vpop.xlane.xlu0 %2093
    %v2095 = vsel %vm431, %v2013, 0.0
    %2096 = vadd.xlane.f32.xlu0 %v2095
    %v2097 = vpop.xlane.xlu0 %2096
    %v2098 = vsel %vm431, %v2014, 0.0
    %2099 = vadd.xlane.f32.xlu0 %v2098
    %v2100 = vpop.xlane.xlu0 %2099
    %v2101 = vsel %vm431, %v2015, 0.0
    %2102 = vadd.xlane.f32.xlu0 %v2101
    %v2103 = vpop.xlane.xlu0 %2102
    %v2104 = vsel %vm431, %v2016, 0.0
    %2105 = vadd.xlane.f32.xlu0 %v2104
    %v2106 = vpop.xlane.xlu0 %2105
    %v2107 = vsel %vm431, %v2017, 0.0
    %2108 = vadd.xlane.f32.xlu0 %v2107
    %v2109 = vpop.xlane.xlu0 %2108
    %v2110 = vsel %vm431, %v2018, 0.0
    %2111 = vadd.xlane.f32.xlu0 %v2110
    %v2112 = vpop.xlane.xlu0 %2111
    %v2113 = vsel %vm431, %v2019, 0.0
    %2114 = vadd.xlane.f32.xlu0 %v2113
    %v2115 = vpop.xlane.xlu0 %2114
    %v2116 = vsel %vm431, %v2020, 0.0
    %2117 = vadd.xlane.f32.xlu0 %v2116
    %v2118 = vpop.xlane.xlu0 %2117
    %v2119 = vmul.f32 %v2025, %v883
    %v2120 = vmul.f32 %v2028, %v883
    %v2121 = vmul.f32 %v2031, %v883
    %v2122 = vmul.f32 %v2034, %v883
    %v2123 = vmul.f32 %v2037, %v883
    %v2124 = vmul.f32 %v2040, %v883
    %v2125 = vmul.f32 %v2043, %v883
    %v2126 = vmul.f32 %v2046, %v883
    %v2127 = vmul.f32 %v2049, %v883
    %v2128 = vmul.f32 %v2052, %v883
    %v2129 = vmul.f32 %v2055, %v883
    %v2130 = vmul.f32 %v2058, %v883
    %v2131 = vmul.f32 %v2061, %v883
    %v2132 = vmul.f32 %v2064, %v883
    %v2133 = vmul.f32 %v2067, %v883
    %v2134 = vmul.f32 %v2070, %v883
    %v2135 = vmul.f32 %v2073, %v883
    %v2136 = vmul.f32 %v2076, %v883
    %v2137 = vmul.f32 %v2079, %v883
    %v2138 = vmul.f32 %v2082, %v883
    %v2139 = vmul.f32 %v2085, %v883
    %v2140 = vmul.f32 %v2088, %v883
    %v2141 = vmul.f32 %v2091, %v883
    %v2142 = vmul.f32 %v2094, %v883
    %v2143 = vmul.f32 %v2097, %v883
    %v2144 = vmul.f32 %v2100, %v883
    %v2145 = vmul.f32 %v2103, %v883
    %v2146 = vmul.f32 %v2106, %v883
    %v2147 = vmul.f32 %v2109, %v883
    %v2148 = vmul.f32 %v2112, %v883
    %v2149 = vmul.f32 %v2115, %v883
    %v2150 = vmul.f32 %v2118, %v883
    %v2151 = vsub.f32 %v1989, %v2119
    %v2152 = vsub.f32 %v1990, %v2120
    %v2153 = vsub.f32 %v1991, %v2121
    %v2154 = vsub.f32 %v1992, %v2122
    %v2155 = vsub.f32 %v1993, %v2123
    %v2156 = vsub.f32 %v1994, %v2124
    %v2157 = vsub.f32 %v1995, %v2125
    %v2158 = vsub.f32 %v1996, %v2126
    %v2159 = vsub.f32 %v1997, %v2127
    %v2160 = vsub.f32 %v1998, %v2128
    %v2161 = vsub.f32 %v1999, %v2129
    %v2162 = vsub.f32 %v2000, %v2130
    %v2163 = vsub.f32 %v2001, %v2131
    %v2164 = vsub.f32 %v2002, %v2132
    %v2165 = vsub.f32 %v2003, %v2133
    %v2166 = vsub.f32 %v2004, %v2134
    %v2167 = vsub.f32 %v2005, %v2135
    %v2168 = vsub.f32 %v2006, %v2136
    %v2169 = vsub.f32 %v2007, %v2137
    %v2170 = vsub.f32 %v2008, %v2138
    %v2171 = vsub.f32 %v2009, %v2139
    %v2172 = vsub.f32 %v2010, %v2140
    %v2173 = vsub.f32 %v2011, %v2141
    %v2174 = vsub.f32 %v2012, %v2142
    %v2175 = vsub.f32 %v2013, %v2143
    %v2176 = vsub.f32 %v2014, %v2144
    %v2177 = vsub.f32 %v2015, %v2145
    %v2178 = vsub.f32 %v2016, %v2146
    %v2179 = vsub.f32 %v2017, %v2147
    %v2180 = vsub.f32 %v2018, %v2148
    %v2181 = vsub.f32 %v2019, %v2149
    %v2182 = vsub.f32 %v2020, %v2150
    %v2183 = vmul.f32 %v2151, %v2151
    %v2184 = vmul.f32 %v2152, %v2152
    %v2185 = vmul.f32 %v2153, %v2153
    %v2186 = vmul.f32 %v2154, %v2154
    %v2187 = vmul.f32 %v2155, %v2155
    %v2188 = vmul.f32 %v2156, %v2156
    %v2189 = vmul.f32 %v2157, %v2157
    %v2190 = vmul.f32 %v2158, %v2158
    %v2191 = vmul.f32 %v2159, %v2159
    %v2192 = vmul.f32 %v2160, %v2160
    %v2193 = vmul.f32 %v2161, %v2161
    %v2194 = vmul.f32 %v2162, %v2162
    %v2195 = vmul.f32 %v2163, %v2163
    %v2196 = vmul.f32 %v2164, %v2164
    %v2197 = vmul.f32 %v2165, %v2165
    %v2198 = vmul.f32 %v2166, %v2166
    %v2199 = vmul.f32 %v2167, %v2167
    %v2200 = vmul.f32 %v2168, %v2168
    %v2201 = vmul.f32 %v2169, %v2169
    %v2202 = vmul.f32 %v2170, %v2170
    %v2203 = vmul.f32 %v2171, %v2171
    %v2204 = vmul.f32 %v2172, %v2172
    %v2205 = vmul.f32 %v2173, %v2173
    %v2206 = vmul.f32 %v2174, %v2174
    %v2207 = vmul.f32 %v2175, %v2175
    %v2208 = vmul.f32 %v2176, %v2176
    %v2209 = vmul.f32 %v2177, %v2177
    %v2210 = vmul.f32 %v2178, %v2178
    %v2211 = vmul.f32 %v2179, %v2179
    %v2212 = vmul.f32 %v2180, %v2180
    %v2213 = vmul.f32 %v2181, %v2181
    %v2214 = vmul.f32 %v2182, %v2182
    %v2215 = vsel %vm431, %v2183, 0.0
    %2216 = vadd.xlane.f32.xlu0 %v2215
    %v2217 = vpop.xlane.xlu0 %2216
    %v2218 = vsel %vm431, %v2184, 0.0
    %2219 = vadd.xlane.f32.xlu0 %v2218
    %v2220 = vpop.xlane.xlu0 %2219
    %v2221 = vsel %vm431, %v2185, 0.0
    %2222 = vadd.xlane.f32.xlu0 %v2221
    %v2223 = vpop.xlane.xlu0 %2222
    %v2224 = vsel %vm431, %v2186, 0.0
    %2225 = vadd.xlane.f32.xlu0 %v2224
    %v2226 = vpop.xlane.xlu0 %2225
    %v2227 = vsel %vm431, %v2187, 0.0
    %2228 = vadd.xlane.f32.xlu0 %v2227
    %v2229 = vpop.xlane.xlu0 %2228
    %v2230 = vsel %vm431, %v2188, 0.0
    %2231 = vadd.xlane.f32.xlu0 %v2230
    %v2232 = vpop.xlane.xlu0 %2231
    %v2233 = vsel %vm431, %v2189, 0.0
    %2234 = vadd.xlane.f32.xlu0 %v2233
    %v2235 = vpop.xlane.xlu0 %2234
    %v2236 = vsel %vm431, %v2190, 0.0
    %2237 = vadd.xlane.f32.xlu0 %v2236
    %v2238 = vpop.xlane.xlu0 %2237
    %v2239 = vsel %vm431, %v2191, 0.0
    %2240 = vadd.xlane.f32.xlu0 %v2239
    %v2241 = vpop.xlane.xlu0 %2240
    %v2242 = vsel %vm431, %v2192, 0.0
    %2243 = vadd.xlane.f32.xlu0 %v2242
    %v2244 = vpop.xlane.xlu0 %2243
    %v2245 = vsel %vm431, %v2193, 0.0
    %2246 = vadd.xlane.f32.xlu0 %v2245
    %v2247 = vpop.xlane.xlu0 %2246
    %v2248 = vsel %vm431, %v2194, 0.0
    %2249 = vadd.xlane.f32.xlu0 %v2248
    %v2250 = vpop.xlane.xlu0 %2249
    %v2251 = vsel %vm431, %v2195, 0.0
    %2252 = vadd.xlane.f32.xlu0 %v2251
    %v2253 = vpop.xlane.xlu0 %2252
    %v2254 = vsel %vm431, %v2196, 0.0
    %2255 = vadd.xlane.f32.xlu0 %v2254
    %v2256 = vpop.xlane.xlu0 %2255
    %v2257 = vsel %vm431, %v2197, 0.0
    %2258 = vadd.xlane.f32.xlu0 %v2257
    %v2259 = vpop.xlane.xlu0 %2258
    %v2260 = vsel %vm431, %v2198, 0.0
    %2261 = vadd.xlane.f32.xlu0 %v2260
    %v2262 = vpop.xlane.xlu0 %2261
    %v2263 = vsel %vm431, %v2199, 0.0
    %2264 = vadd.xlane.f32.xlu0 %v2263
    %v2265 = vpop.xlane.xlu0 %2264
    %v2266 = vsel %vm431, %v2200, 0.0
    %2267 = vadd.xlane.f32.xlu0 %v2266
    %v2268 = vpop.xlane.xlu0 %2267
    %v2269 = vsel %vm431, %v2201, 0.0
    %2270 = vadd.xlane.f32.xlu0 %v2269
    %v2271 = vpop.xlane.xlu0 %2270
    %v2272 = vsel %vm431, %v2202, 0.0
    %2273 = vadd.xlane.f32.xlu0 %v2272
    %v2274 = vpop.xlane.xlu0 %2273
    %v2275 = vsel %vm431, %v2203, 0.0
    %2276 = vadd.xlane.f32.xlu0 %v2275
    %v2277 = vpop.xlane.xlu0 %2276
    %v2278 = vsel %vm431, %v2204, 0.0
    %2279 = vadd.xlane.f32.xlu0 %v2278
    %v2280 = vpop.xlane.xlu0 %2279
    %v2281 = vsel %vm431, %v2205, 0.0
    %2282 = vadd.xlane.f32.xlu0 %v2281
    %v2283 = vpop.xlane.xlu0 %2282
    %v2284 = vsel %vm431, %v2206, 0.0
    %2285 = vadd.xlane.f32.xlu0 %v2284
    %v2286 = vpop.xlane.xlu0 %2285
    %v2287 = vsel %vm431, %v2207, 0.0
    %2288 = vadd.xlane.f32.xlu0 %v2287
    %v2289 = vpop.xlane.xlu0 %2288
    %v2290 = vsel %vm431, %v2208, 0.0
    %2291 = vadd.xlane.f32.xlu0 %v2290
    %v2292 = vpop.xlane.xlu0 %2291
    %v2293 = vsel %vm431, %v2209, 0.0
    %2294 = vadd.xlane.f32.xlu0 %v2293
    %v2295 = vpop.xlane.xlu0 %2294
    %v2296 = vsel %vm431, %v2210, 0.0
    %2297 = vadd.xlane.f32.xlu0 %v2296
    %v2298 = vpop.xlane.xlu0 %2297
    %v2299 = vsel %vm431, %v2211, 0.0
    %2300 = vadd.xlane.f32.xlu0 %v2299
    %v2301 = vpop.xlane.xlu0 %2300
    %v2302 = vsel %vm431, %v2212, 0.0
    %2303 = vadd.xlane.f32.xlu0 %v2302
    %v2304 = vpop.xlane.xlu0 %2303
    %v2305 = vsel %vm431, %v2213, 0.0
    %2306 = vadd.xlane.f32.xlu0 %v2305
    %v2307 = vpop.xlane.xlu0 %2306
    %v2308 = vsel %vm431, %v2214, 0.0
    %2309 = vadd.xlane.f32.xlu0 %v2308
    %v2310 = vpop.xlane.xlu0 %2309
    %v2311 = vmul.f32 %v2217, %v883
    %v2312 = vmul.f32 %v2220, %v883
    %v2313 = vmul.f32 %v2223, %v883
    %v2314 = vmul.f32 %v2226, %v883
    %v2315 = vmul.f32 %v2229, %v883
    %v2316 = vmul.f32 %v2232, %v883
    %v2317 = vmul.f32 %v2235, %v883
    %v2318 = vmul.f32 %v2238, %v883
    %v2319 = vmul.f32 %v2241, %v883
    %v2320 = vmul.f32 %v2244, %v883
    %v2321 = vmul.f32 %v2247, %v883
    %v2322 = vmul.f32 %v2250, %v883
    %v2323 = vmul.f32 %v2253, %v883
    %v2324 = vmul.f32 %v2256, %v883
    %v2325 = vmul.f32 %v2259, %v883
    %v2326 = vmul.f32 %v2262, %v883
    %v2327 = vmul.f32 %v2265, %v883
    %v2328 = vmul.f32 %v2268, %v883
    %v2329 = vmul.f32 %v2271, %v883
    %v2330 = vmul.f32 %v2274, %v883
    %v2331 = vmul.f32 %v2277, %v883
    %v2332 = vmul.f32 %v2280, %v883
    %v2333 = vmul.f32 %v2283, %v883
    %v2334 = vmul.f32 %v2286, %v883
    %v2335 = vmul.f32 %v2289, %v883
    %v2336 = vmul.f32 %v2292, %v883
    %v2337 = vmul.f32 %v2295, %v883
    %v2338 = vmul.f32 %v2298, %v883
    %v2339 = vmul.f32 %v2301, %v883
    %v2340 = vmul.f32 %v2304, %v883
    %v2341 = vmul.f32 %v2307, %v883
    %v2342 = vmul.f32 %v2310, %v883
    %v2343 = vadd.f32 %v2311, 1e-05
    %v2344 = vadd.f32 %v2312, 1e-05
    %v2345 = vadd.f32 %v2313, 1e-05
    %v2346 = vadd.f32 %v2314, 1e-05
    %v2347 = vadd.f32 %v2315, 1e-05
    %v2348 = vadd.f32 %v2316, 1e-05
    %v2349 = vadd.f32 %v2317, 1e-05
    %v2350 = vadd.f32 %v2318, 1e-05
    %v2351 = vadd.f32 %v2319, 1e-05
    %v2352 = vadd.f32 %v2320, 1e-05
    %v2353 = vadd.f32 %v2321, 1e-05
    %v2354 = vadd.f32 %v2322, 1e-05
    %v2355 = vadd.f32 %v2323, 1e-05
    %v2356 = vadd.f32 %v2324, 1e-05
    %v2357 = vadd.f32 %v2325, 1e-05
    %v2358 = vadd.f32 %v2326, 1e-05
    %v2359 = vadd.f32 %v2327, 1e-05
    %v2360 = vadd.f32 %v2328, 1e-05
    %v2361 = vadd.f32 %v2329, 1e-05
    %v2362 = vadd.f32 %v2330, 1e-05
    %v2363 = vadd.f32 %v2331, 1e-05
    %v2364 = vadd.f32 %v2332, 1e-05
    %v2365 = vadd.f32 %v2333, 1e-05
    %v2366 = vadd.f32 %v2334, 1e-05
    %v2367 = vadd.f32 %v2335, 1e-05
    %v2368 = vadd.f32 %v2336, 1e-05
    %v2369 = vadd.f32 %v2337, 1e-05
    %v2370 = vadd.f32 %v2338, 1e-05
    %v2371 = vadd.f32 %v2339, 1e-05
    %v2372 = vadd.f32 %v2340, 1e-05
    %v2373 = vadd.f32 %v2341, 1e-05
    %v2374 = vadd.f32 %v2342, 1e-05
    %v2375 = vrsqrt.pop %v2343
    %v2376 = vrsqrt.pop %v2344
    %v2377 = vrsqrt.pop %v2345
    %v2378 = vrsqrt.pop %v2346
    %v2379 = vrsqrt.pop %v2347
    %v2380 = vrsqrt.pop %v2348
    %v2381 = vrsqrt.pop %v2349
    %v2382 = vrsqrt.pop %v2350
    %v2383 = vrsqrt.pop %v2351
    %v2384 = vrsqrt.pop %v2352
    %v2385 = vrsqrt.pop %v2353
    %v2386 = vrsqrt.pop %v2354
    %v2387 = vrsqrt.pop %v2355
    %v2388 = vrsqrt.pop %v2356
    %v2389 = vrsqrt.pop %v2357
    %v2390 = vrsqrt.pop %v2358
    %v2391 = vrsqrt.pop %v2359
    %v2392 = vrsqrt.pop %v2360
    %v2393 = vrsqrt.pop %v2361
    %v2394 = vrsqrt.pop %v2362
    %v2395 = vrsqrt.pop %v2363
    %v2396 = vrsqrt.pop %v2364
    %v2397 = vrsqrt.pop %v2365
    %v2398 = vrsqrt.pop %v2366
    %v2399 = vrsqrt.pop %v2367
    %v2400 = vrsqrt.pop %v2368
    %v2401 = vrsqrt.pop %v2369
    %v2402 = vrsqrt.pop %v2370
    %v2403 = vrsqrt.pop %v2371
    %v2404 = vrsqrt.pop %v2372
    %v2405 = vrsqrt.pop %v2373
    %v2406 = vrsqrt.pop %v2374
    %v2407 = vmul.f32 %v2151, %v2375
    %v2408 = vmul.f32 %v2152, %v2376
    %v2409 = vmul.f32 %v2153, %v2377
    %v2410 = vmul.f32 %v2154, %v2378
    %v2411 = vmul.f32 %v2155, %v2379
    %v2412 = vmul.f32 %v2156, %v2380
    %v2413 = vmul.f32 %v2157, %v2381
    %v2414 = vmul.f32 %v2158, %v2382
    %v2415 = vmul.f32 %v2159, %v2383
    %v2416 = vmul.f32 %v2160, %v2384
    %v2417 = vmul.f32 %v2161, %v2385
    %v2418 = vmul.f32 %v2162, %v2386
    %v2419 = vmul.f32 %v2163, %v2387
    %v2420 = vmul.f32 %v2164, %v2388
    %v2421 = vmul.f32 %v2165, %v2389
    %v2422 = vmul.f32 %v2166, %v2390
    %v2423 = vmul.f32 %v2167, %v2391
    %v2424 = vmul.f32 %v2168, %v2392
    %v2425 = vmul.f32 %v2169, %v2393
    %v2426 = vmul.f32 %v2170, %v2394
    %v2427 = vmul.f32 %v2171, %v2395
    %v2428 = vmul.f32 %v2172, %v2396
    %v2429 = vmul.f32 %v2173, %v2397
    %v2430 = vmul.f32 %v2174, %v2398
    %v2431 = vmul.f32 %v2175, %v2399
    %v2432 = vmul.f32 %v2176, %v2400
    %v2433 = vmul.f32 %v2177, %v2401
    %v2434 = vmul.f32 %v2178, %v2402
    %v2435 = vmul.f32 %v2179, %v2403
    %v2436 = vmul.f32 %v2180, %v2404
    %v2437 = vmul.f32 %v2181, %v2405
    %v2438 = vmul.f32 %v2182, %v2406
    %v2440 = vlaneseq
    %v2441 = vshrl.u32 %v2440, 7
    %v2442 = vsub.s32 0, %v2441
    %v2443 = vrot.slane %v2021, %v2442
    %v2445 = vmul.f32 %v2407, %v2443
    %v2446 = vmul.f32 %v2408, %v2443
    %v2447 = vmul.f32 %v2409, %v2443
    %v2448 = vmul.f32 %v2410, %v2443
    %v2449 = vmul.f32 %v2411, %v2443
    %v2450 = vmul.f32 %v2412, %v2443
    %v2451 = vmul.f32 %v2413, %v2443
    %v2452 = vmul.f32 %v2414, %v2443
    %v2453 = vmul.f32 %v2415, %v2443
    %v2454 = vmul.f32 %v2416, %v2443
    %v2455 = vmul.f32 %v2417, %v2443
    %v2456 = vmul.f32 %v2418, %v2443
    %v2457 = vmul.f32 %v2419, %v2443
    %v2458 = vmul.f32 %v2420, %v2443
    %v2459 = vmul.f32 %v2421, %v2443
    %v2460 = vmul.f32 %v2422, %v2443
    %v2461 = vmul.f32 %v2423, %v2443
    %v2462 = vmul.f32 %v2424, %v2443
    %v2463 = vmul.f32 %v2425, %v2443
    %v2464 = vmul.f32 %v2426, %v2443
    %v2465 = vmul.f32 %v2427, %v2443
    %v2466 = vmul.f32 %v2428, %v2443
    %v2467 = vmul.f32 %v2429, %v2443
    %v2468 = vmul.f32 %v2430, %v2443
    %v2469 = vmul.f32 %v2431, %v2443
    %v2470 = vmul.f32 %v2432, %v2443
    %v2471 = vmul.f32 %v2433, %v2443
    %v2472 = vmul.f32 %v2434, %v2443
    %v2473 = vmul.f32 %v2435, %v2443
    %v2474 = vmul.f32 %v2436, %v2443
    %v2475 = vmul.f32 %v2437, %v2443
    %v2476 = vmul.f32 %v2438, %v2443
    %v2478 = vlaneseq
    %v2479 = vshrl.u32 %v2478, 7
    %v2480 = vsub.s32 0, %v2479
    %v2481 = vrot.slane %v2022, %v2480
    %v2483 = vadd.f32 %v2445, %v2481
    %v2484 = vadd.f32 %v2446, %v2481
    %v2485 = vadd.f32 %v2447, %v2481
    %v2486 = vadd.f32 %v2448, %v2481
    %v2487 = vadd.f32 %v2449, %v2481
    %v2488 = vadd.f32 %v2450, %v2481
    %v2489 = vadd.f32 %v2451, %v2481
    %v2490 = vadd.f32 %v2452, %v2481
    %v2491 = vadd.f32 %v2453, %v2481
    %v2492 = vadd.f32 %v2454, %v2481
    %v2493 = vadd.f32 %v2455, %v2481
    %v2494 = vadd.f32 %v2456, %v2481
    %v2495 = vadd.f32 %v2457, %v2481
    %v2496 = vadd.f32 %v2458, %v2481
    %v2497 = vadd.f32 %v2459, %v2481
    %v2498 = vadd.f32 %v2460, %v2481
    %v2499 = vadd.f32 %v2461, %v2481
    %v2500 = vadd.f32 %v2462, %v2481
    %v2501 = vadd.f32 %v2463, %v2481
    %v2502 = vadd.f32 %v2464, %v2481
    %v2503 = vadd.f32 %v2465, %v2481
    %v2504 = vadd.f32 %v2466, %v2481
    %v2505 = vadd.f32 %v2467, %v2481
    %v2506 = vadd.f32 %v2468, %v2481
    %v2507 = vadd.f32 %v2469, %v2481
    %v2508 = vadd.f32 %v2470, %v2481
    %v2509 = vadd.f32 %v2471, %v2481
    %v2510 = vadd.f32 %v2472, %v2481
    %v2511 = vadd.f32 %v2473, %v2481
    %v2512 = vadd.f32 %v2474, %v2481
    %v2513 = vadd.f32 %v2475, %v2481
    %v2514 = vadd.f32 %v2476, %v2481
    %s2515 = scalar_lea.vmem %s3, 64
    %v2516 = vld [vmem:[%s2515] sm:$0xff]
    %v2517 = vld [vmem:[%s2515 + $0x8] sm:$0xff]
    %v2518 = vld [vmem:[%s2515 + $0x10] sm:$0xff]
    %v2519 = vld [vmem:[%s2515 + $0x18] sm:$0xff]
    %v2520 = vld [vmem:[%s2515 + $0x20] sm:$0xff]
    %v2521 = vld [vmem:[%s2515 + $0x28] sm:$0xff]
    %v2522 = vld [vmem:[%s2515 + $0x30] sm:$0xff]
    %v2523 = vld [vmem:[%s2515 + $0x38] sm:$0xff]
    %s2524 = scalar_lea.vmem %s4, 1
    %v2525 = vld [vmem:[%s2524] sm:$0x1]
    %v2527 = vlaneseq
    %v2528 = vshrl.u32 %v2527, 7
    %v2529 = vsub.s32 0, %v2528
    %v2530 = vrot.slane %v2525, %v2529
    %v2533 = vsel %vm431, %v2483, 0
    %v2536 = vsel %vm431, %v2484, 0
    %v2539 = vsel %vm431, %v2485, 0
    %v2542 = vsel %vm431, %v2486, 0
    %v2545 = vsel %vm431, %v2487, 0
    %v2548 = vsel %vm431, %v2488, 0
    %v2551 = vsel %vm431, %v2489, 0
    %v2554 = vsel %vm431, %v2490, 0
    %v2557 = vsel %vm431, %v2491, 0
    %v2560 = vsel %vm431, %v2492, 0
    %v2563 = vsel %vm431, %v2493, 0
    %v2566 = vsel %vm431, %v2494, 0
    %v2569 = vsel %vm431, %v2495, 0
    %v2572 = vsel %vm431, %v2496, 0
    %v2575 = vsel %vm431, %v2497, 0
    %v2578 = vsel %vm431, %v2498, 0
    %v2581 = vsel %vm431, %v2499, 0
    %v2584 = vsel %vm431, %v2500, 0
    %v2587 = vsel %vm431, %v2501, 0
    %v2590 = vsel %vm431, %v2502, 0
    %v2593 = vsel %vm431, %v2503, 0
    %v2596 = vsel %vm431, %v2504, 0
    %v2599 = vsel %vm431, %v2505, 0
    %v2602 = vsel %vm431, %v2506, 0
    %v2605 = vsel %vm431, %v2507, 0
    %v2608 = vsel %vm431, %v2508, 0
    %v2611 = vsel %vm431, %v2509, 0
    %v2614 = vsel %vm431, %v2510, 0
    %v2617 = vsel %vm431, %v2511, 0
    %v2620 = vsel %vm431, %v2512, 0
    %v2623 = vsel %vm431, %v2513, 0
    %v2626 = vsel %vm431, %v2514, 0
    %2628 = vmatprep.subr.mxu0 0.0
    %2629 = vmatpush1.msra.mxu0 %v2516
    %2630 = vmatprep.subr.mxu0 0.0
    %2631 = vmatpush1.msra.mxu0 %v2517
    %2632 = vmatprep.subr.mxu0 0.0
    %2633 = vmatpush1.msra.mxu0 %v2518
    %2634 = vmatprep.subr.mxu0 0.0
    %2635 = vmatpush1.msra.mxu0 %v2519
    %2636 = vmatprep.subr.mxu0 0.0
    %2637 = vmatpush1.msra.mxu0 %v2520
    %2638 = vmatprep.subr.mxu0 0.0
    %2639 = vmatpush1.msra.mxu0 %v2521
    %2640 = vmatprep.subr.mxu0 0.0
    %2641 = vmatpush1.msra.mxu0 %v2522
    %2642 = vmatprep.subr.mxu0 0.0
    %2643 = vmatpush1.msra.mxu0 %v2523
    %2644 = vmatprep.subr.mxu0 0.0
    %2645 = vmatpush1.msra.mxu0 0.0
    %2646 = vmatprep.subr.mxu0 0.0
    %2647 = vmatpush1.msra.mxu0 0.0
    %2648 = vmatprep.subr.mxu0 0.0
    %2649 = vmatpush1.msra.mxu0 0.0
    %2650 = vmatprep.subr.mxu0 0.0
    %2651 = vmatpush1.msra.mxu0 0.0
    %2652 = vmatprep.subr.mxu0 0.0
    %2653 = vmatpush1.msra.mxu0 0.0
    %2654 = vmatprep.subr.mxu0 0.0
    %2655 = vmatpush1.msra.mxu0 0.0
    %2656 = vmatprep.subr.mxu0 0.0
    %2657 = vmatpush1.msra.mxu0 0.0
    %2658 = vmatprep.subr.mxu0 0.0
    %2659 = vmatpush1.msra.mxu0 0.0
    %2660 = vmatprep.subr.mxu0 0.0
    %2661 = vmatpush1.msra.mxu0 0.0
    %2662 = vmatprep.subr.mxu0 0.0
    %2663 = vmatpush1.msra.mxu0 0.0
    %2664 = vmatprep.subr.mxu0 0.0
    %2665 = vmatpush1.msra.mxu0 0.0
    %2666 = vmatprep.subr.mxu0 0.0
    %2667 = vmatpush1.msra.mxu0 0.0
    %2668 = vmatprep.subr.mxu0 0.0
    %2669 = vmatpush1.msra.mxu0 0.0
    %2670 = vmatprep.subr.mxu0 0.0
    %2671 = vmatpush1.msra.mxu0 0.0
    %2672 = vmatprep.subr.mxu0 0.0
    %2673 = vmatpush1.msra.mxu0 0.0
    %2674 = vmatprep.subr.mxu0 0.0
    %2675 = vmatpush1.msra.mxu0 0.0
    %2676 = vmatprep.subr.mxu0 0.0
    %2677 = vmatpush1.msra.mxu0 0.0
    %2678 = vmatprep.subr.mxu0 0.0
    %2679 = vmatpush1.msra.mxu0 0.0
    %2680 = vmatprep.subr.mxu0 0.0
    %2681 = vmatpush1.msra.mxu0 0.0
    %2682 = vmatprep.subr.mxu0 0.0
    %2683 = vmatpush1.msra.mxu0 0.0
    %2684 = vmatprep.subr.mxu0 0.0
    %2685 = vmatpush1.msra.mxu0 0.0
    %2686 = vmatprep.subr.mxu0 0.0
    %2687 = vmatpush1.msra.mxu0 0.0
    %2688 = vmatprep.subr.mxu0 0.0
    %2689 = vmatpush1.msra.mxu0 0.0
    %2690 = vmatprep.subr.mxu0 0.0
    %2691 = vmatpush1.msra.mxu0 0.0
    %2692 = vmatprep.mubr.f32.mxu0 0.0
    %2693 = vmatmul.mubr.f32.gmra.mrb[0].mxu0 %v2533
    %v2694 = vpop.f32.mrb[0].mxu0
    %v2695 = vadd.f32 %v2530, %v2694
    %v2696 = vpop.f32.mrb[0].mxu0
    %2697 = vmatprep.mubr.f32.mxu0 0.0
    %2698 = vmatmul.mubr.f32.gmra.mrb[0].mxu0 %v2536
    %v2699 = vpop.f32.mrb[0].mxu0
    %v2700 = vadd.f32 %v2530, %v2699
    %v2701 = vpop.f32.mrb[0].mxu0
    %2702 = vmatprep.mubr.f32.mxu0 0.0
    %2703 = vmatmul.mubr.f32.gmra.mrb[0].mxu0 %v2539
    %v2704 = vpop.f32.mrb[0].mxu0
    %v2705 = vadd.f32 %v2530, %v2704
    %v2706 = vpop.f32.mrb[0].mxu0
    %2707 = vmatprep.mubr.f32.mxu0 0.0
    %2708 = vmatmul.mubr.f32.gmra.mrb[0].mxu0 %v2542
    %v2709 = vpop.f32.mrb[0].mxu0
    %v2710 = vadd.f32 %v2530, %v2709
    %v2711 = vpop.f32.mrb[0].mxu0
    %2712 = vmatprep.mubr.f32.mxu0 0.0
    %2713 = vmatmul.mubr.f32.gmra.mrb[0].mxu0 %v2545
    %v2714 = vpop.f32.mrb[0].mxu0
    %v2715 = vadd.f32 %v2530, %v2714
    %v2716 = vpop.f32.mrb[0].mxu0
    %2717 = vmatprep.mubr.f32.mxu0 0.0
    %2718 = vmatmul.mubr.f32.gmra.mrb[0].mxu0 %v2548
    %v2719 = vpop.f32.mrb[0].mxu0
    %v2720 = vadd.f32 %v2530, %v2719
    %v2721 = vpop.f32.mrb[0].mxu0
    %2722 = vmatprep.mubr.f32.mxu0 0.0
    %2723 = vmatmul.mubr.f32.gmra.mrb[0].mxu0 %v2551
    %v2724 = vpop.f32.mrb[0].mxu0
    %v2725 = vadd.f32 %v2530, %v2724
    %v2726 = vpop.f32.mrb[0].mxu0
    %2727 = vmatprep.mubr.f32.mxu0 0.0
    %2728 = vmatmul.mubr.f32.gmra.mrb[0].mxu0 %v2554
    %v2729 = vpop.f32.mrb[0].mxu0
    %v2730 = vadd.f32 %v2530, %v2729
    %v2731 = vpop.f32.mrb[0].mxu0
    %2732 = vmatprep.mubr.f32.mxu0 0.0
    %2733 = vmatmul.mubr.f32.gmra.mrb[0].mxu0 %v2557
    %v2734 = vpop.f32.mrb[0].mxu0
    %v2735 = vadd.f32 %v2530, %v2734
    %v2736 = vpop.f32.mrb[0].mxu0
    %2737 = vmatprep.mubr.f32.mxu0 0.0
    %2738 = vmatmul.mubr.f32.gmra.mrb[0].mxu0 %v2560
    %v2739 = vpop.f32.mrb[0].mxu0
    %v2740 = vadd.f32 %v2530, %v2739
    %v2741 = vpop.f32.mrb[0].mxu0
    %2742 = vmatprep.mubr.f32.mxu0 0.0
    %2743 = vmatmul.mubr.f32.gmra.mrb[0].mxu0 %v2563
    %v2744 = vpop.f32.mrb[0].mxu0
    %v2745 = vadd.f32 %v2530, %v2744
    %v2746 = vpop.f32.mrb[0].mxu0
    %2747 = vmatprep.mubr.f32.mxu0 0.0
    %2748 = vmatmul.mubr.f32.gmra.mrb[0].mxu0 %v2566
    %v2749 = vpop.f32.mrb[0].mxu0
    %v2750 = vadd.f32 %v2530, %v2749
    %v2751 = vpop.f32.mrb[0].mxu0
    %2752 = vmatprep.mubr.f32.mxu0 0.0
    %2753 = vmatmul.mubr.f32.gmra.mrb[0].mxu0 %v2569
    %v2754 = vpop.f32.mrb[0].mxu0
    %v2755 = vadd.f32 %v2530, %v2754
    %v2756 = vpop.f32.mrb[0].mxu0
    %2757 = vmatprep.mubr.f32.mxu0 0.0
    %2758 = vmatmul.mubr.f32.gmra.mrb[0].mxu0 %v2572
    %v2759 = vpop.f32.mrb[0].mxu0
    %v2760 = vadd.f32 %v2530, %v2759
    %v2761 = vpop.f32.mrb[0].mxu0
    %2762 = vmatprep.mubr.f32.mxu0 0.0
    %2763 = vmatmul.mubr.f32.gmra.mrb[0].mxu0 %v2575
    %v2764 = vpop.f32.mrb[0].mxu0
    %v2765 = vadd.f32 %v2530, %v2764
    %v2766 = vpop.f32.mrb[0].mxu0
    %2767 = vmatprep.mubr.f32.mxu0 0.0
    %2768 = vmatmul.mubr.f32.gmra.mrb[0].mxu0 %v2578
    %v2769 = vpop.f32.mrb[0].mxu0
    %v2770 = vadd.f32 %v2530, %v2769
    %v2771 = vpop.f32.mrb[0].mxu0
    %2772 = vmatprep.mubr.f32.mxu0 0.0
    %2773 = vmatmul.mubr.f32.gmra.mrb[0].mxu0 %v2581
    %v2774 = vpop.f32.mrb[0].mxu0
    %v2775 = vadd.f32 %v2530, %v2774
    %v2776 = vpop.f32.mrb[0].mxu0
    %2777 = vmatprep.mubr.f32.mxu0 0.0
    %2778 = vmatmul.mubr.f32.gmra.mrb[0].mxu0 %v2584
    %v2779 = vpop.f32.mrb[0].mxu0
    %v2780 = vadd.f32 %v2530, %v2779
    %v2781 = vpop.f32.mrb[0].mxu0
    %2782 = vmatprep.mubr.f32.mxu0 0.0
    %2783 = vmatmul.mubr.f32.gmra.mrb[0].mxu0 %v2587
    %v2784 = vpop.f32.mrb[0].mxu0
    %v2785 = vadd.f32 %v2530, %v2784
    %v2786 = vpop.f32.mrb[0].mxu0
    %2787 = vmatprep.mubr.f32.mxu0 0.0
    %2788 = vmatmul.mubr.f32.gmra.mrb[0].mxu0 %v2590
    %v2789 = vpop.f32.mrb[0].mxu0
    %v2790 = vadd.f32 %v2530, %v2789
    %v2791 = vpop.f32.mrb[0].mxu0
    %2792 = vmatprep.mubr.f32.mxu0 0.0
    %2793 = vmatmul.mubr.f32.gmra.mrb[0].mxu0 %v2593
    %v2794 = vpop.f32.mrb[0].mxu0
    %v2795 = vadd.f32 %v2530, %v2794
    %v2796 = vpop.f32.mrb[0].mxu0
    %2797 = vmatprep.mubr.f32.mxu0 0.0
    %2798 = vmatmul.mubr.f32.gmra.mrb[0].mxu0 %v2596
    %v2799 = vpop.f32.mrb[0].mxu0
    %v2800 = vadd.f32 %v2530, %v2799
    %v2801 = vpop.f32.mrb[0].mxu0
    %2802 = vmatprep.mubr.f32.mxu0 0.0
    %2803 = vmatmul.mubr.f32.gmra.mrb[0].mxu0 %v2599
    %v2804 = vpop.f32.mrb[0].mxu0
    %v2805 = vadd.f32 %v2530, %v2804
    %v2806 = vpop.f32.mrb[0].mxu0
    %2807 = vmatprep.mubr.f32.mxu0 0.0
    %2808 = vmatmul.mubr.f32.gmra.mrb[0].mxu0 %v2602
    %v2809 = vpop.f32.mrb[0].mxu0
    %v2810 = vadd.f32 %v2530, %v2809
    %v2811 = vpop.f32.mrb[0].mxu0
    %2812 = vmatprep.mubr.f32.mxu0 0.0
    %2813 = vmatmul.mubr.f32.gmra.mrb[0].mxu0 %v2605
    %v2814 = vpop.f32.mrb[0].mxu0
    %v2815 = vadd.f32 %v2530, %v2814
    %v2816 = vpop.f32.mrb[0].mxu0
    %2817 = vmatprep.mubr.f32.mxu0 0.0
    %2818 = vmatmul.mubr.f32.gmra.mrb[0].mxu0 %v2608
    %v2819 = vpop.f32.mrb[0].mxu0
    %v2820 = vadd.f32 %v2530, %v2819
    %v2821 = vpop.f32.mrb[0].mxu0
    %2822 = vmatprep.mubr.f32.mxu0 0.0
    %2823 = vmatmul.mubr.f32.gmra.mrb[0].mxu0 %v2611
    %v2824 = vpop.f32.mrb[0].mxu0
    %v2825 = vadd.f32 %v2530, %v2824
    %v2826 = vpop.f32.mrb[0].mxu0
    %2827 = vmatprep.mubr.f32.mxu0 0.0
    %2828 = vmatmul.mubr.f32.gmra.mrb[0].mxu0 %v2614
    %v2829 = vpop.f32.mrb[0].mxu0
    %v2830 = vadd.f32 %v2530, %v2829
    %v2831 = vpop.f32.mrb[0].mxu0
    %2832 = vmatprep.mubr.f32.mxu0 0.0
    %2833 = vmatmul.mubr.f32.gmra.mrb[0].mxu0 %v2617
    %v2834 = vpop.f32.mrb[0].mxu0
    %v2835 = vadd.f32 %v2530, %v2834
    %v2836 = vpop.f32.mrb[0].mxu0
    %2837 = vmatprep.mubr.f32.mxu0 0.0
    %2838 = vmatmul.mubr.f32.gmra.mrb[0].mxu0 %v2620
    %v2839 = vpop.f32.mrb[0].mxu0
    %v2840 = vadd.f32 %v2530, %v2839
    %v2841 = vpop.f32.mrb[0].mxu0
    %2842 = vmatprep.mubr.f32.mxu0 0.0
    %2843 = vmatmul.mubr.f32.gmra.mrb[0].mxu0 %v2623
    %v2844 = vpop.f32.mrb[0].mxu0
    %v2845 = vadd.f32 %v2530, %v2844
    %v2846 = vpop.f32.mrb[0].mxu0
    %2847 = vmatprep.mubr.f32.mxu0 0.0
    %2848 = vmatmul.mubr.f32.gmra.mrb[0].mxu0 %v2626
    %v2849 = vpop.f32.mrb[0].mxu0
    %v2850 = vadd.f32 %v2530, %v2849
    %v2851 = vpop.f32.mrb[0].mxu0
    %2852 = vdwg.mxu0
    %v2853 = vadd.f32 %v2483, %v2695
    %v2854 = vadd.f32 %v2484, %v2700
    %v2855 = vadd.f32 %v2485, %v2705
    %v2856 = vadd.f32 %v2486, %v2710
    %v2857 = vadd.f32 %v2487, %v2715
    %v2858 = vadd.f32 %v2488, %v2720
    %v2859 = vadd.f32 %v2489, %v2725
    %v2860 = vadd.f32 %v2490, %v2730
    %v2861 = vadd.f32 %v2491, %v2735
    %v2862 = vadd.f32 %v2492, %v2740
    %v2863 = vadd.f32 %v2493, %v2745
    %v2864 = vadd.f32 %v2494, %v2750
    %v2865 = vadd.f32 %v2495, %v2755
    %v2866 = vadd.f32 %v2496, %v2760
    %v2867 = vadd.f32 %v2497, %v2765
    %v2868 = vadd.f32 %v2498, %v2770
    %v2869 = vadd.f32 %v2499, %v2775
    %v2870 = vadd.f32 %v2500, %v2780
    %v2871 = vadd.f32 %v2501, %v2785
    %v2872 = vadd.f32 %v2502, %v2790
    %v2873 = vadd.f32 %v2503, %v2795
    %v2874 = vadd.f32 %v2504, %v2800
    %v2875 = vadd.f32 %v2505, %v2805
    %v2876 = vadd.f32 %v2506, %v2810
    %v2877 = vadd.f32 %v2507, %v2815
    %v2878 = vadd.f32 %v2508, %v2820
    %v2879 = vadd.f32 %v2509, %v2825
    %v2880 = vadd.f32 %v2510, %v2830
    %v2881 = vadd.f32 %v2511, %v2835
    %v2882 = vadd.f32 %v2512, %v2840
    %v2883 = vadd.f32 %v2513, %v2845
    %v2884 = vadd.f32 %v2514, %v2850
    %s2885 = scalar_lea.vmem %s5, 1
    %v2886 = vld [vmem:[%s2885] sm:$0x1]
    %s2887 = scalar_lea.vmem %s6, 1
    %v2888 = vld [vmem:[%s2887] sm:$0x1]
    %v2889 = vsel %vm431, %v2853, 0.0
    %2890 = vadd.xlane.f32.xlu0 %v2889
    %v2891 = vpop.xlane.xlu0 %2890
    %v2892 = vsel %vm431, %v2854, 0.0
    %2893 = vadd.xlane.f32.xlu0 %v2892
    %v2894 = vpop.xlane.xlu0 %2893
    %v2895 = vsel %vm431, %v2855, 0.0
    %2896 = vadd.xlane.f32.xlu0 %v2895
    %v2897 = vpop.xlane.xlu0 %2896
    %v2898 = vsel %vm431, %v2856, 0.0
    %2899 = vadd.xlane.f32.xlu0 %v2898
    %v2900 = vpop.xlane.xlu0 %2899
    %v2901 = vsel %vm431, %v2857, 0.0
    %2902 = vadd.xlane.f32.xlu0 %v2901
    %v2903 = vpop.xlane.xlu0 %2902
    %v2904 = vsel %vm431, %v2858, 0.0
    %2905 = vadd.xlane.f32.xlu0 %v2904
    %v2906 = vpop.xlane.xlu0 %2905
    %v2907 = vsel %vm431, %v2859, 0.0
    %2908 = vadd.xlane.f32.xlu0 %v2907
    %v2909 = vpop.xlane.xlu0 %2908
    %v2910 = vsel %vm431, %v2860, 0.0
    %2911 = vadd.xlane.f32.xlu0 %v2910
    %v2912 = vpop.xlane.xlu0 %2911
    %v2913 = vsel %vm431, %v2861, 0.0
    %2914 = vadd.xlane.f32.xlu0 %v2913
    %v2915 = vpop.xlane.xlu0 %2914
    %v2916 = vsel %vm431, %v2862, 0.0
    %2917 = vadd.xlane.f32.xlu0 %v2916
    %v2918 = vpop.xlane.xlu0 %2917
    %v2919 = vsel %vm431, %v2863, 0.0
    %2920 = vadd.xlane.f32.xlu0 %v2919
    %v2921 = vpop.xlane.xlu0 %2920
    %v2922 = vsel %vm431, %v2864, 0.0
    %2923 = vadd.xlane.f32.xlu0 %v2922
    %v2924 = vpop.xlane.xlu0 %2923
    %v2925 = vsel %vm431, %v2865, 0.0
    %2926 = vadd.xlane.f32.xlu0 %v2925
    %v2927 = vpop.xlane.xlu0 %2926
    %v2928 = vsel %vm431, %v2866, 0.0
    %2929 = vadd.xlane.f32.xlu0 %v2928
    %v2930 = vpop.xlane.xlu0 %2929
    %v2931 = vsel %vm431, %v2867, 0.0
    %2932 = vadd.xlane.f32.xlu0 %v2931
    %v2933 = vpop.xlane.xlu0 %2932
    %v2934 = vsel %vm431, %v2868, 0.0
    %2935 = vadd.xlane.f32.xlu0 %v2934
    %v2936 = vpop.xlane.xlu0 %2935
    %v2937 = vsel %vm431, %v2869, 0.0
    %2938 = vadd.xlane.f32.xlu0 %v2937
    %v2939 = vpop.xlane.xlu0 %2938
    %v2940 = vsel %vm431, %v2870, 0.0
    %2941 = vadd.xlane.f32.xlu0 %v2940
    %v2942 = vpop.xlane.xlu0 %2941
    %v2943 = vsel %vm431, %v2871, 0.0
    %2944 = vadd.xlane.f32.xlu0 %v2943
    %v2945 = vpop.xlane.xlu0 %2944
    %v2946 = vsel %vm431, %v2872, 0.0
    %2947 = vadd.xlane.f32.xlu0 %v2946
    %v2948 = vpop.xlane.xlu0 %2947
    %v2949 = vsel %vm431, %v2873, 0.0
    %2950 = vadd.xlane.f32.xlu0 %v2949
    %v2951 = vpop.xlane.xlu0 %2950
    %v2952 = vsel %vm431, %v2874, 0.0
    %2953 = vadd.xlane.f32.xlu0 %v2952
    %v2954 = vpop.xlane.xlu0 %2953
    %v2955 = vsel %vm431, %v2875, 0.0
    %2956 = vadd.xlane.f32.xlu0 %v2955
    %v2957 = vpop.xlane.xlu0 %2956
    %v2958 = vsel %vm431, %v2876, 0.0
    %2959 = vadd.xlane.f32.xlu0 %v2958
    %v2960 = vpop.xlane.xlu0 %2959
    %v2961 = vsel %vm431, %v2877, 0.0
    %2962 = vadd.xlane.f32.xlu0 %v2961
    %v2963 = vpop.xlane.xlu0 %2962
    %v2964 = vsel %vm431, %v2878, 0.0
    %2965 = vadd.xlane.f32.xlu0 %v2964
    %v2966 = vpop.xlane.xlu0 %2965
    %v2967 = vsel %vm431, %v2879, 0.0
    %2968 = vadd.xlane.f32.xlu0 %v2967
    %v2969 = vpop.xlane.xlu0 %2968
    %v2970 = vsel %vm431, %v2880, 0.0
    %2971 = vadd.xlane.f32.xlu0 %v2970
    %v2972 = vpop.xlane.xlu0 %2971
    %v2973 = vsel %vm431, %v2881, 0.0
    %2974 = vadd.xlane.f32.xlu0 %v2973
    %v2975 = vpop.xlane.xlu0 %2974
    %v2976 = vsel %vm431, %v2882, 0.0
    %2977 = vadd.xlane.f32.xlu0 %v2976
    %v2978 = vpop.xlane.xlu0 %2977
    %v2979 = vsel %vm431, %v2883, 0.0
    %2980 = vadd.xlane.f32.xlu0 %v2979
    %v2981 = vpop.xlane.xlu0 %2980
    %v2982 = vsel %vm431, %v2884, 0.0
    %2983 = vadd.xlane.f32.xlu0 %v2982
    %v2984 = vpop.xlane.xlu0 %2983
    %v2985 = vmul.f32 %v2891, %v883
    %v2986 = vmul.f32 %v2894, %v883
    %v2987 = vmul.f32 %v2897, %v883
    %v2988 = vmul.f32 %v2900, %v883
    %v2989 = vmul.f32 %v2903, %v883
    %v2990 = vmul.f32 %v2906, %v883
    %v2991 = vmul.f32 %v2909, %v883
    %v2992 = vmul.f32 %v2912, %v883
    %v2993 = vmul.f32 %v2915, %v883
    %v2994 = vmul.f32 %v2918, %v883
    %v2995 = vmul.f32 %v2921, %v883
    %v2996 = vmul.f32 %v2924, %v883
    %v2997 = vmul.f32 %v2927, %v883
    %v2998 = vmul.f32 %v2930, %v883
    %v2999 = vmul.f32 %v2933, %v883
    %v3000 = vmul.f32 %v2936, %v883
    %v3001 = vmul.f32 %v2939, %v883
    %v3002 = vmul.f32 %v2942, %v883
    %v3003 = vmul.f32 %v2945, %v883
    %v3004 = vmul.f32 %v2948, %v883
    %v3005 = vmul.f32 %v2951, %v883
    %v3006 = vmul.f32 %v2954, %v883
    %v3007 = vmul.f32 %v2957, %v883
    %v3008 = vmul.f32 %v2960, %v883
    %v3009 = vmul.f32 %v2963, %v883
    %v3010 = vmul.f32 %v2966, %v883
    %v3011 = vmul.f32 %v2969, %v883
    %v3012 = vmul.f32 %v2972, %v883
    %v3013 = vmul.f32 %v2975, %v883
    %v3014 = vmul.f32 %v2978, %v883
    %v3015 = vmul.f32 %v2981, %v883
    %v3016 = vmul.f32 %v2984, %v883
    %v3017 = vsub.f32 %v2853, %v2985
    %v3018 = vsub.f32 %v2854, %v2986
    %v3019 = vsub.f32 %v2855, %v2987
    %v3020 = vsub.f32 %v2856, %v2988
    %v3021 = vsub.f32 %v2857, %v2989
    %v3022 = vsub.f32 %v2858, %v2990
    %v3023 = vsub.f32 %v2859, %v2991
    %v3024 = vsub.f32 %v2860, %v2992
    %v3025 = vsub.f32 %v2861, %v2993
    %v3026 = vsub.f32 %v2862, %v2994
    %v3027 = vsub.f32 %v2863, %v2995
    %v3028 = vsub.f32 %v2864, %v2996
    %v3029 = vsub.f32 %v2865, %v2997
    %v3030 = vsub.f32 %v2866, %v2998
    %v3031 = vsub.f32 %v2867, %v2999
    %v3032 = vsub.f32 %v2868, %v3000
    %v3033 = vsub.f32 %v2869, %v3001
    %v3034 = vsub.f32 %v2870, %v3002
    %v3035 = vsub.f32 %v2871, %v3003
    %v3036 = vsub.f32 %v2872, %v3004
    %v3037 = vsub.f32 %v2873, %v3005
    %v3038 = vsub.f32 %v2874, %v3006
    %v3039 = vsub.f32 %v2875, %v3007
    %v3040 = vsub.f32 %v2876, %v3008
    %v3041 = vsub.f32 %v2877, %v3009
    %v3042 = vsub.f32 %v2878, %v3010
    %v3043 = vsub.f32 %v2879, %v3011
    %v3044 = vsub.f32 %v2880, %v3012
    %v3045 = vsub.f32 %v2881, %v3013
    %v3046 = vsub.f32 %v2882, %v3014
    %v3047 = vsub.f32 %v2883, %v3015
    %v3048 = vsub.f32 %v2884, %v3016
    %v3049 = vmul.f32 %v3017, %v3017
    %v3050 = vmul.f32 %v3018, %v3018
    %v3051 = vmul.f32 %v3019, %v3019
    %v3052 = vmul.f32 %v3020, %v3020
    %v3053 = vmul.f32 %v3021, %v3021
    %v3054 = vmul.f32 %v3022, %v3022
    %v3055 = vmul.f32 %v3023, %v3023
    %v3056 = vmul.f32 %v3024, %v3024
    %v3057 = vmul.f32 %v3025, %v3025
    %v3058 = vmul.f32 %v3026, %v3026
    %v3059 = vmul.f32 %v3027, %v3027
    %v3060 = vmul.f32 %v3028, %v3028
    %v3061 = vmul.f32 %v3029, %v3029
    %v3062 = vmul.f32 %v3030, %v3030
    %v3063 = vmul.f32 %v3031, %v3031
    %v3064 = vmul.f32 %v3032, %v3032
    %v3065 = vmul.f32 %v3033, %v3033
    %v3066 = vmul.f32 %v3034, %v3034
    %v3067 = vmul.f32 %v3035, %v3035
    %v3068 = vmul.f32 %v3036, %v3036
    %v3069 = vmul.f32 %v3037, %v3037
    %v3070 = vmul.f32 %v3038, %v3038
    %v3071 = vmul.f32 %v3039, %v3039
    %v3072 = vmul.f32 %v3040, %v3040
    %v3073 = vmul.f32 %v3041, %v3041
    %v3074 = vmul.f32 %v3042, %v3042
    %v3075 = vmul.f32 %v3043, %v3043
    %v3076 = vmul.f32 %v3044, %v3044
    %v3077 = vmul.f32 %v3045, %v3045
    %v3078 = vmul.f32 %v3046, %v3046
    %v3079 = vmul.f32 %v3047, %v3047
    %v3080 = vmul.f32 %v3048, %v3048
    %v3081 = vsel %vm431, %v3049, 0.0
    %3082 = vadd.xlane.f32.xlu0 %v3081
    %v3083 = vpop.xlane.xlu0 %3082
    %v3084 = vsel %vm431, %v3050, 0.0
    %3085 = vadd.xlane.f32.xlu0 %v3084
    %v3086 = vpop.xlane.xlu0 %3085
    %v3087 = vsel %vm431, %v3051, 0.0
    %3088 = vadd.xlane.f32.xlu0 %v3087
    %v3089 = vpop.xlane.xlu0 %3088
    %v3090 = vsel %vm431, %v3052, 0.0
    %3091 = vadd.xlane.f32.xlu0 %v3090
    %v3092 = vpop.xlane.xlu0 %3091
    %v3093 = vsel %vm431, %v3053, 0.0
    %3094 = vadd.xlane.f32.xlu0 %v3093
    %v3095 = vpop.xlane.xlu0 %3094
    %v3096 = vsel %vm431, %v3054, 0.0
    %3097 = vadd.xlane.f32.xlu0 %v3096
    %v3098 = vpop.xlane.xlu0 %3097
    %v3099 = vsel %vm431, %v3055, 0.0
    %3100 = vadd.xlane.f32.xlu0 %v3099
    %v3101 = vpop.xlane.xlu0 %3100
    %v3102 = vsel %vm431, %v3056, 0.0
    %3103 = vadd.xlane.f32.xlu0 %v3102
    %v3104 = vpop.xlane.xlu0 %3103
    %v3105 = vsel %vm431, %v3057, 0.0
    %3106 = vadd.xlane.f32.xlu0 %v3105
    %v3107 = vpop.xlane.xlu0 %3106
    %v3108 = vsel %vm431, %v3058, 0.0
    %3109 = vadd.xlane.f32.xlu0 %v3108
    %v3110 = vpop.xlane.xlu0 %3109
    %v3111 = vsel %vm431, %v3059, 0.0
    %3112 = vadd.xlane.f32.xlu0 %v3111
    %v3113 = vpop.xlane.xlu0 %3112
    %v3114 = vsel %vm431, %v3060, 0.0
    %3115 = vadd.xlane.f32.xlu0 %v3114
    %v3116 = vpop.xlane.xlu0 %3115
    %v3117 = vsel %vm431, %v3061, 0.0
    %3118 = vadd.xlane.f32.xlu0 %v3117
    %v3119 = vpop.xlane.xlu0 %3118
    %v3120 = vsel %vm431, %v3062, 0.0
    %3121 = vadd.xlane.f32.xlu0 %v3120
    %v3122 = vpop.xlane.xlu0 %3121
    %v3123 = vsel %vm431, %v3063, 0.0
    %3124 = vadd.xlane.f32.xlu0 %v3123
    %v3125 = vpop.xlane.xlu0 %3124
    %v3126 = vsel %vm431, %v3064, 0.0
    %3127 = vadd.xlane.f32.xlu0 %v3126
    %v3128 = vpop.xlane.xlu0 %3127
    %v3129 = vsel %vm431, %v3065, 0.0
    %3130 = vadd.xlane.f32.xlu0 %v3129
    %v3131 = vpop.xlane.xlu0 %3130
    %v3132 = vsel %vm431, %v3066, 0.0
    %3133 = vadd.xlane.f32.xlu0 %v3132
    %v3134 = vpop.xlane.xlu0 %3133
    %v3135 = vsel %vm431, %v3067, 0.0
    %3136 = vadd.xlane.f32.xlu0 %v3135
    %v3137 = vpop.xlane.xlu0 %3136
    %v3138 = vsel %vm431, %v3068, 0.0
    %3139 = vadd.xlane.f32.xlu0 %v3138
    %v3140 = vpop.xlane.xlu0 %3139
    %v3141 = vsel %vm431, %v3069, 0.0
    %3142 = vadd.xlane.f32.xlu0 %v3141
    %v3143 = vpop.xlane.xlu0 %3142
    %v3144 = vsel %vm431, %v3070, 0.0
    %3145 = vadd.xlane.f32.xlu0 %v3144
    %v3146 = vpop.xlane.xlu0 %3145
    %v3147 = vsel %vm431, %v3071, 0.0
    %3148 = vadd.xlane.f32.xlu0 %v3147
    %v3149 = vpop.xlane.xlu0 %3148
    %v3150 = vsel %vm431, %v3072, 0.0
    %3151 = vadd.xlane.f32.xlu0 %v3150
    %v3152 = vpop.xlane.xlu0 %3151
    %v3153 = vsel %vm431, %v3073, 0.0
    %3154 = vadd.xlane.f32.xlu0 %v3153
    %v3155 = vpop.xlane.xlu0 %3154
    %v3156 = vsel %vm431, %v3074, 0.0
    %3157 = vadd.xlane.f32.xlu0 %v3156
    %v3158 = vpop.xlane.xlu0 %3157
    %v3159 = vsel %vm431, %v3075, 0.0
    %3160 = vadd.xlane.f32.xlu0 %v3159
    %v3161 = vpop.xlane.xlu0 %3160
    %v3162 = vsel %vm431, %v3076, 0.0
    %3163 = vadd.xlane.f32.xlu0 %v3162
    %v3164 = vpop.xlane.xlu0 %3163
    %v3165 = vsel %vm431, %v3077, 0.0
    %3166 = vadd.xlane.f32.xlu0 %v3165
    %v3167 = vpop.xlane.xlu0 %3166
    %v3168 = vsel %vm431, %v3078, 0.0
    %3169 = vadd.xlane.f32.xlu0 %v3168
    %v3170 = vpop.xlane.xlu0 %3169
    %v3171 = vsel %vm431, %v3079, 0.0
    %3172 = vadd.xlane.f32.xlu0 %v3171
    %v3173 = vpop.xlane.xlu0 %3172
    %v3174 = vsel %vm431, %v3080, 0.0
    %3175 = vadd.xlane.f32.xlu0 %v3174
    %v3176 = vpop.xlane.xlu0 %3175
    %v3177 = vmul.f32 %v3083, %v883
    %v3178 = vmul.f32 %v3086, %v883
    %v3179 = vmul.f32 %v3089, %v883
    %v3180 = vmul.f32 %v3092, %v883
    %v3181 = vmul.f32 %v3095, %v883
    %v3182 = vmul.f32 %v3098, %v883
    %v3183 = vmul.f32 %v3101, %v883
    %v3184 = vmul.f32 %v3104, %v883
    %v3185 = vmul.f32 %v3107, %v883
    %v3186 = vmul.f32 %v3110, %v883
    %v3187 = vmul.f32 %v3113, %v883
    %v3188 = vmul.f32 %v3116, %v883
    %v3189 = vmul.f32 %v3119, %v883
    %v3190 = vmul.f32 %v3122, %v883
    %v3191 = vmul.f32 %v3125, %v883
    %v3192 = vmul.f32 %v3128, %v883
    %v3193 = vmul.f32 %v3131, %v883
    %v3194 = vmul.f32 %v3134, %v883
    %v3195 = vmul.f32 %v3137, %v883
    %v3196 = vmul.f32 %v3140, %v883
    %v3197 = vmul.f32 %v3143, %v883
    %v3198 = vmul.f32 %v3146, %v883
    %v3199 = vmul.f32 %v3149, %v883
    %v3200 = vmul.f32 %v3152, %v883
    %v3201 = vmul.f32 %v3155, %v883
    %v3202 = vmul.f32 %v3158, %v883
    %v3203 = vmul.f32 %v3161, %v883
    %v3204 = vmul.f32 %v3164, %v883
    %v3205 = vmul.f32 %v3167, %v883
    %v3206 = vmul.f32 %v3170, %v883
    %v3207 = vmul.f32 %v3173, %v883
    %v3208 = vmul.f32 %v3176, %v883
    %v3209 = vadd.f32 %v3177, 1e-05
    %v3210 = vadd.f32 %v3178, 1e-05
    %v3211 = vadd.f32 %v3179, 1e-05
    %v3212 = vadd.f32 %v3180, 1e-05
    %v3213 = vadd.f32 %v3181, 1e-05
    %v3214 = vadd.f32 %v3182, 1e-05
    %v3215 = vadd.f32 %v3183, 1e-05
    %v3216 = vadd.f32 %v3184, 1e-05
    %v3217 = vadd.f32 %v3185, 1e-05
    %v3218 = vadd.f32 %v3186, 1e-05
    %v3219 = vadd.f32 %v3187, 1e-05
    %v3220 = vadd.f32 %v3188, 1e-05
    %v3221 = vadd.f32 %v3189, 1e-05
    %v3222 = vadd.f32 %v3190, 1e-05
    %v3223 = vadd.f32 %v3191, 1e-05
    %v3224 = vadd.f32 %v3192, 1e-05
    %v3225 = vadd.f32 %v3193, 1e-05
    %v3226 = vadd.f32 %v3194, 1e-05
    %v3227 = vadd.f32 %v3195, 1e-05
    %v3228 = vadd.f32 %v3196, 1e-05
    %v3229 = vadd.f32 %v3197, 1e-05
    %v3230 = vadd.f32 %v3198, 1e-05
    %v3231 = vadd.f32 %v3199, 1e-05
    %v3232 = vadd.f32 %v3200, 1e-05
    %v3233 = vadd.f32 %v3201, 1e-05
    %v3234 = vadd.f32 %v3202, 1e-05
    %v3235 = vadd.f32 %v3203, 1e-05
    %v3236 = vadd.f32 %v3204, 1e-05
    %v3237 = vadd.f32 %v3205, 1e-05
    %v3238 = vadd.f32 %v3206, 1e-05
    %v3239 = vadd.f32 %v3207, 1e-05
    %v3240 = vadd.f32 %v3208, 1e-05
    %v3241 = vrsqrt.pop %v3209
    %v3242 = vrsqrt.pop %v3210
    %v3243 = vrsqrt.pop %v3211
    %v3244 = vrsqrt.pop %v3212
    %v3245 = vrsqrt.pop %v3213
    %v3246 = vrsqrt.pop %v3214
    %v3247 = vrsqrt.pop %v3215
    %v3248 = vrsqrt.pop %v3216
    %v3249 = vrsqrt.pop %v3217
    %v3250 = vrsqrt.pop %v3218
    %v3251 = vrsqrt.pop %v3219
    %v3252 = vrsqrt.pop %v3220
    %v3253 = vrsqrt.pop %v3221
    %v3254 = vrsqrt.pop %v3222
    %v3255 = vrsqrt.pop %v3223
    %v3256 = vrsqrt.pop %v3224
    %v3257 = vrsqrt.pop %v3225
    %v3258 = vrsqrt.pop %v3226
    %v3259 = vrsqrt.pop %v3227
    %v3260 = vrsqrt.pop %v3228
    %v3261 = vrsqrt.pop %v3229
    %v3262 = vrsqrt.pop %v3230
    %v3263 = vrsqrt.pop %v3231
    %v3264 = vrsqrt.pop %v3232
    %v3265 = vrsqrt.pop %v3233
    %v3266 = vrsqrt.pop %v3234
    %v3267 = vrsqrt.pop %v3235
    %v3268 = vrsqrt.pop %v3236
    %v3269 = vrsqrt.pop %v3237
    %v3270 = vrsqrt.pop %v3238
    %v3271 = vrsqrt.pop %v3239
    %v3272 = vrsqrt.pop %v3240
    %v3273 = vmul.f32 %v3017, %v3241
    %v3274 = vmul.f32 %v3018, %v3242
    %v3275 = vmul.f32 %v3019, %v3243
    %v3276 = vmul.f32 %v3020, %v3244
    %v3277 = vmul.f32 %v3021, %v3245
    %v3278 = vmul.f32 %v3022, %v3246
    %v3279 = vmul.f32 %v3023, %v3247
    %v3280 = vmul.f32 %v3024, %v3248
    %v3281 = vmul.f32 %v3025, %v3249
    %v3282 = vmul.f32 %v3026, %v3250
    %v3283 = vmul.f32 %v3027, %v3251
    %v3284 = vmul.f32 %v3028, %v3252
    %v3285 = vmul.f32 %v3029, %v3253
    %v3286 = vmul.f32 %v3030, %v3254
    %v3287 = vmul.f32 %v3031, %v3255
    %v3288 = vmul.f32 %v3032, %v3256
    %v3289 = vmul.f32 %v3033, %v3257
    %v3290 = vmul.f32 %v3034, %v3258
    %v3291 = vmul.f32 %v3035, %v3259
    %v3292 = vmul.f32 %v3036, %v3260
    %v3293 = vmul.f32 %v3037, %v3261
    %v3294 = vmul.f32 %v3038, %v3262
    %v3295 = vmul.f32 %v3039, %v3263
    %v3296 = vmul.f32 %v3040, %v3264
    %v3297 = vmul.f32 %v3041, %v3265
    %v3298 = vmul.f32 %v3042, %v3266
    %v3299 = vmul.f32 %v3043, %v3267
    %v3300 = vmul.f32 %v3044, %v3268
    %v3301 = vmul.f32 %v3045, %v3269
    %v3302 = vmul.f32 %v3046, %v3270
    %v3303 = vmul.f32 %v3047, %v3271
    %v3304 = vmul.f32 %v3048, %v3272
    %v3306 = vlaneseq
    %v3307 = vshrl.u32 %v3306, 7
    %v3308 = vsub.s32 0, %v3307
    %v3309 = vrot.slane %v2886, %v3308
    %v3311 = vmul.f32 %v3273, %v3309
    %v3312 = vmul.f32 %v3274, %v3309
    %v3313 = vmul.f32 %v3275, %v3309
    %v3314 = vmul.f32 %v3276, %v3309
    %v3315 = vmul.f32 %v3277, %v3309
    %v3316 = vmul.f32 %v3278, %v3309
    %v3317 = vmul.f32 %v3279, %v3309
    %v3318 = vmul.f32 %v3280, %v3309
    %v3319 = vmul.f32 %v3281, %v3309
    %v3320 = vmul.f32 %v3282, %v3309
    %v3321 = vmul.f32 %v3283, %v3309
    %v3322 = vmul.f32 %v3284, %v3309
    %v3323 = vmul.f32 %v3285, %v3309
    %v3324 = vmul.f32 %v3286, %v3309
    %v3325 = vmul.f32 %v3287, %v3309
    %v3326 = vmul.f32 %v3288, %v3309
    %v3327 = vmul.f32 %v3289, %v3309
    %v3328 = vmul.f32 %v3290, %v3309
    %v3329 = vmul.f32 %v3291, %v3309
    %v3330 = vmul.f32 %v3292, %v3309
    %v3331 = vmul.f32 %v3293, %v3309
    %v3332 = vmul.f32 %v3294, %v3309
    %v3333 = vmul.f32 %v3295, %v3309
    %v3334 = vmul.f32 %v3296, %v3309
    %v3335 = vmul.f32 %v3297, %v3309
    %v3336 = vmul.f32 %v3298, %v3309
    %v3337 = vmul.f32 %v3299, %v3309
    %v3338 = vmul.f32 %v3300, %v3309
    %v3339 = vmul.f32 %v3301, %v3309
    %v3340 = vmul.f32 %v3302, %v3309
    %v3341 = vmul.f32 %v3303, %v3309
    %v3342 = vmul.f32 %v3304, %v3309
    %v3344 = vlaneseq
    %v3345 = vshrl.u32 %v3344, 7
    %v3346 = vsub.s32 0, %v3345
    %v3347 = vrot.slane %v2888, %v3346
    %v3349 = vadd.f32 %v3311, %v3347
    %v3350 = vadd.f32 %v3312, %v3347
    %v3351 = vadd.f32 %v3313, %v3347
    %v3352 = vadd.f32 %v3314, %v3347
    %v3353 = vadd.f32 %v3315, %v3347
    %v3354 = vadd.f32 %v3316, %v3347
    %v3355 = vadd.f32 %v3317, %v3347
    %v3356 = vadd.f32 %v3318, %v3347
    %v3357 = vadd.f32 %v3319, %v3347
    %v3358 = vadd.f32 %v3320, %v3347
    %v3359 = vadd.f32 %v3321, %v3347
    %v3360 = vadd.f32 %v3322, %v3347
    %v3361 = vadd.f32 %v3323, %v3347
    %v3362 = vadd.f32 %v3324, %v3347
    %v3363 = vadd.f32 %v3325, %v3347
    %v3364 = vadd.f32 %v3326, %v3347
    %v3365 = vadd.f32 %v3327, %v3347
    %v3366 = vadd.f32 %v3328, %v3347
    %v3367 = vadd.f32 %v3329, %v3347
    %v3368 = vadd.f32 %v3330, %v3347
    %v3369 = vadd.f32 %v3331, %v3347
    %v3370 = vadd.f32 %v3332, %v3347
    %v3371 = vadd.f32 %v3333, %v3347
    %v3372 = vadd.f32 %v3334, %v3347
    %v3373 = vadd.f32 %v3335, %v3347
    %v3374 = vadd.f32 %v3336, %v3347
    %v3375 = vadd.f32 %v3337, %v3347
    %v3376 = vadd.f32 %v3338, %v3347
    %v3377 = vadd.f32 %v3339, %v3347
    %v3378 = vadd.f32 %v3340, %v3347
    %v3379 = vadd.f32 %v3341, %v3347
    %v3380 = vadd.f32 %v3342, %v3347
    %s3381 = scalar_lea.vmem %s7, 128
    %v3382 = vld [vmem:[%s3381] sm:$0xff]
    %v3383 = vld [vmem:[%s3381 + $0x8] sm:$0xff]
    %v3384 = vld [vmem:[%s3381 + $0x10] sm:$0xff]
    %v3385 = vld [vmem:[%s3381 + $0x18] sm:$0xff]
    %v3386 = vld [vmem:[%s3381 + $0x20] sm:$0xff]
    %v3387 = vld [vmem:[%s3381 + $0x28] sm:$0xff]
    %v3388 = vld [vmem:[%s3381 + $0x30] sm:$0xff]
    %v3389 = vld [vmem:[%s3381 + $0x38] sm:$0xff]
    %v3390 = vld [vmem:[%s3381 + $0x40] sm:$0xff]
    %v3391 = vld [vmem:[%s3381 + $0x48] sm:$0xff]
    %v3392 = vld [vmem:[%s3381 + $0x50] sm:$0xff]
    %v3393 = vld [vmem:[%s3381 + $0x58] sm:$0xff]
    %v3394 = vld [vmem:[%s3381 + $0x60] sm:$0xff]
    %v3395 = vld [vmem:[%s3381 + $0x68] sm:$0xff]
    %v3396 = vld [vmem:[%s3381 + $0x70] sm:$0xff]
    %v3397 = vld [vmem:[%s3381 + $0x78] sm:$0xff]
    %s3398 = scalar_lea.vmem %s8, 2
    %v3399 = vld [vmem:[%s3398] sm:$0x3]
    %v3401 = vlaneseq
    %v3402 = vshrl.u32 %v3401, 7
    %v3403 = vsub.s32 0, %v3402
    %v3404 = vrot.slane %v3399, %v3403
    %v3405 = vlaneseq
    %v3406 = vshrl.u32 %v3405, 7
    %v3407 = vsub.s32 1, %v3406
    %v3408 = vrot.slane %v3399, %v3407
    %v3412 = vsel %vm431, %v3349, 0
    %v3415 = vsel %vm431, %v3350, 0
    %v3418 = vsel %vm431, %v3351, 0
    %v3421 = vsel %vm431, %v3352, 0
    %v3424 = vsel %vm431, %v3353, 0
    %v3427 = vsel %vm431, %v3354, 0
    %v3430 = vsel %vm431, %v3355, 0
    %v3433 = vsel %vm431, %v3356, 0
    %v3436 = vsel %vm431, %v3357, 0
    %v3439 = vsel %vm431, %v3358, 0
    %v3442 = vsel %vm431, %v3359, 0
    %v3445 = vsel %vm431, %v3360, 0
    %v3448 = vsel %vm431, %v3361, 0
    %v3451 = vsel %vm431, %v3362, 0
    %v3454 = vsel %vm431, %v3363, 0
    %v3457 = vsel %vm431, %v3364, 0
    %v3460 = vsel %vm431, %v3365, 0
    %v3463 = vsel %vm431, %v3366, 0
    %v3466 = vsel %vm431, %v3367, 0
    %v3469 = vsel %vm431, %v3368, 0
    %v3472 = vsel %vm431, %v3369, 0
    %v3475 = vsel %vm431, %v3370, 0
    %v3478 = vsel %vm431, %v3371, 0
    %v3481 = vsel %vm431, %v3372, 0
    %v3484 = vsel %vm431, %v3373, 0
    %v3487 = vsel %vm431, %v3374, 0
    %v3490 = vsel %vm431, %v3375, 0
    %v3493 = vsel %vm431, %v3376, 0
    %v3496 = vsel %vm431, %v3377, 0
    %v3499 = vsel %vm431, %v3378, 0
    %v3502 = vsel %vm431, %v3379, 0
    %v3505 = vsel %vm431, %v3380, 0
    %3507 = vmatprep.subr.mxu0 %v3383
    %3508 = vmatpush1.msra.mxu0 %v3382
    %3509 = vmatprep.subr.mxu0 %v3385
    %3510 = vmatpush1.msra.mxu0 %v3384
    %3511 = vmatprep.subr.mxu0 %v3387
    %3512 = vmatpush1.msra.mxu0 %v3386
    %3513 = vmatprep.subr.mxu0 %v3389
    %3514 = vmatpush1.msra.mxu0 %v3388
    %3515 = vmatprep.subr.mxu0 %v3391
    %3516 = vmatpush1.msra.mxu0 %v3390
    %3517 = vmatprep.subr.mxu0 %v3393
    %3518 = vmatpush1.msra.mxu0 %v3392
    %3519 = vmatprep.subr.mxu0 %v3395
    %3520 = vmatpush1.msra.mxu0 %v3394
    %3521 = vmatprep.subr.mxu0 %v3397
    %3522 = vmatpush1.msra.mxu0 %v3396
    %3523 = vmatprep.subr.mxu0 0.0
    %3524 = vmatpush1.msra.mxu0 0.0
    %3525 = vmatprep.subr.mxu0 0.0
    %3526 = vmatpush1.msra.mxu0 0.0
    %3527 = vmatprep.subr.mxu0 0.0
    %3528 = vmatpush1.msra.mxu0 0.0
    %3529 = vmatprep.subr.mxu0 0.0
    %3530 = vmatpush1.msra.mxu0 0.0
    %3531 = vmatprep.subr.mxu0 0.0
    %3532 = vmatpush1.msra.mxu0 0.0
    %3533 = vmatprep.subr.mxu0 0.0
    %3534 = vmatpush1.msra.mxu0 0.0
    %3535 = vmatprep.subr.mxu0 0.0
    %3536 = vmatpush1.msra.mxu0 0.0
    %3537 = vmatprep.subr.mxu0 0.0
    %3538 = vmatpush1.msra.mxu0 0.0
    %3539 = vmatprep.subr.mxu0 0.0
    %3540 = vmatpush1.msra.mxu0 0.0
    %3541 = vmatprep.subr.mxu0 0.0
    %3542 = vmatpush1.msra.mxu0 0.0
    %3543 = vmatprep.subr.mxu0 0.0
    %3544 = vmatpush1.msra.mxu0 0.0
    %3545 = vmatprep.subr.mxu0 0.0
    %3546 = vmatpush1.msra.mxu0 0.0
    %3547 = vmatprep.subr.mxu0 0.0
    %3548 = vmatpush1.msra.mxu0 0.0
    %3549 = vmatprep.subr.mxu0 0.0
    %3550 = vmatpush1.msra.mxu0 0.0
    %3551 = vmatprep.subr.mxu0 0.0
    %3552 = vmatpush1.msra.mxu0 0.0
    %3553 = vmatprep.subr.mxu0 0.0
    %3554 = vmatpush1.msra.mxu0 0.0
    %3555 = vmatprep.subr.mxu0 0.0
    %3556 = vmatpush1.msra.mxu0 0.0
    %3557 = vmatprep.subr.mxu0 0.0
    %3558 = vmatpush1.msra.mxu0 0.0
    %3559 = vmatprep.subr.mxu0 0.0
    %3560 = vmatpush1.msra.mxu0 0.0
    %3561 = vmatprep.subr.mxu0 0.0
    %3562 = vmatpush1.msra.mxu0 0.0
    %3563 = vmatprep.subr.mxu0 0.0
    %3564 = vmatpush1.msra.mxu0 0.0
    %3565 = vmatprep.subr.mxu0 0.0
    %3566 = vmatpush1.msra.mxu0 0.0
    %3567 = vmatprep.subr.mxu0 0.0
    %3568 = vmatpush1.msra.mxu0 0.0
    %3569 = vmatprep.subr.mxu0 0.0
    %3570 = vmatpush1.msra.mxu0 0.0
    %3571 = vmatprep.mubr.f32.mxu0 0.0
    %3572 = vmatmul.mubr.f32.gmra.mrb[0].mxu0 %v3412
    %v3573 = vpop.f32.mrb[0].mxu0
    %v3574 = vadd.f32 %v3404, %v3573
    %v3575 = vpop.f32.mrb[0].mxu0
    %v3576 = vadd.f32 %v3408, %v3575
    %3577 = vmatprep.mubr.f32.mxu0 0.0
    %3578 = vmatmul.mubr.f32.gmra.mrb[0].mxu0 %v3415
    %v3579 = vpop.f32.mrb[0].mxu0
    %v3580 = vadd.f32 %v3404, %v3579
    %v3581 = vpop.f32.mrb[0].mxu0
    %v3582 = vadd.f32 %v3408, %v3581
    %3583 = vmatprep.mubr.f32.mxu0 0.0
    %3584 = vmatmul.mubr.f32.gmra.mrb[0].mxu0 %v3418
    %v3585 = vpop.f32.mrb[0].mxu0
    %v3586 = vadd.f32 %v3404, %v3585
    %v3587 = vpop.f32.mrb[0].mxu0
    %v3588 = vadd.f32 %v3408, %v3587
    %3589 = vmatprep.mubr.f32.mxu0 0.0
    %3590 = vmatmul.mubr.f32.gmra.mrb[0].mxu0 %v3421
    %v3591 = vpop.f32.mrb[0].mxu0
    %v3592 = vadd.f32 %v3404, %v3591
    %v3593 = vpop.f32.mrb[0].mxu0
    %v3594 = vadd.f32 %v3408, %v3593
    %3595 = vmatprep.mubr.f32.mxu0 0.0
    %3596 = vmatmul.mubr.f32.gmra.mrb[0].mxu0 %v3424
    %v3597 = vpop.f32.mrb[0].mxu0
    %v3598 = vadd.f32 %v3404, %v3597
    %v3599 = vpop.f32.mrb[0].mxu0
    %v3600 = vadd.f32 %v3408, %v3599
    %3601 = vmatprep.mubr.f32.mxu0 0.0
    %3602 = vmatmul.mubr.f32.gmra.mrb[0].mxu0 %v3427
    %v3603 = vpop.f32.mrb[0].mxu0
    %v3604 = vadd.f32 %v3404, %v3603
    %v3605 = vpop.f32.mrb[0].mxu0
    %v3606 = vadd.f32 %v3408, %v3605
    %3607 = vmatprep.mubr.f32.mxu0 0.0
    %3608 = vmatmul.mubr.f32.gmra.mrb[0].mxu0 %v3430
    %v3609 = vpop.f32.mrb[0].mxu0
    %v3610 = vadd.f32 %v3404, %v3609
    %v3611 = vpop.f32.mrb[0].mxu0
    %v3612 = vadd.f32 %v3408, %v3611
    %3613 = vmatprep.mubr.f32.mxu0 0.0
    %3614 = vmatmul.mubr.f32.gmra.mrb[0].mxu0 %v3433
    %v3615 = vpop.f32.mrb[0].mxu0
    %v3616 = vadd.f32 %v3404, %v3615
    %v3617 = vpop.f32.mrb[0].mxu0
    %v3618 = vadd.f32 %v3408, %v3617
    %3619 = vmatprep.mubr.f32.mxu0 0.0
    %3620 = vmatmul.mubr.f32.gmra.mrb[0].mxu0 %v3436
    %v3621 = vpop.f32.mrb[0].mxu0
    %v3622 = vadd.f32 %v3404, %v3621
    %v3623 = vpop.f32.mrb[0].mxu0
    %v3624 = vadd.f32 %v3408, %v3623
    %3625 = vmatprep.mubr.f32.mxu0 0.0
    %3626 = vmatmul.mubr.f32.gmra.mrb[0].mxu0 %v3439
    %v3627 = vpop.f32.mrb[0].mxu0
    %v3628 = vadd.f32 %v3404, %v3627
    %v3629 = vpop.f32.mrb[0].mxu0
    %v3630 = vadd.f32 %v3408, %v3629
    %3631 = vmatprep.mubr.f32.mxu0 0.0
    %3632 = vmatmul.mubr.f32.gmra.mrb[0].mxu0 %v3442
    %v3633 = vpop.f32.mrb[0].mxu0
    %v3634 = vadd.f32 %v3404, %v3633
    %v3635 = vpop.f32.mrb[0].mxu0
    %v3636 = vadd.f32 %v3408, %v3635
    %3637 = vmatprep.mubr.f32.mxu0 0.0
    %3638 = vmatmul.mubr.f32.gmra.mrb[0].mxu0 %v3445
    %v3639 = vpop.f32.mrb[0].mxu0
    %v3640 = vadd.f32 %v3404, %v3639
    %v3641 = vpop.f32.mrb[0].mxu0
    %v3642 = vadd.f32 %v3408, %v3641
    %3643 = vmatprep.mubr.f32.mxu0 0.0
    %3644 = vmatmul.mubr.f32.gmra.mrb[0].mxu0 %v3448
    %v3645 = vpop.f32.mrb[0].mxu0
    %v3646 = vadd.f32 %v3404, %v3645
    %v3647 = vpop.f32.mrb[0].mxu0
    %v3648 = vadd.f32 %v3408, %v3647
    %3649 = vmatprep.mubr.f32.mxu0 0.0
    %3650 = vmatmul.mubr.f32.gmra.mrb[0].mxu0 %v3451
    %v3651 = vpop.f32.mrb[0].mxu0
    %v3652 = vadd.f32 %v3404, %v3651
    %v3653 = vpop.f32.mrb[0].mxu0
    %v3654 = vadd.f32 %v3408, %v3653
    %3655 = vmatprep.mubr.f32.mxu0 0.0
    %3656 = vmatmul.mubr.f32.gmra.mrb[0].mxu0 %v3454
    %v3657 = vpop.f32.mrb[0].mxu0
    %v3658 = vadd.f32 %v3404, %v3657
    %v3659 = vpop.f32.mrb[0].mxu0
    %v3660 = vadd.f32 %v3408, %v3659
    %3661 = vmatprep.mubr.f32.mxu0 0.0
    %3662 = vmatmul.mubr.f32.gmra.mrb[0].mxu0 %v3457
    %v3663 = vpop.f32.mrb[0].mxu0
    %v3664 = vadd.f32 %v3404, %v3663
    %v3665 = vpop.f32.mrb[0].mxu0
    %v3666 = vadd.f32 %v3408, %v3665
    %3667 = vmatprep.mubr.f32.mxu0 0.0
    %3668 = vmatmul.mubr.f32.gmra.mrb[0].mxu0 %v3460
    %v3669 = vpop.f32.mrb[0].mxu0
    %v3670 = vadd.f32 %v3404, %v3669
    %v3671 = vpop.f32.mrb[0].mxu0
    %v3672 = vadd.f32 %v3408, %v3671
    %3673 = vmatprep.mubr.f32.mxu0 0.0
    %3674 = vmatmul.mubr.f32.gmra.mrb[0].mxu0 %v3463
    %v3675 = vpop.f32.mrb[0].mxu0
    %v3676 = vadd.f32 %v3404, %v3675
    %v3677 = vpop.f32.mrb[0].mxu0
    %v3678 = vadd.f32 %v3408, %v3677
    %3679 = vmatprep.mubr.f32.mxu0 0.0
    %3680 = vmatmul.mubr.f32.gmra.mrb[0].mxu0 %v3466
    %v3681 = vpop.f32.mrb[0].mxu0
    %v3682 = vadd.f32 %v3404, %v3681
    %v3683 = vpop.f32.mrb[0].mxu0
    %v3684 = vadd.f32 %v3408, %v3683
    %3685 = vmatprep.mubr.f32.mxu0 0.0
    %3686 = vmatmul.mubr.f32.gmra.mrb[0].mxu0 %v3469
    %v3687 = vpop.f32.mrb[0].mxu0
    %v3688 = vadd.f32 %v3404, %v3687
    %v3689 = vpop.f32.mrb[0].mxu0
    %v3690 = vadd.f32 %v3408, %v3689
    %3691 = vmatprep.mubr.f32.mxu0 0.0
    %3692 = vmatmul.mubr.f32.gmra.mrb[0].mxu0 %v3472
    %v3693 = vpop.f32.mrb[0].mxu0
    %v3694 = vadd.f32 %v3404, %v3693
    %v3695 = vpop.f32.mrb[0].mxu0
    %v3696 = vadd.f32 %v3408, %v3695
    %3697 = vmatprep.mubr.f32.mxu0 0.0
    %3698 = vmatmul.mubr.f32.gmra.mrb[0].mxu0 %v3475
    %v3699 = vpop.f32.mrb[0].mxu0
    %v3700 = vadd.f32 %v3404, %v3699
    %v3701 = vpop.f32.mrb[0].mxu0
    %v3702 = vadd.f32 %v3408, %v3701
    %3703 = vmatprep.mubr.f32.mxu0 0.0
    %3704 = vmatmul.mubr.f32.gmra.mrb[0].mxu0 %v3478
    %v3705 = vpop.f32.mrb[0].mxu0
    %v3706 = vadd.f32 %v3404, %v3705
    %v3707 = vpop.f32.mrb[0].mxu0
    %v3708 = vadd.f32 %v3408, %v3707
    %3709 = vmatprep.mubr.f32.mxu0 0.0
    %3710 = vmatmul.mubr.f32.gmra.mrb[0].mxu0 %v3481
    %v3711 = vpop.f32.mrb[0].mxu0
    %v3712 = vadd.f32 %v3404, %v3711
    %v3713 = vpop.f32.mrb[0].mxu0
    %v3714 = vadd.f32 %v3408, %v3713
    %3715 = vmatprep.mubr.f32.mxu0 0.0
    %3716 = vmatmul.mubr.f32.gmra.mrb[0].mxu0 %v3484
    %v3717 = vpop.f32.mrb[0].mxu0
    %v3718 = vadd.f32 %v3404, %v3717
    %v3719 = vpop.f32.mrb[0].mxu0
    %v3720 = vadd.f32 %v3408, %v3719
    %3721 = vmatprep.mubr.f32.mxu0 0.0
    %3722 = vmatmul.mubr.f32.gmra.mrb[0].mxu0 %v3487
    %v3723 = vpop.f32.mrb[0].mxu0
    %v3724 = vadd.f32 %v3404, %v3723
    %v3725 = vpop.f32.mrb[0].mxu0
    %v3726 = vadd.f32 %v3408, %v3725
    %3727 = vmatprep.mubr.f32.mxu0 0.0
    %3728 = vmatmul.mubr.f32.gmra.mrb[0].mxu0 %v3490
    %v3729 = vpop.f32.mrb[0].mxu0
    %v3730 = vadd.f32 %v3404, %v3729
    %v3731 = vpop.f32.mrb[0].mxu0
    %v3732 = vadd.f32 %v3408, %v3731
    %3733 = vmatprep.mubr.f32.mxu0 0.0
    %3734 = vmatmul.mubr.f32.gmra.mrb[0].mxu0 %v3493
    %v3735 = vpop.f32.mrb[0].mxu0
    %v3736 = vadd.f32 %v3404, %v3735
    %v3737 = vpop.f32.mrb[0].mxu0
    %v3738 = vadd.f32 %v3408, %v3737
    %3739 = vmatprep.mubr.f32.mxu0 0.0
    %3740 = vmatmul.mubr.f32.gmra.mrb[0].mxu0 %v3496
    %v3741 = vpop.f32.mrb[0].mxu0
    %v3742 = vadd.f32 %v3404, %v3741
    %v3743 = vpop.f32.mrb[0].mxu0
    %v3744 = vadd.f32 %v3408, %v3743
    %3745 = vmatprep.mubr.f32.mxu0 0.0
    %3746 = vmatmul.mubr.f32.gmra.mrb[0].mxu0 %v3499
    %v3747 = vpop.f32.mrb[0].mxu0
    %v3748 = vadd.f32 %v3404, %v3747
    %v3749 = vpop.f32.mrb[0].mxu0
    %v3750 = vadd.f32 %v3408, %v3749
    %3751 = vmatprep.mubr.f32.mxu0 0.0
    %3752 = vmatmul.mubr.f32.gmra.mrb[0].mxu0 %v3502
    %v3753 = vpop.f32.mrb[0].mxu0
    %v3754 = vadd.f32 %v3404, %v3753
    %v3755 = vpop.f32.mrb[0].mxu0
    %v3756 = vadd.f32 %v3408, %v3755
    %3757 = vmatprep.mubr.f32.mxu0 0.0
    %3758 = vmatmul.mubr.f32.gmra.mrb[0].mxu0 %v3505
    %v3759 = vpop.f32.mrb[0].mxu0
    %v3760 = vadd.f32 %v3404, %v3759
    %v3761 = vpop.f32.mrb[0].mxu0
    %v3762 = vadd.f32 %v3408, %v3761
    %3763 = vdwg.mxu0
    %v3764 = vmax.f32 %v3574, 0.0
    %v3765 = vmax.f32 %v3576, 0.0
    %v3766 = vmax.f32 %v3580, 0.0
    %v3767 = vmax.f32 %v3582, 0.0
    %v3768 = vmax.f32 %v3586, 0.0
    %v3769 = vmax.f32 %v3588, 0.0
    %v3770 = vmax.f32 %v3592, 0.0
    %v3771 = vmax.f32 %v3594, 0.0
    %v3772 = vmax.f32 %v3598, 0.0
    %v3773 = vmax.f32 %v3600, 0.0
    %v3774 = vmax.f32 %v3604, 0.0
    %v3775 = vmax.f32 %v3606, 0.0
    %v3776 = vmax.f32 %v3610, 0.0
    %v3777 = vmax.f32 %v3612, 0.0
    %v3778 = vmax.f32 %v3616, 0.0
    %v3779 = vmax.f32 %v3618, 0.0
    %v3780 = vmax.f32 %v3622, 0.0
    %v3781 = vmax.f32 %v3624, 0.0
    %v3782 = vmax.f32 %v3628, 0.0
    %v3783 = vmax.f32 %v3630, 0.0
    %v3784 = vmax.f32 %v3634, 0.0
    %v3785 = vmax.f32 %v3636, 0.0
    %v3786 = vmax.f32 %v3640, 0.0
    %v3787 = vmax.f32 %v3642, 0.0
    %v3788 = vmax.f32 %v3646, 0.0
    %v3789 = vmax.f32 %v3648, 0.0
    %v3790 = vmax.f32 %v3652, 0.0
    %v3791 = vmax.f32 %v3654, 0.0
    %v3792 = vmax.f32 %v3658, 0.0
    %v3793 = vmax.f32 %v3660, 0.0
    %v3794 = vmax.f32 %v3664, 0.0
    %v3795 = vmax.f32 %v3666, 0.0
    %v3796 = vmax.f32 %v3670, 0.0
    %v3797 = vmax.f32 %v3672, 0.0
    %v3798 = vmax.f32 %v3676, 0.0
    %v3799 = vmax.f32 %v3678, 0.0
    %v3800 = vmax.f32 %v3682, 0.0
    %v3801 = vmax.f32 %v3684, 0.0
    %v3802 = vmax.f32 %v3688, 0.0
    %v3803 = vmax.f32 %v3690, 0.0
    %v3804 = vmax.f32 %v3694, 0.0
    %v3805 = vmax.f32 %v3696, 0.0
    %v3806 = vmax.f32 %v3700, 0.0
    %v3807 = vmax.f32 %v3702, 0.0
    %v3808 = vmax.f32 %v3706, 0.0
    %v3809 = vmax.f32 %v3708, 0.0
    %v3810 = vmax.f32 %v3712, 0.0
    %v3811 = vmax.f32 %v3714, 0.0
    %v3812 = vmax.f32 %v3718, 0.0
    %v3813 = vmax.f32 %v3720, 0.0
    %v3814 = vmax.f32 %v3724, 0.0
    %v3815 = vmax.f32 %v3726, 0.0
    %v3816 = vmax.f32 %v3730, 0.0
    %v3817 = vmax.f32 %v3732, 0.0
    %v3818 = vmax.f32 %v3736, 0.0
    %v3819 = vmax.f32 %v3738, 0.0
    %v3820 = vmax.f32 %v3742, 0.0
    %v3821 = vmax.f32 %v3744, 0.0
    %v3822 = vmax.f32 %v3748, 0.0
    %v3823 = vmax.f32 %v3750, 0.0
    %v3824 = vmax.f32 %v3754, 0.0
    %v3825 = vmax.f32 %v3756, 0.0
    %v3826 = vmax.f32 %v3760, 0.0
    %v3827 = vmax.f32 %v3762, 0.0
    %s3828 = scalar_lea.vmem %s9, 256
    %v3829 = vld [vmem:[%s3828] sm:$0xff]
    %v3830 = vld [vmem:[%s3828 + $0x8] sm:$0xff]
    %v3831 = vld [vmem:[%s3828 + $0x10] sm:$0xff]
    %v3832 = vld [vmem:[%s3828 + $0x18] sm:$0xff]
    %v3833 = vld [vmem:[%s3828 + $0x20] sm:$0xff]
    %v3834 = vld [vmem:[%s3828 + $0x28] sm:$0xff]
    %v3835 = vld [vmem:[%s3828 + $0x30] sm:$0xff]
    %v3836 = vld [vmem:[%s3828 + $0x38] sm:$0xff]
    %v3837 = vld [vmem:[%s3828 + $0x40] sm:$0xff]
    %v3838 = vld [vmem:[%s3828 + $0x48] sm:$0xff]
    %v3839 = vld [vmem:[%s3828 + $0x50] sm:$0xff]
    %v3840 = vld [vmem:[%s3828 + $0x58] sm:$0xff]
    %v3841 = vld [vmem:[%s3828 + $0x60] sm:$0xff]
    %v3842 = vld [vmem:[%s3828 + $0x68] sm:$0xff]
    %v3843 = vld [vmem:[%s3828 + $0x70] sm:$0xff]
    %v3844 = vld [vmem:[%s3828 + $0x78] sm:$0xff]
    %v3845 = vld [vmem:[%s3828 + $0x80] sm:$0xff]
    %v3846 = vld [vmem:[%s3828 + $0x88] sm:$0xff]
    %v3847 = vld [vmem:[%s3828 + $0x90] sm:$0xff]
    %v3848 = vld [vmem:[%s3828 + $0x98] sm:$0xff]
    %v3849 = vld [vmem:[%s3828 + $0xa0] sm:$0xff]
    %v3850 = vld [vmem:[%s3828 + $0xa8] sm:$0xff]
    %v3851 = vld [vmem:[%s3828 + $0xb0] sm:$0xff]
    %v3852 = vld [vmem:[%s3828 + $0xb8] sm:$0xff]
    %v3853 = vld [vmem:[%s3828 + $0xc0] sm:$0xff]
    %v3854 = vld [vmem:[%s3828 + $0xc8] sm:$0xff]
    %v3855 = vld [vmem:[%s3828 + $0xd0] sm:$0xff]
    %v3856 = vld [vmem:[%s3828 + $0xd8] sm:$0xff]
    %v3857 = vld [vmem:[%s3828 + $0xe0] sm:$0xff]
    %v3858 = vld [vmem:[%s3828 + $0xe8] sm:$0xff]
    %v3859 = vld [vmem:[%s3828 + $0xf0] sm:$0xff]
    %v3860 = vld [vmem:[%s3828 + $0xf8] sm:$0xff]
    %s3861 = scalar_lea.vmem %s10, 1
    %v3862 = vld [vmem:[%s3861] sm:$0x1]
    %v3864 = vlaneseq
    %v3865 = vshrl.u32 %v3864, 7
    %v3866 = vsub.s32 0, %v3865
    %v3867 = vrot.slane %v3862, %v3866
    %3869 = vmatprep.subr.mxu0 0.0
    %3870 = vmatpush1.msra.mxu0 %v3829
    %3871 = vmatprep.subr.mxu0 0.0
    %3872 = vmatpush1.msra.mxu0 %v3830
    %3873 = vmatprep.subr.mxu0 0.0
    %3874 = vmatpush1.msra.mxu0 %v3831
    %3875 = vmatprep.subr.mxu0 0.0
    %3876 = vmatpush1.msra.mxu0 %v3832
    %3877 = vmatprep.subr.mxu0 0.0
    %3878 = vmatpush1.msra.mxu0 %v3833
    %3879 = vmatprep.subr.mxu0 0.0
    %3880 = vmatpush1.msra.mxu0 %v3834
    %3881 = vmatprep.subr.mxu0 0.0
    %3882 = vmatpush1.msra.mxu0 %v3835
    %3883 = vmatprep.subr.mxu0 0.0
    %3884 = vmatpush1.msra.mxu0 %v3836
    %3885 = vmatprep.subr.mxu0 0.0
    %3886 = vmatpush1.msra.mxu0 %v3837
    %3887 = vmatprep.subr.mxu0 0.0
    %3888 = vmatpush1.msra.mxu0 %v3838
    %3889 = vmatprep.subr.mxu0 0.0
    %3890 = vmatpush1.msra.mxu0 %v3839
    %3891 = vmatprep.subr.mxu0 0.0
    %3892 = vmatpush1.msra.mxu0 %v3840
    %3893 = vmatprep.subr.mxu0 0.0
    %3894 = vmatpush1.msra.mxu0 %v3841
    %3895 = vmatprep.subr.mxu0 0.0
    %3896 = vmatpush1.msra.mxu0 %v3842
    %3897 = vmatprep.subr.mxu0 0.0
    %3898 = vmatpush1.msra.mxu0 %v3843
    %3899 = vmatprep.subr.mxu0 0.0
    %3900 = vmatpush1.msra.mxu0 %v3844
    %3901 = vmatprep.subr.mxu0 0.0
    %3902 = vmatpush1.msra.mxu0 %v3845
    %3903 = vmatprep.subr.mxu0 0.0
    %3904 = vmatpush1.msra.mxu0 %v3846
    %3905 = vmatprep.subr.mxu0 0.0
    %3906 = vmatpush1.msra.mxu0 %v3847
    %3907 = vmatprep.subr.mxu0 0.0
    %3908 = vmatpush1.msra.mxu0 %v3848
    %3909 = vmatprep.subr.mxu0 0.0
    %3910 = vmatpush1.msra.mxu0 %v3849
    %3911 = vmatprep.subr.mxu0 0.0
    %3912 = vmatpush1.msra.mxu0 %v3850
    %3913 = vmatprep.subr.mxu0 0.0
    %3914 = vmatpush1.msra.mxu0 %v3851
    %3915 = vmatprep.subr.mxu0 0.0
    %3916 = vmatpush1.msra.mxu0 %v3852
    %3917 = vmatprep.subr.mxu0 0.0
    %3918 = vmatpush1.msra.mxu0 %v3853
    %3919 = vmatprep.subr.mxu0 0.0
    %3920 = vmatpush1.msra.mxu0 %v3854
    %3921 = vmatprep.subr.mxu0 0.0
    %3922 = vmatpush1.msra.mxu0 %v3855
    %3923 = vmatprep.subr.mxu0 0.0
    %3924 = vmatpush1.msra.mxu0 %v3856
    %3925 = vmatprep.subr.mxu0 0.0
    %3926 = vmatpush1.msra.mxu0 %v3857
    %3927 = vmatprep.subr.mxu0 0.0
    %3928 = vmatpush1.msra.mxu0 %v3858
    %3929 = vmatprep.subr.mxu0 0.0
    %3930 = vmatpush1.msra.mxu0 %v3859
    %3931 = vmatprep.subr.mxu0 0.0
    %3932 = vmatpush1.msra.mxu0 %v3860
    %3933 = vmatprep.mubr.f32.mxu0 %v3765
    %3934 = vmatmul.mubr.f32.gmra.mrb[0].mxu0 %v3764
    %v3935 = vpop.f32.mrb[0].mxu0
    %v3936 = vadd.f32 %v3867, %v3935
    %v3937 = vpop.f32.mrb[0].mxu0
    %3938 = vmatprep.mubr.f32.mxu0 %v3767
    %3939 = vmatmul.mubr.f32.gmra.mrb[0].mxu0 %v3766
    %v3940 = vpop.f32.mrb[0].mxu0
    %v3941 = vadd.f32 %v3867, %v3940
    %v3942 = vpop.f32.mrb[0].mxu0
    %3943 = vmatprep.mubr.f32.mxu0 %v3769
    %3944 = vmatmul.mubr.f32.gmra.mrb[0].mxu0 %v3768
    %v3945 = vpop.f32.mrb[0].mxu0
    %v3946 = vadd.f32 %v3867, %v3945
    %v3947 = vpop.f32.mrb[0].mxu0
    %3948 = vmatprep.mubr.f32.mxu0 %v3771
    %3949 = vmatmul.mubr.f32.gmra.mrb[0].mxu0 %v3770
    %v3950 = vpop.f32.mrb[0].mxu0
    %v3951 = vadd.f32 %v3867, %v3950
    %v3952 = vpop.f32.mrb[0].mxu0
    %3953 = vmatprep.mubr.f32.mxu0 %v3773
    %3954 = vmatmul.mubr.f32.gmra.mrb[0].mxu0 %v3772
    %v3955 = vpop.f32.mrb[0].mxu0
    %v3956 = vadd.f32 %v3867, %v3955
    %v3957 = vpop.f32.mrb[0].mxu0
    %3958 = vmatprep.mubr.f32.mxu0 %v3775
    %3959 = vmatmul.mubr.f32.gmra.mrb[0].mxu0 %v3774
    %v3960 = vpop.f32.mrb[0].mxu0
    %v3961 = vadd.f32 %v3867, %v3960
    %v3962 = vpop.f32.mrb[0].mxu0
    %3963 = vmatprep.mubr.f32.mxu0 %v3777
    %3964 = vmatmul.mubr.f32.gmra.mrb[0].mxu0 %v3776
    %v3965 = vpop.f32.mrb[0].mxu0
    %v3966 = vadd.f32 %v3867, %v3965
    %v3967 = vpop.f32.mrb[0].mxu0
    %3968 = vmatprep.mubr.f32.mxu0 %v3779
    %3969 = vmatmul.mubr.f32.gmra.mrb[0].mxu0 %v3778
    %v3970 = vpop.f32.mrb[0].mxu0
    %v3971 = vadd.f32 %v3867, %v3970
    %v3972 = vpop.f32.mrb[0].mxu0
    %3973 = vmatprep.mubr.f32.mxu0 %v3781
    %3974 = vmatmul.mubr.f32.gmra.mrb[0].mxu0 %v3780
    %v3975 = vpop.f32.mrb[0].mxu0
    %v3976 = vadd.f32 %v3867, %v3975
    %v3977 = vpop.f32.mrb[0].mxu0
    %3978 = vmatprep.mubr.f32.mxu0 %v3783
    %3979 = vmatmul.mubr.f32.gmra.mrb[0].mxu0 %v3782
    %v3980 = vpop.f32.mrb[0].mxu0
    %v3981 = vadd.f32 %v3867, %v3980
    %v3982 = vpop.f32.mrb[0].mxu0
    %3983 = vmatprep.mubr.f32.mxu0 %v3785
    %3984 = vmatmul.mubr.f32.gmra.mrb[0].mxu0 %v3784
    %v3985 = vpop.f32.mrb[0].mxu0
    %v3986 = vadd.f32 %v3867, %v3985
    %v3987 = vpop.f32.mrb[0].mxu0
    %3988 = vmatprep.mubr.f32.mxu0 %v3787
    %3989 = vmatmul.mubr.f32.gmra.mrb[0].mxu0 %v3786
    %v3990 = vpop.f32.mrb[0].mxu0
    %v3991 = vadd.f32 %v3867, %v3990
    %v3992 = vpop.f32.mrb[0].mxu0
    %3993 = vmatprep.mubr.f32.mxu0 %v3789
    %3994 = vmatmul.mubr.f32.gmra.mrb[0].mxu0 %v3788
    %v3995 = vpop.f32.mrb[0].mxu0
    %v3996 = vadd.f32 %v3867, %v3995
    %v3997 = vpop.f32.mrb[0].mxu0
    %3998 = vmatprep.mubr.f32.mxu0 %v3791
    %3999 = vmatmul.mubr.f32.gmra.mrb[0].mxu0 %v3790
    %v4000 = vpop.f32.mrb[0].mxu0
    %v4001 = vadd.f32 %v3867, %v4000
    %v4002 = vpop.f32.mrb[0].mxu0
    %4003 = vmatprep.mubr.f32.mxu0 %v3793
    %4004 = vmatmul.mubr.f32.gmra.mrb[0].mxu0 %v3792
    %v4005 = vpop.f32.mrb[0].mxu0
    %v4006 = vadd.f32 %v3867, %v4005
    %v4007 = vpop.f32.mrb[0].mxu0
    %4008 = vmatprep.mubr.f32.mxu0 %v3795
    %4009 = vmatmul.mubr.f32.gmra.mrb[0].mxu0 %v3794
    %v4010 = vpop.f32.mrb[0].mxu0
    %v4011 = vadd.f32 %v3867, %v4010
    %v4012 = vpop.f32.mrb[0].mxu0
    %4013 = vmatprep.mubr.f32.mxu0 %v3797
    %4014 = vmatmul.mubr.f32.gmra.mrb[0].mxu0 %v3796
    %v4015 = vpop.f32.mrb[0].mxu0
    %v4016 = vadd.f32 %v3867, %v4015
    %v4017 = vpop.f32.mrb[0].mxu0
    %4018 = vmatprep.mubr.f32.mxu0 %v3799
    %4019 = vmatmul.mubr.f32.gmra.mrb[0].mxu0 %v3798
    %v4020 = vpop.f32.mrb[0].mxu0
    %v4021 = vadd.f32 %v3867, %v4020
    %v4022 = vpop.f32.mrb[0].mxu0
    %4023 = vmatprep.mubr.f32.mxu0 %v3801
    %4024 = vmatmul.mubr.f32.gmra.mrb[0].mxu0 %v3800
    %v4025 = vpop.f32.mrb[0].mxu0
    %v4026 = vadd.f32 %v3867, %v4025
    %v4027 = vpop.f32.mrb[0].mxu0
    %4028 = vmatprep.mubr.f32.mxu0 %v3803
    %4029 = vmatmul.mubr.f32.gmra.mrb[0].mxu0 %v3802
    %v4030 = vpop.f32.mrb[0].mxu0
    %v4031 = vadd.f32 %v3867, %v4030
    %v4032 = vpop.f32.mrb[0].mxu0
    %4033 = vmatprep.mubr.f32.mxu0 %v3805
    %4034 = vmatmul.mubr.f32.gmra.mrb[0].mxu0 %v3804
    %v4035 = vpop.f32.mrb[0].mxu0
    %v4036 = vadd.f32 %v3867, %v4035
    %v4037 = vpop.f32.mrb[0].mxu0
    %4038 = vmatprep.mubr.f32.mxu0 %v3807
    %4039 = vmatmul.mubr.f32.gmra.mrb[0].mxu0 %v3806
    %v4040 = vpop.f32.mrb[0].mxu0
    %v4041 = vadd.f32 %v3867, %v4040
    %v4042 = vpop.f32.mrb[0].mxu0
    %4043 = vmatprep.mubr.f32.mxu0 %v3809
    %4044 = vmatmul.mubr.f32.gmra.mrb[0].mxu0 %v3808
    %v4045 = vpop.f32.mrb[0].mxu0
    %v4046 = vadd.f32 %v3867, %v4045
    %v4047 = vpop.f32.mrb[0].mxu0
    %4048 = vmatprep.mubr.f32.mxu0 %v3811
    %4049 = vmatmul.mubr.f32.gmra.mrb[0].mxu0 %v3810
    %v4050 = vpop.f32.mrb[0].mxu0
    %v4051 = vadd.f32 %v3867, %v4050
    %v4052 = vpop.f32.mrb[0].mxu0
    %4053 = vmatprep.mubr.f32.mxu0 %v3813
    %4054 = vmatmul.mubr.f32.gmra.mrb[0].mxu0 %v3812
    %v4055 = vpop.f32.mrb[0].mxu0
    %v4056 = vadd.f32 %v3867, %v4055
    %v4057 = vpop.f32.mrb[0].mxu0
    %4058 = vmatprep.mubr.f32.mxu0 %v3815
    %4059 = vmatmul.mubr.f32.gmra.mrb[0].mxu0 %v3814
    %v4060 = vpop.f32.mrb[0].mxu0
    %v4061 = vadd.f32 %v3867, %v4060
    %v4062 = vpop.f32.mrb[0].mxu0
    %4063 = vmatprep.mubr.f32.mxu0 %v3817
    %4064 = vmatmul.mubr.f32.gmra.mrb[0].mxu0 %v3816
    %v4065 = vpop.f32.mrb[0].mxu0
    %v4066 = vadd.f32 %v3867, %v4065
    %v4067 = vpop.f32.mrb[0].mxu0
    %4068 = vmatprep.mubr.f32.mxu0 %v3819
    %4069 = vmatmul.mubr.f32.gmra.mrb[0].mxu0 %v3818
    %v4070 = vpop.f32.mrb[0].mxu0
    %v4071 = vadd.f32 %v3867, %v4070
    %v4072 = vpop.f32.mrb[0].mxu0
    %4073 = vmatprep.mubr.f32.mxu0 %v3821
    %4074 = vmatmul.mubr.f32.gmra.mrb[0].mxu0 %v3820
    %v4075 = vpop.f32.mrb[0].mxu0
    %v4076 = vadd.f32 %v3867, %v4075
    %v4077 = vpop.f32.mrb[0].mxu0
    %4078 = vmatprep.mubr.f32.mxu0 %v3823
    %4079 = vmatmul.mubr.f32.gmra.mrb[0].mxu0 %v3822
    %v4080 = vpop.f32.mrb[0].mxu0
    %v4081 = vadd.f32 %v3867, %v4080
    %v4082 = vpop.f32.mrb[0].mxu0
    %4083 = vmatprep.mubr.f32.mxu0 %v3825
    %4084 = vmatmul.mubr.f32.gmra.mrb[0].mxu0 %v3824
    %v4085 = vpop.f32.mrb[0].mxu0
    %v4086 = vadd.f32 %v3867, %v4085
    %v4087 = vpop.f32.mrb[0].mxu0
    %4088 = vmatprep.mubr.f32.mxu0 %v3827
    %4089 = vmatmul.mubr.f32.gmra.mrb[0].mxu0 %v3826
    %v4090 = vpop.f32.mrb[0].mxu0
    %v4091 = vadd.f32 %v3867, %v4090
    %v4092 = vpop.f32.mrb[0].mxu0
    %4093 = vdwg.mxu0
    %v4094 = vadd.f32 %v3349, %v3936
    %v4095 = vadd.f32 %v3350, %v3941
    %v4096 = vadd.f32 %v3351, %v3946
    %v4097 = vadd.f32 %v3352, %v3951
    %v4098 = vadd.f32 %v3353, %v3956
    %v4099 = vadd.f32 %v3354, %v3961
    %v4100 = vadd.f32 %v3355, %v3966
    %v4101 = vadd.f32 %v3356, %v3971
    %v4102 = vadd.f32 %v3357, %v3976
    %v4103 = vadd.f32 %v3358, %v3981
    %v4104 = vadd.f32 %v3359, %v3986
    %v4105 = vadd.f32 %v3360, %v3991
    %v4106 = vadd.f32 %v3361, %v3996
    %v4107 = vadd.f32 %v3362, %v4001
    %v4108 = vadd.f32 %v3363, %v4006
    %v4109 = vadd.f32 %v3364, %v4011
    %v4110 = vadd.f32 %v3365, %v4016
    %v4111 = vadd.f32 %v3366, %v4021
    %v4112 = vadd.f32 %v3367, %v4026
    %v4113 = vadd.f32 %v3368, %v4031
    %v4114 = vadd.f32 %v3369, %v4036
    %v4115 = vadd.f32 %v3370, %v4041
    %v4116 = vadd.f32 %v3371, %v4046
    %v4117 = vadd.f32 %v3372, %v4051
    %v4118 = vadd.f32 %v3373, %v4056
    %v4119 = vadd.f32 %v3374, %v4061
    %v4120 = vadd.f32 %v3375, %v4066
    %v4121 = vadd.f32 %v3376, %v4071
    %v4122 = vadd.f32 %v3377, %v4076
    %v4123 = vadd.f32 %v3378, %v4081
    %v4124 = vadd.f32 %v3379, %v4086
    %v4125 = vadd.f32 %v3380, %v4091
    %s4126 = scalar_lea.vmem %s11, 1
    %v4127 = vld [vmem:[%s4126] sm:$0x1]
    %s4128 = scalar_lea.vmem %s12, 1
    %v4129 = vld [vmem:[%s4128] sm:$0x1]
    %v4130 = vsel %vm431, %v4094, 0.0
    %4131 = vadd.xlane.f32.xlu0 %v4130
    %v4132 = vpop.xlane.xlu0 %4131
    %v4133 = vsel %vm431, %v4095, 0.0
    %4134 = vadd.xlane.f32.xlu0 %v4133
    %v4135 = vpop.xlane.xlu0 %4134
    %v4136 = vsel %vm431, %v4096, 0.0
    %4137 = vadd.xlane.f32.xlu0 %v4136
    %v4138 = vpop.xlane.xlu0 %4137
    %v4139 = vsel %vm431, %v4097, 0.0
    %4140 = vadd.xlane.f32.xlu0 %v4139
    %v4141 = vpop.xlane.xlu0 %4140
    %v4142 = vsel %vm431, %v4098, 0.0
    %4143 = vadd.xlane.f32.xlu0 %v4142
    %v4144 = vpop.xlane.xlu0 %4143
    %v4145 = vsel %vm431, %v4099, 0.0
    %4146 = vadd.xlane.f32.xlu0 %v4145
    %v4147 = vpop.xlane.xlu0 %4146
    %v4148 = vsel %vm431, %v4100, 0.0
    %4149 = vadd.xlane.f32.xlu0 %v4148
    %v4150 = vpop.xlane.xlu0 %4149
    %v4151 = vsel %vm431, %v4101, 0.0
    %4152 = vadd.xlane.f32.xlu0 %v4151
    %v4153 = vpop.xlane.xlu0 %4152
    %v4154 = vsel %vm431, %v4102, 0.0
    %4155 = vadd.xlane.f32.xlu0 %v4154
    %v4156 = vpop.xlane.xlu0 %4155
    %v4157 = vsel %vm431, %v4103, 0.0
    %4158 = vadd.xlane.f32.xlu0 %v4157
    %v4159 = vpop.xlane.xlu0 %4158
    %v4160 = vsel %vm431, %v4104, 0.0
    %4161 = vadd.xlane.f32.xlu0 %v4160
    %v4162 = vpop.xlane.xlu0 %4161
    %v4163 = vsel %vm431, %v4105, 0.0
    %4164 = vadd.xlane.f32.xlu0 %v4163
    %v4165 = vpop.xlane.xlu0 %4164
    %v4166 = vsel %vm431, %v4106, 0.0
    %4167 = vadd.xlane.f32.xlu0 %v4166
    %v4168 = vpop.xlane.xlu0 %4167
    %v4169 = vsel %vm431, %v4107, 0.0
    %4170 = vadd.xlane.f32.xlu0 %v4169
    %v4171 = vpop.xlane.xlu0 %4170
    %v4172 = vsel %vm431, %v4108, 0.0
    %4173 = vadd.xlane.f32.xlu0 %v4172
    %v4174 = vpop.xlane.xlu0 %4173
    %v4175 = vsel %vm431, %v4109, 0.0
    %4176 = vadd.xlane.f32.xlu0 %v4175
    %v4177 = vpop.xlane.xlu0 %4176
    %v4178 = vsel %vm431, %v4110, 0.0
    %4179 = vadd.xlane.f32.xlu0 %v4178
    %v4180 = vpop.xlane.xlu0 %4179
    %v4181 = vsel %vm431, %v4111, 0.0
    %4182 = vadd.xlane.f32.xlu0 %v4181
    %v4183 = vpop.xlane.xlu0 %4182
    %v4184 = vsel %vm431, %v4112, 0.0
    %4185 = vadd.xlane.f32.xlu0 %v4184
    %v4186 = vpop.xlane.xlu0 %4185
    %v4187 = vsel %vm431, %v4113, 0.0
    %4188 = vadd.xlane.f32.xlu0 %v4187
    %v4189 = vpop.xlane.xlu0 %4188
    %v4190 = vsel %vm431, %v4114, 0.0
    %4191 = vadd.xlane.f32.xlu0 %v4190
    %v4192 = vpop.xlane.xlu0 %4191
    %v4193 = vsel %vm431, %v4115, 0.0
    %4194 = vadd.xlane.f32.xlu0 %v4193
    %v4195 = vpop.xlane.xlu0 %4194
    %v4196 = vsel %vm431, %v4116, 0.0
    %4197 = vadd.xlane.f32.xlu0 %v4196
    %v4198 = vpop.xlane.xlu0 %4197
    %v4199 = vsel %vm431, %v4117, 0.0
    %4200 = vadd.xlane.f32.xlu0 %v4199
    %v4201 = vpop.xlane.xlu0 %4200
    %v4202 = vsel %vm431, %v4118, 0.0
    %4203 = vadd.xlane.f32.xlu0 %v4202
    %v4204 = vpop.xlane.xlu0 %4203
    %v4205 = vsel %vm431, %v4119, 0.0
    %4206 = vadd.xlane.f32.xlu0 %v4205
    %v4207 = vpop.xlane.xlu0 %4206
    %v4208 = vsel %vm431, %v4120, 0.0
    %4209 = vadd.xlane.f32.xlu0 %v4208
    %v4210 = vpop.xlane.xlu0 %4209
    %v4211 = vsel %vm431, %v4121, 0.0
    %4212 = vadd.xlane.f32.xlu0 %v4211
    %v4213 = vpop.xlane.xlu0 %4212
    %v4214 = vsel %vm431, %v4122, 0.0
    %4215 = vadd.xlane.f32.xlu0 %v4214
    %v4216 = vpop.xlane.xlu0 %4215
    %v4217 = vsel %vm431, %v4123, 0.0
    %4218 = vadd.xlane.f32.xlu0 %v4217
    %v4219 = vpop.xlane.xlu0 %4218
    %v4220 = vsel %vm431, %v4124, 0.0
    %4221 = vadd.xlane.f32.xlu0 %v4220
    %v4222 = vpop.xlane.xlu0 %4221
    %v4223 = vsel %vm431, %v4125, 0.0
    %4224 = vadd.xlane.f32.xlu0 %v4223
    %v4225 = vpop.xlane.xlu0 %4224
    %v4226 = vmul.f32 %v4132, %v883
    %v4227 = vmul.f32 %v4135, %v883
    %v4228 = vmul.f32 %v4138, %v883
    %v4229 = vmul.f32 %v4141, %v883
    %v4230 = vmul.f32 %v4144, %v883
    %v4231 = vmul.f32 %v4147, %v883
    %v4232 = vmul.f32 %v4150, %v883
    %v4233 = vmul.f32 %v4153, %v883
    %v4234 = vmul.f32 %v4156, %v883
    %v4235 = vmul.f32 %v4159, %v883
    %v4236 = vmul.f32 %v4162, %v883
    %v4237 = vmul.f32 %v4165, %v883
    %v4238 = vmul.f32 %v4168, %v883
    %v4239 = vmul.f32 %v4171, %v883
    %v4240 = vmul.f32 %v4174, %v883
    %v4241 = vmul.f32 %v4177, %v883
    %v4242 = vmul.f32 %v4180, %v883
    %v4243 = vmul.f32 %v4183, %v883
    %v4244 = vmul.f32 %v4186, %v883
    %v4245 = vmul.f32 %v4189, %v883
    %v4246 = vmul.f32 %v4192, %v883
    %v4247 = vmul.f32 %v4195, %v883
    %v4248 = vmul.f32 %v4198, %v883
    %v4249 = vmul.f32 %v4201, %v883
    %v4250 = vmul.f32 %v4204, %v883
    %v4251 = vmul.f32 %v4207, %v883
    %v4252 = vmul.f32 %v4210, %v883
    %v4253 = vmul.f32 %v4213, %v883
    %v4254 = vmul.f32 %v4216, %v883
    %v4255 = vmul.f32 %v4219, %v883
    %v4256 = vmul.f32 %v4222, %v883
    %v4257 = vmul.f32 %v4225, %v883
    %v4258 = vsub.f32 %v4094, %v4226
    %v4259 = vsub.f32 %v4095, %v4227
    %v4260 = vsub.f32 %v4096, %v4228
    %v4261 = vsub.f32 %v4097, %v4229
    %v4262 = vsub.f32 %v4098, %v4230
    %v4263 = vsub.f32 %v4099, %v4231
    %v4264 = vsub.f32 %v4100, %v4232
    %v4265 = vsub.f32 %v4101, %v4233
    %v4266 = vsub.f32 %v4102, %v4234
    %v4267 = vsub.f32 %v4103, %v4235
    %v4268 = vsub.f32 %v4104, %v4236
    %v4269 = vsub.f32 %v4105, %v4237
    %v4270 = vsub.f32 %v4106, %v4238
    %v4271 = vsub.f32 %v4107, %v4239
    %v4272 = vsub.f32 %v4108, %v4240
    %v4273 = vsub.f32 %v4109, %v4241
    %v4274 = vsub.f32 %v4110, %v4242
    %v4275 = vsub.f32 %v4111, %v4243
    %v4276 = vsub.f32 %v4112, %v4244
    %v4277 = vsub.f32 %v4113, %v4245
    %v4278 = vsub.f32 %v4114, %v4246
    %v4279 = vsub.f32 %v4115, %v4247
    %v4280 = vsub.f32 %v4116, %v4248
    %v4281 = vsub.f32 %v4117, %v4249
    %v4282 = vsub.f32 %v4118, %v4250
    %v4283 = vsub.f32 %v4119, %v4251
    %v4284 = vsub.f32 %v4120, %v4252
    %v4285 = vsub.f32 %v4121, %v4253
    %v4286 = vsub.f32 %v4122, %v4254
    %v4287 = vsub.f32 %v4123, %v4255
    %v4288 = vsub.f32 %v4124, %v4256
    %v4289 = vsub.f32 %v4125, %v4257
    %v4290 = vmul.f32 %v4258, %v4258
    %v4291 = vmul.f32 %v4259, %v4259
    %v4292 = vmul.f32 %v4260, %v4260
    %v4293 = vmul.f32 %v4261, %v4261
    %v4294 = vmul.f32 %v4262, %v4262
    %v4295 = vmul.f32 %v4263, %v4263
    %v4296 = vmul.f32 %v4264, %v4264
    %v4297 = vmul.f32 %v4265, %v4265
    %v4298 = vmul.f32 %v4266, %v4266
    %v4299 = vmul.f32 %v4267, %v4267
    %v4300 = vmul.f32 %v4268, %v4268
    %v4301 = vmul.f32 %v4269, %v4269
    %v4302 = vmul.f32 %v4270, %v4270
    %v4303 = vmul.f32 %v4271, %v4271
    %v4304 = vmul.f32 %v4272, %v4272
    %v4305 = vmul.f32 %v4273, %v4273
    %v4306 = vmul.f32 %v4274, %v4274
    %v4307 = vmul.f32 %v4275, %v4275
    %v4308 = vmul.f32 %v4276, %v4276
    %v4309 = vmul.f32 %v4277, %v4277
    %v4310 = vmul.f32 %v4278, %v4278
    %v4311 = vmul.f32 %v4279, %v4279
    %v4312 = vmul.f32 %v4280, %v4280
    %v4313 = vmul.f32 %v4281, %v4281
    %v4314 = vmul.f32 %v4282, %v4282
    %v4315 = vmul.f32 %v4283, %v4283
    %v4316 = vmul.f32 %v4284, %v4284
    %v4317 = vmul.f32 %v4285, %v4285
    %v4318 = vmul.f32 %v4286, %v4286
    %v4319 = vmul.f32 %v4287, %v4287
    %v4320 = vmul.f32 %v4288, %v4288
    %v4321 = vmul.f32 %v4289, %v4289
    %v4322 = vsel %vm431, %v4290, 0.0
    %4323 = vadd.xlane.f32.xlu0 %v4322
    %v4324 = vpop.xlane.xlu0 %4323
    %v4325 = vsel %vm431, %v4291, 0.0
    %4326 = vadd.xlane.f32.xlu0 %v4325
    %v4327 = vpop.xlane.xlu0 %4326
    %v4328 = vsel %vm431, %v4292, 0.0
    %4329 = vadd.xlane.f32.xlu0 %v4328
    %v4330 = vpop.xlane.xlu0 %4329
    %v4331 = vsel %vm431, %v4293, 0.0
    %4332 = vadd.xlane.f32.xlu0 %v4331
    %v4333 = vpop.xlane.xlu0 %4332
    %v4334 = vsel %vm431, %v4294, 0.0
    %4335 = vadd.xlane.f32.xlu0 %v4334
    %v4336 = vpop.xlane.xlu0 %4335
    %v4337 = vsel %vm431, %v4295, 0.0
    %4338 = vadd.xlane.f32.xlu0 %v4337
    %v4339 = vpop.xlane.xlu0 %4338
    %v4340 = vsel %vm431, %v4296, 0.0
    %4341 = vadd.xlane.f32.xlu0 %v4340
    %v4342 = vpop.xlane.xlu0 %4341
    %v4343 = vsel %vm431, %v4297, 0.0
    %4344 = vadd.xlane.f32.xlu0 %v4343
    %v4345 = vpop.xlane.xlu0 %4344
    %v4346 = vsel %vm431, %v4298, 0.0
    %4347 = vadd.xlane.f32.xlu0 %v4346
    %v4348 = vpop.xlane.xlu0 %4347
    %v4349 = vsel %vm431, %v4299, 0.0
    %4350 = vadd.xlane.f32.xlu0 %v4349
    %v4351 = vpop.xlane.xlu0 %4350
    %v4352 = vsel %vm431, %v4300, 0.0
    %4353 = vadd.xlane.f32.xlu0 %v4352
    %v4354 = vpop.xlane.xlu0 %4353
    %v4355 = vsel %vm431, %v4301, 0.0
    %4356 = vadd.xlane.f32.xlu0 %v4355
    %v4357 = vpop.xlane.xlu0 %4356
    %v4358 = vsel %vm431, %v4302, 0.0
    %4359 = vadd.xlane.f32.xlu0 %v4358
    %v4360 = vpop.xlane.xlu0 %4359
    %v4361 = vsel %vm431, %v4303, 0.0
    %4362 = vadd.xlane.f32.xlu0 %v4361
    %v4363 = vpop.xlane.xlu0 %4362
    %v4364 = vsel %vm431, %v4304, 0.0
    %4365 = vadd.xlane.f32.xlu0 %v4364
    %v4366 = vpop.xlane.xlu0 %4365
    %v4367 = vsel %vm431, %v4305, 0.0
    %4368 = vadd.xlane.f32.xlu0 %v4367
    %v4369 = vpop.xlane.xlu0 %4368
    %v4370 = vsel %vm431, %v4306, 0.0
    %4371 = vadd.xlane.f32.xlu0 %v4370
    %v4372 = vpop.xlane.xlu0 %4371
    %v4373 = vsel %vm431, %v4307, 0.0
    %4374 = vadd.xlane.f32.xlu0 %v4373
    %v4375 = vpop.xlane.xlu0 %4374
    %v4376 = vsel %vm431, %v4308, 0.0
    %4377 = vadd.xlane.f32.xlu0 %v4376
    %v4378 = vpop.xlane.xlu0 %4377
    %v4379 = vsel %vm431, %v4309, 0.0
    %4380 = vadd.xlane.f32.xlu0 %v4379
    %v4381 = vpop.xlane.xlu0 %4380
    %v4382 = vsel %vm431, %v4310, 0.0
    %4383 = vadd.xlane.f32.xlu0 %v4382
    %v4384 = vpop.xlane.xlu0 %4383
    %v4385 = vsel %vm431, %v4311, 0.0
    %4386 = vadd.xlane.f32.xlu0 %v4385
    %v4387 = vpop.xlane.xlu0 %4386
    %v4388 = vsel %vm431, %v4312, 0.0
    %4389 = vadd.xlane.f32.xlu0 %v4388
    %v4390 = vpop.xlane.xlu0 %4389
    %v4391 = vsel %vm431, %v4313, 0.0
    %4392 = vadd.xlane.f32.xlu0 %v4391
    %v4393 = vpop.xlane.xlu0 %4392
    %v4394 = vsel %vm431, %v4314, 0.0
    %4395 = vadd.xlane.f32.xlu0 %v4394
    %v4396 = vpop.xlane.xlu0 %4395
    %v4397 = vsel %vm431, %v4315, 0.0
    %4398 = vadd.xlane.f32.xlu0 %v4397
    %v4399 = vpop.xlane.xlu0 %4398
    %v4400 = vsel %vm431, %v4316, 0.0
    %4401 = vadd.xlane.f32.xlu0 %v4400
    %v4402 = vpop.xlane.xlu0 %4401
    %v4403 = vsel %vm431, %v4317, 0.0
    %4404 = vadd.xlane.f32.xlu0 %v4403
    %v4405 = vpop.xlane.xlu0 %4404
    %v4406 = vsel %vm431, %v4318, 0.0
    %4407 = vadd.xlane.f32.xlu0 %v4406
    %v4408 = vpop.xlane.xlu0 %4407
    %v4409 = vsel %vm431, %v4319, 0.0
    %4410 = vadd.xlane.f32.xlu0 %v4409
    %v4411 = vpop.xlane.xlu0 %4410
    %v4412 = vsel %vm431, %v4320, 0.0
    %4413 = vadd.xlane.f32.xlu0 %v4412
    %v4414 = vpop.xlane.xlu0 %4413
    %v4415 = vsel %vm431, %v4321, 0.0
    %4416 = vadd.xlane.f32.xlu0 %v4415
    %v4417 = vpop.xlane.xlu0 %4416
    %v4418 = vmul.f32 %v4324, %v883
    %v4419 = vmul.f32 %v4327, %v883
    %v4420 = vmul.f32 %v4330, %v883
    %v4421 = vmul.f32 %v4333, %v883
    %v4422 = vmul.f32 %v4336, %v883
    %v4423 = vmul.f32 %v4339, %v883
    %v4424 = vmul.f32 %v4342, %v883
    %v4425 = vmul.f32 %v4345, %v883
    %v4426 = vmul.f32 %v4348, %v883
    %v4427 = vmul.f32 %v4351, %v883
    %v4428 = vmul.f32 %v4354, %v883
    %v4429 = vmul.f32 %v4357, %v883
    %v4430 = vmul.f32 %v4360, %v883
    %v4431 = vmul.f32 %v4363, %v883
    %v4432 = vmul.f32 %v4366, %v883
    %v4433 = vmul.f32 %v4369, %v883
    %v4434 = vmul.f32 %v4372, %v883
    %v4435 = vmul.f32 %v4375, %v883
    %v4436 = vmul.f32 %v4378, %v883
    %v4437 = vmul.f32 %v4381, %v883
    %v4438 = vmul.f32 %v4384, %v883
    %v4439 = vmul.f32 %v4387, %v883
    %v4440 = vmul.f32 %v4390, %v883
    %v4441 = vmul.f32 %v4393, %v883
    %v4442 = vmul.f32 %v4396, %v883
    %v4443 = vmul.f32 %v4399, %v883
    %v4444 = vmul.f32 %v4402, %v883
    %v4445 = vmul.f32 %v4405, %v883
    %v4446 = vmul.f32 %v4408, %v883
    %v4447 = vmul.f32 %v4411, %v883
    %v4448 = vmul.f32 %v4414, %v883
    %v4449 = vmul.f32 %v4417, %v883
    %v4450 = vadd.f32 %v4418, 1e-05
    %v4451 = vadd.f32 %v4419, 1e-05
    %v4452 = vadd.f32 %v4420, 1e-05
    %v4453 = vadd.f32 %v4421, 1e-05
    %v4454 = vadd.f32 %v4422, 1e-05
    %v4455 = vadd.f32 %v4423, 1e-05
    %v4456 = vadd.f32 %v4424, 1e-05
    %v4457 = vadd.f32 %v4425, 1e-05
    %v4458 = vadd.f32 %v4426, 1e-05
    %v4459 = vadd.f32 %v4427, 1e-05
    %v4460 = vadd.f32 %v4428, 1e-05
    %v4461 = vadd.f32 %v4429, 1e-05
    %v4462 = vadd.f32 %v4430, 1e-05
    %v4463 = vadd.f32 %v4431, 1e-05
    %v4464 = vadd.f32 %v4432, 1e-05
    %v4465 = vadd.f32 %v4433, 1e-05
    %v4466 = vadd.f32 %v4434, 1e-05
    %v4467 = vadd.f32 %v4435, 1e-05
    %v4468 = vadd.f32 %v4436, 1e-05
    %v4469 = vadd.f32 %v4437, 1e-05
    %v4470 = vadd.f32 %v4438, 1e-05
    %v4471 = vadd.f32 %v4439, 1e-05
    %v4472 = vadd.f32 %v4440, 1e-05
    %v4473 = vadd.f32 %v4441, 1e-05
    %v4474 = vadd.f32 %v4442, 1e-05
    %v4475 = vadd.f32 %v4443, 1e-05
    %v4476 = vadd.f32 %v4444, 1e-05
    %v4477 = vadd.f32 %v4445, 1e-05
    %v4478 = vadd.f32 %v4446, 1e-05
    %v4479 = vadd.f32 %v4447, 1e-05
    %v4480 = vadd.f32 %v4448, 1e-05
    %v4481 = vadd.f32 %v4449, 1e-05
    %v4482 = vrsqrt.pop %v4450
    %v4483 = vrsqrt.pop %v4451
    %v4484 = vrsqrt.pop %v4452
    %v4485 = vrsqrt.pop %v4453
    %v4486 = vrsqrt.pop %v4454
    %v4487 = vrsqrt.pop %v4455
    %v4488 = vrsqrt.pop %v4456
    %v4489 = vrsqrt.pop %v4457
    %v4490 = vrsqrt.pop %v4458
    %v4491 = vrsqrt.pop %v4459
    %v4492 = vrsqrt.pop %v4460
    %v4493 = vrsqrt.pop %v4461
    %v4494 = vrsqrt.pop %v4462
    %v4495 = vrsqrt.pop %v4463
    %v4496 = vrsqrt.pop %v4464
    %v4497 = vrsqrt.pop %v4465
    %v4498 = vrsqrt.pop %v4466
    %v4499 = vrsqrt.pop %v4467
    %v4500 = vrsqrt.pop %v4468
    %v4501 = vrsqrt.pop %v4469
    %v4502 = vrsqrt.pop %v4470
    %v4503 = vrsqrt.pop %v4471
    %v4504 = vrsqrt.pop %v4472
    %v4505 = vrsqrt.pop %v4473
    %v4506 = vrsqrt.pop %v4474
    %v4507 = vrsqrt.pop %v4475
    %v4508 = vrsqrt.pop %v4476
    %v4509 = vrsqrt.pop %v4477
    %v4510 = vrsqrt.pop %v4478
    %v4511 = vrsqrt.pop %v4479
    %v4512 = vrsqrt.pop %v4480
    %v4513 = vrsqrt.pop %v4481
    %v4514 = vmul.f32 %v4258, %v4482
    %v4515 = vmul.f32 %v4259, %v4483
    %v4516 = vmul.f32 %v4260, %v4484
    %v4517 = vmul.f32 %v4261, %v4485
    %v4518 = vmul.f32 %v4262, %v4486
    %v4519 = vmul.f32 %v4263, %v4487
    %v4520 = vmul.f32 %v4264, %v4488
    %v4521 = vmul.f32 %v4265, %v4489
    %v4522 = vmul.f32 %v4266, %v4490
    %v4523 = vmul.f32 %v4267, %v4491
    %v4524 = vmul.f32 %v4268, %v4492
    %v4525 = vmul.f32 %v4269, %v4493
    %v4526 = vmul.f32 %v4270, %v4494
    %v4527 = vmul.f32 %v4271, %v4495
    %v4528 = vmul.f32 %v4272, %v4496
    %v4529 = vmul.f32 %v4273, %v4497
    %v4530 = vmul.f32 %v4274, %v4498
    %v4531 = vmul.f32 %v4275, %v4499
    %v4532 = vmul.f32 %v4276, %v4500
    %v4533 = vmul.f32 %v4277, %v4501
    %v4534 = vmul.f32 %v4278, %v4502
    %v4535 = vmul.f32 %v4279, %v4503
    %v4536 = vmul.f32 %v4280, %v4504
    %v4537 = vmul.f32 %v4281, %v4505
    %v4538 = vmul.f32 %v4282, %v4506
    %v4539 = vmul.f32 %v4283, %v4507
    %v4540 = vmul.f32 %v4284, %v4508
    %v4541 = vmul.f32 %v4285, %v4509
    %v4542 = vmul.f32 %v4286, %v4510
    %v4543 = vmul.f32 %v4287, %v4511
    %v4544 = vmul.f32 %v4288, %v4512
    %v4545 = vmul.f32 %v4289, %v4513
    %v4547 = vlaneseq
    %v4548 = vshrl.u32 %v4547, 7
    %v4549 = vsub.s32 0, %v4548
    %v4550 = vrot.slane %v4127, %v4549
    %v4552 = vmul.f32 %v4514, %v4550
    %v4553 = vmul.f32 %v4515, %v4550
    %v4554 = vmul.f32 %v4516, %v4550
    %v4555 = vmul.f32 %v4517, %v4550
    %v4556 = vmul.f32 %v4518, %v4550
    %v4557 = vmul.f32 %v4519, %v4550
    %v4558 = vmul.f32 %v4520, %v4550
    %v4559 = vmul.f32 %v4521, %v4550
    %v4560 = vmul.f32 %v4522, %v4550
    %v4561 = vmul.f32 %v4523, %v4550
    %v4562 = vmul.f32 %v4524, %v4550
    %v4563 = vmul.f32 %v4525, %v4550
    %v4564 = vmul.f32 %v4526, %v4550
    %v4565 = vmul.f32 %v4527, %v4550
    %v4566 = vmul.f32 %v4528, %v4550
    %v4567 = vmul.f32 %v4529, %v4550
    %v4568 = vmul.f32 %v4530, %v4550
    %v4569 = vmul.f32 %v4531, %v4550
    %v4570 = vmul.f32 %v4532, %v4550
    %v4571 = vmul.f32 %v4533, %v4550
    %v4572 = vmul.f32 %v4534, %v4550
    %v4573 = vmul.f32 %v4535, %v4550
    %v4574 = vmul.f32 %v4536, %v4550
    %v4575 = vmul.f32 %v4537, %v4550
    %v4576 = vmul.f32 %v4538, %v4550
    %v4577 = vmul.f32 %v4539, %v4550
    %v4578 = vmul.f32 %v4540, %v4550
    %v4579 = vmul.f32 %v4541, %v4550
    %v4580 = vmul.f32 %v4542, %v4550
    %v4581 = vmul.f32 %v4543, %v4550
    %v4582 = vmul.f32 %v4544, %v4550
    %v4583 = vmul.f32 %v4545, %v4550
    %v4585 = vlaneseq
    %v4586 = vshrl.u32 %v4585, 7
    %v4587 = vsub.s32 0, %v4586
    %v4588 = vrot.slane %v4129, %v4587
    %v4590 = vadd.f32 %v4552, %v4588
    %v4591 = vadd.f32 %v4553, %v4588
    %v4592 = vadd.f32 %v4554, %v4588
    %v4593 = vadd.f32 %v4555, %v4588
    %v4594 = vadd.f32 %v4556, %v4588
    %v4595 = vadd.f32 %v4557, %v4588
    %v4596 = vadd.f32 %v4558, %v4588
    %v4597 = vadd.f32 %v4559, %v4588
    %v4598 = vadd.f32 %v4560, %v4588
    %v4599 = vadd.f32 %v4561, %v4588
    %v4600 = vadd.f32 %v4562, %v4588
    %v4601 = vadd.f32 %v4563, %v4588
    %v4602 = vadd.f32 %v4564, %v4588
    %v4603 = vadd.f32 %v4565, %v4588
    %v4604 = vadd.f32 %v4566, %v4588
    %v4605 = vadd.f32 %v4567, %v4588
    %v4606 = vadd.f32 %v4568, %v4588
    %v4607 = vadd.f32 %v4569, %v4588
    %v4608 = vadd.f32 %v4570, %v4588
    %v4609 = vadd.f32 %v4571, %v4588
    %v4610 = vadd.f32 %v4572, %v4588
    %v4611 = vadd.f32 %v4573, %v4588
    %v4612 = vadd.f32 %v4574, %v4588
    %v4613 = vadd.f32 %v4575, %v4588
    %v4614 = vadd.f32 %v4576, %v4588
    %v4615 = vadd.f32 %v4577, %v4588
    %v4616 = vadd.f32 %v4578, %v4588
    %v4617 = vadd.f32 %v4579, %v4588
    %v4618 = vadd.f32 %v4580, %v4588
    %v4619 = vadd.f32 %v4581, %v4588
    %v4620 = vadd.f32 %v4582, %v4588
    %v4621 = vadd.f32 %v4583, %v4588
    %v4622 = vld [vmem:[%s13] sm:$0xff]
    %v4624 = vsel %vm431, %v4622, 0
    %v4627 = vsel %vm431, %v4590, 0
    %v4630 = vsel %vm431, %v4591, 0
    %v4633 = vsel %vm431, %v4592, 0
    %v4636 = vsel %vm431, %v4593, 0
    %v4639 = vsel %vm431, %v4594, 0
    %v4642 = vsel %vm431, %v4595, 0
    %v4645 = vsel %vm431, %v4596, 0
    %v4648 = vsel %vm431, %v4597, 0
    %v4651 = vsel %vm431, %v4598, 0
    %v4654 = vsel %vm431, %v4599, 0
    %v4657 = vsel %vm431, %v4600, 0
    %v4660 = vsel %vm431, %v4601, 0
    %v4663 = vsel %vm431, %v4602, 0
    %v4666 = vsel %vm431, %v4603, 0
    %v4669 = vsel %vm431, %v4604, 0
    %v4672 = vsel %vm431, %v4605, 0
    %v4675 = vsel %vm431, %v4606, 0
    %v4678 = vsel %vm431, %v4607, 0
    %v4681 = vsel %vm431, %v4608, 0
    %v4684 = vsel %vm431, %v4609, 0
    %v4687 = vsel %vm431, %v4610, 0
    %v4690 = vsel %vm431, %v4611, 0
    %v4693 = vsel %vm431, %v4612, 0
    %v4696 = vsel %vm431, %v4613, 0
    %v4699 = vsel %vm431, %v4614, 0
    %v4702 = vsel %vm431, %v4615, 0
    %v4705 = vsel %vm431, %v4616, 0
    %v4708 = vsel %vm431, %v4617, 0
    %v4711 = vsel %vm431, %v4618, 0
    %v4714 = vsel %vm431, %v4619, 0
    %v4717 = vsel %vm431, %v4620, 0
    %v4720 = vsel %vm431, %v4621, 0
    %4722 = vmatprep.subr.mxu0 0.0
    %4723 = vmatpush1.xpose.msra.mxu0 %v4627
    %4724 = vmatprep.subr.mxu0 0.0
    %4725 = vmatpush1.xpose.msra.mxu0 %v4630
    %4726 = vmatprep.subr.mxu0 0.0
    %4727 = vmatpush1.xpose.msra.mxu0 %v4633
    %4728 = vmatprep.subr.mxu0 0.0
    %4729 = vmatpush1.xpose.msra.mxu0 %v4636
    %4730 = vmatprep.subr.mxu0 0.0
    %4731 = vmatpush1.xpose.msra.mxu0 %v4639
    %4732 = vmatprep.subr.mxu0 0.0
    %4733 = vmatpush1.xpose.msra.mxu0 %v4642
    %4734 = vmatprep.subr.mxu0 0.0
    %4735 = vmatpush1.xpose.msra.mxu0 %v4645
    %4736 = vmatprep.subr.mxu0 0.0
    %4737 = vmatpush1.xpose.msra.mxu0 %v4648
    %4738 = vmatprep.subr.mxu0 0.0
    %4739 = vmatpush1.xpose.msra.mxu0 %v4651
    %4740 = vmatprep.subr.mxu0 0.0
    %4741 = vmatpush1.xpose.msra.mxu0 %v4654
    %4742 = vmatprep.subr.mxu0 0.0
    %4743 = vmatpush1.xpose.msra.mxu0 %v4657
    %4744 = vmatprep.subr.mxu0 0.0
    %4745 = vmatpush1.xpose.msra.mxu0 %v4660
    %4746 = vmatprep.subr.mxu0 0.0
    %4747 = vmatpush1.xpose.msra.mxu0 %v4663
    %4748 = vmatprep.subr.mxu0 0.0
    %4749 = vmatpush1.xpose.msra.mxu0 %v4666
    %4750 = vmatprep.subr.mxu0 0.0
    %4751 = vmatpush1.xpose.msra.mxu0 %v4669
    %4752 = vmatprep.subr.mxu0 0.0
    %4753 = vmatpush1.xpose.msra.mxu0 %v4672
    %4754 = vmatprep.subr.mxu0 0.0
    %4755 = vmatpush1.xpose.msra.mxu0 %v4675
    %4756 = vmatprep.subr.mxu0 0.0
    %4757 = vmatpush1.xpose.msra.mxu0 %v4678
    %4758 = vmatprep.subr.mxu0 0.0
    %4759 = vmatpush1.xpose.msra.mxu0 %v4681
    %4760 = vmatprep.subr.mxu0 0.0
    %4761 = vmatpush1.xpose.msra.mxu0 %v4684
    %4762 = vmatprep.subr.mxu0 0.0
    %4763 = vmatpush1.xpose.msra.mxu0 %v4687
    %4764 = vmatprep.subr.mxu0 0.0
    %4765 = vmatpush1.xpose.msra.mxu0 %v4690
    %4766 = vmatprep.subr.mxu0 0.0
    %4767 = vmatpush1.xpose.msra.mxu0 %v4693
    %4768 = vmatprep.subr.mxu0 0.0
    %4769 = vmatpush1.xpose.msra.mxu0 %v4696
    %4770 = vmatprep.subr.mxu0 0.0
    %4771 = vmatpush1.xpose.msra.mxu0 %v4699
    %4772 = vmatprep.subr.mxu0 0.0
    %4773 = vmatpush1.xpose.msra.mxu0 %v4702
    %4774 = vmatprep.subr.mxu0 0.0
    %4775 = vmatpush1.xpose.msra.mxu0 %v4705
    %4776 = vmatprep.subr.mxu0 0.0
    %4777 = vmatpush1.xpose.msra.mxu0 %v4708
    %4778 = vmatprep.subr.mxu0 0.0
    %4779 = vmatpush1.xpose.msra.mxu0 %v4711
    %4780 = vmatprep.subr.mxu0 0.0
    %4781 = vmatpush1.xpose.msra.mxu0 %v4714
    %4782 = vmatprep.subr.mxu0 0.0
    %4783 = vmatpush1.xpose.msra.mxu0 %v4717
    %4784 = vmatprep.subr.mxu0 0.0
    %4785 = vmatpush1.xpose.msra.mxu0 %v4720
    %4786 = vmatprep.mubr.f32.mxu0 0.0
    %4787 = vmatmul.mubr.f32.gmra.mrb[0].mxu0 %v4624
    %v4788 = vpop.f32.mrb[0].mxu0
    %v4789 = vadd.f32 0.0, %v4788
    %v4790 = vpop.f32.mrb[0].mxu0
    %v4791 = vadd.f32 0.0, %v4790
    %4792 = vdwg.mxu0
    %v4793 = vld [vmem:[#allocation2] sm:$0x1]
    %4795 = vset.pattern.permute.xlu0 0
    %4796 = vperm.xlu0 %4795, %v4793
    %v4797 = vpop.permute.xlu0 %4796
    %v4799 = vlaneseq
    %v4800 = vshrl.u32 %v4799, 7
    %v4801 = vsub.s32 0, %v4800
    %v4802 = vrot.slane %v4797, %v4801
    %v4803 = vadd.f32 %v4789, %v4802
    %v4804 = vadd.f32 %v4791, %v4802
    %v4807 = vcombine.low %v4803, %v4804
    %v4809 = vunpack.c.l.s4 1966171168
    %v4810 = vunpack.c.0.s8 %v4809
    %v4811 = vlaneseq
    %v4812 = vshrl.u32 %v4811, 7
    %v4813 = vsub.s32 %v4810, %v4812
    %v4814 = vrot.slane %v4807, %v4813
    %v4816 = vunpack.c.l.s4 1966171168
    %v4817 = vunpack.c.0.s8 %v4816
    %v4818 = vlaneseq
    %v4819 = vshrl.u32 %v4818, 7
    %v4820 = vsub.s32 %v4817, %v4819
    %v4821 = vrot.slane %v4814, %v4820
    %v4823 = vlaneseq
    %vm4824 = vcmp.ge.s32.totalorder %v4823, 0
    %vm4825 = vcmp.lt.s32.totalorder %v4823, 256
    %vm4826 = vmand %vm4824, %vm4825
    %4827 = vst.msk [vmem:[#allocation3] sm:$0x3] %vm4826, %v4821
    // Predicated region
    $region62: #{tpu_custom_call.1} parent=1 // pred_check
      _
    $region63: #{tpu_custom_call.1} parent=1 // pred_check_branch
      %4829 = sbr.rel (0) target = $region65
    $region64: #{tpu_custom_call.1} parent=1 // pred_region
      %s4831 = ssub.s32 32, 32
      %4832 = vsyncadd [#allocation4], %s4831
      %s4834 = sshll.u32 [#allocation3], 4
      %s4835 = int_to_ptr.vmem [resolvable:$true] %s4834
      %4837 = dma.vmem_to_hbm [thread:$0]  %s4835, 32, %s15, [#allocation4]
    $region65: #{tpu_custom_call.1} parent=1 // pred_fallthru
      _
    // Predicated region
    $region66: #{tpu_custom_call.1} parent=1 // pred_check
      _
    $region67: #{tpu_custom_call.1} parent=1 // pred_check_branch
      %4839 = sbr.rel (0) target = $region69
    $region68: #{tpu_custom_call.1} parent=1 // pred_region
      %4840 = dma.done [#allocation4], 32
    $region69: #{tpu_custom_call.1} parent=1 // pred_fallthru
      _
    %4841 = vsyncpa [#allocation4], 1

</llo_original>
